<compile_context>
chip_gen: v7x
topology: tpu7x:2x2x1
jax: 0.10.0
libtpu: 0.0.40
codegen_flags: <defaults>
</compile_context>

<pallas_src>
import functools
import math

import jax
import jax.numpy as jnp
from jax.experimental import pallas as pl
from jax.experimental.pallas import tpu as pltpu


_INV_SQRT2 = 1.0 / math.sqrt(2.0)


# ----------------------------- Pallas kernel ------------------------------ #
def _block_kernel(x_ref, g1_ref, b1_ref,
                  wqkv_ref, wp_ref, bp_ref,
                  g2_ref, b2_ref, w1_ref, bb1_ref, w2_ref, bb2_ref,
                  o_ref, *, num_heads, head_dim, eps):
    """Fused LN1 + MHSA + residual + LN2 + MLP(GELU) + residual.

    Grid is (B,); each program processes one full (N, C) sequence in VMEM.
    All matmuls feed the MXU with bf16 operands and accumulate in f32.
    """
    f32 = jnp.float32
    bf16 = jnp.bfloat16

    x = x_ref[0]                                     # (N, C) f32
    N = x.shape[0]
    C = num_heads * head_dim

    def layernorm(v, g, b):
        # two-pass (centered) statistics: robust to large means.
        mu = jnp.mean(v, axis=-1, keepdims=True)
        d = v - mu
        var = jnp.mean(d * d, axis=-1, keepdims=True)
        return d * jax.lax.rsqrt(var + eps) * g + b

    # ---- attention branch ----
    xn = layernorm(x, g1_ref[...], b1_ref[...])      # (N, C) f32
    # Single fused QKV matmul; q columns of wqkv are pre-scaled by
    # head_dim**-0.5 host-side, so no score-tensor scaling pass is needed.
    qkv = jnp.dot(xn.astype(bf16), wqkv_ref[...],
                  preferred_element_type=f32).astype(bf16)   # (N, 3C) bf16

    # Per-head attention with a single (N, C) f32 accumulator.  Only one
    # (N, N) score tensor is live at a time; the head-merge + output
    # projection is folded into the per-head (N,hd)@(hd,C) matmul + add.
    acc = jnp.zeros((N, C), f32)
    for h in range(num_heads):                       # static unroll, 2-D matmuls
        lo = h * head_dim
        q = qkv[:, lo:lo + head_dim]                               # (N, hd) bf16
        k = qkv[:, C + lo:C + lo + head_dim]                       # (N, hd)
        v = qkv[:, 2 * C + lo:2 * C + lo + head_dim]               # (N, hd)

        s = jnp.einsum('nd,md->nm', q, k,
                       preferred_element_type=f32)                 # (N, N) f32
        s = s - jnp.max(s, axis=-1, keepdims=True)
        p = jnp.exp(s)
        p = p * pl.reciprocal(jnp.sum(p, axis=-1, keepdims=True), approx=True)

        o = jnp.dot(p.astype(bf16), v, preferred_element_type=f32)  # (N, hd)
        acc = acc + jnp.dot(o.astype(bf16), wp_ref[h],
                            preferred_element_type=f32)             # (N, C)

    x1 = x + acc + bp_ref[...]                                      # residual

    # ---- MLP branch ----
    xn2 = layernorm(x1, g2_ref[...], b2_ref[...])
    h1 = jnp.dot(xn2.astype(bf16), w1_ref[...],
                 preferred_element_type=f32) + bb1_ref[...]
    # exact (erf-based) GELU, matching torch.nn.GELU default, in f32
    h1 = 0.5 * h1 * (1.0 + jax.lax.erf(h1 * _INV_SQRT2))
    h2 = jnp.dot(h1.astype(bf16), w2_ref[...],
                 preferred_element_type=f32) + bb2_ref[...]

    o_ref[0] = x1 + h2


# ------------------------ host-side weight prep ---------------------------- #
def prepare_params(params, *, num_heads):
    """One-time reorder/cast of canonical (x @ W) f32 params into kernel layout.

    Call once at model load time and reuse (do NOT call per forward).
    """
    C = params["wqkv"].shape[0]
    hd = C // num_heads
    scale = hd ** (-0.5)
    bf16 = jnp.bfloat16
    # wqkv columns are ordered (t, h, d) exactly like the PyTorch
    # reshape(B, N, 3, num_heads, head_dim): cols [0,C)=q, [C,2C)=k, [2C,3C)=v.
    wqkv = params["wqkv"]
    wqkv = jnp.concatenate([wqkv[:, :C] * scale, wqkv[:, C:]], axis=1)
    # proj input rows are indexed by (h, d) after the PyTorch head merge.
    wp = params["wproj"].reshape(num_heads, hd, C)
    return {
        "ln1_g": params["ln1_g"], "ln1_b": params["ln1_b"],
        "wqkv": wqkv.astype(bf16),
        "wp": wp.astype(bf16), "bproj": params["bproj"],
        "ln2_g": params["ln2_g"], "ln2_b": params["ln2_b"],
        "w1": params["w1"].astype(bf16), "b1": params["b1"],
        "w2": params["w2"].astype(bf16), "b2": params["b2"],
    }


# ------------------------------ wrapper ------------------------------------ #
def _make_call(B, N, C, Hm, num_heads, hd, single_buffer_weights):
    kernel = functools.partial(_block_kernel, num_heads=num_heads,
                               head_dim=hd, eps=1e-5)

    def const_spec(shape):
        idx = lambda b: (0,) * len(shape)
        if single_buffer_weights:
            # weights/biases are grid-invariant -> single-buffer them
            return pl.BlockSpec(shape, idx, pipeline_mode=pl.Buffered(1))
        return pl.BlockSpec(shape, idx)

    return pl.pallas_call(
        kernel,
        out_shape=jax.ShapeDtypeStruct((B, N, C), jnp.float32),
        grid_spec=pltpu.PrefetchScalarGridSpec(
            num_scalar_prefetch=0,
            grid=(B,),
            in_specs=[
                pl.BlockSpec((1, N, C), lambda b: (b, 0, 0)),   # x_b
                const_spec((1, C)),               # ln1 gamma
                const_spec((1, C)),               # ln1 beta
                const_spec((C, 3 * C)),           # fused Wqkv (bf16, q pre-scaled)
                const_spec((num_heads, hd, C)),   # Wproj (head-major, bf16)
                const_spec((1, C)),               # proj bias
                const_spec((1, C)),               # ln2 gamma
                const_spec((1, C)),               # ln2 beta
                const_spec((C, Hm)),              # fc1 weight (bf16)
                const_spec((1, Hm)),              # fc1 bias
                const_spec((Hm, C)),              # fc2 weight (bf16)
                const_spec((1, C)),               # fc2 bias
            ],
            out_specs=pl.BlockSpec((1, N, C), lambda b: (b, 0, 0)),
        ),
        compiler_params=pltpu.CompilerParams(
            dimension_semantics=("parallel",),
            vmem_limit_bytes=64 * 1024 * 1024),
    )


def block_forward(x_b, x_i, kparams, *, num_heads):
    """Pallas implementation of Block.forward (use_score=False).

    x_b:      (B, N, C) float32
    x_i:      [[x_s, pos_emb_s], [x_l, pos_emb_l]] — passed through untouched.
    kparams:  output of prepare_params (pre-cast/reshaped, cached by caller).
    Returns (x_b_out, x_i, tokens={}) just like the PyTorch module.
    """
    B, N, C = x_b.shape
    Hm = kparams["w1"].shape[1]
    hd = C // num_heads
    args = (x_b,
            kparams["ln1_g"], kparams["ln1_b"],
            kparams["wqkv"], kparams["wp"], kparams["bproj"],
            kparams["ln2_g"], kparams["ln2_b"],
            kparams["w1"], kparams["b1"], kparams["w2"], kparams["b2"])
    try:
        out = _make_call(B, N, C, Hm, num_heads, hd, True)(*args)
    except Exception:
        # pl.Buffered / pipeline_mode not available in this JAX build:
        # fall back to default double-buffered weight specs (same semantics).
        out = _make_call(B, N, C, Hm, num_heads, hd, False)(*args)
    return out, x_i, {}


# ------------------------- reference (plain JAX, f32) ----------------------- #
def block_reference(x_b, params, *, num_heads):
    B, N, C = x_b.shape
    hd = C // num_heads
    scale = hd ** (-0.5)

    def ln(v, g, b):
        mu = jnp.mean(v, -1, keepdims=True)
        var = jnp.mean((v - mu) ** 2, -1, keepdims=True)
        return (v - mu) / jnp.sqrt(var + 1e-5) * g + b

    xn = ln(x_b, params["ln1_g"], params["ln1_b"])
    qkv = xn @ params["wqkv"]                                    # (B, N, 3C)
    qkv = qkv.reshape(B, N, 3, num_heads, hd).transpose(2, 0, 3, 1, 4)
    q, k, v = qkv[0], qkv[1], qkv[2]                             # (B, h, N, hd)
    attn = (q @ jnp.swapaxes(k, -2, -1)) * scale
    attn = jax.nn.softmax(attn, axis=-1)
    o = (attn @ v).transpose(0, 2, 1, 3).reshape(B, N, C)
    o = o @ params["wproj"] + params["bproj"]
    x1 = x_b + o
    xn2 = ln(x1, params["ln2_g"], params["ln2_b"])
    h1 = xn2 @ params["w1"] + params["b1"]
    h1 = jax.nn.gelu(h1, approximate=False)
    h2 = h1 @ params["w2"] + params["b2"]
    return x1 + h2


# ------------------------------ param init --------------------------------- #
def init_params(key, dim, mlp_hidden):
    ks = jax.random.split(key, 4)
    std = 0.02
    return {
        "ln1_g": jnp.ones((1, dim), jnp.float32),
        "ln1_b": jnp.zeros((1, dim), jnp.float32),
        # stored as (in, out) so the computation is x @ W
        "wqkv": std * jax.random.normal(ks[0], (dim, 3 * dim), jnp.float32),
        "wproj": std * jax.random.normal(ks[1], (dim, dim), jnp.float32),
        "bproj": jnp.zeros((1, dim), jnp.float32),
        "ln2_g": jnp.ones((1, dim), jnp.float32),
        "ln2_b": jnp.zeros((1, dim), jnp.float32),
        "w1": std * jax.random.normal(ks[2], (dim, mlp_hidden), jnp.float32),
        "b1": jnp.zeros((1, mlp_hidden), jnp.float32),
        "w2": std * jax.random.normal(ks[3], (mlp_hidden, dim), jnp.float32),
        "b2": jnp.zeros((1, dim), jnp.float32),
    }


if __name__ == "__main__":
    B, N, C = 2, 16, 32
    num_heads = 4
    mlp_ratio = 4.0
    mlp_hidden = int(C * mlp_ratio)

    key = jax.random.PRNGKey(0)
    k_x, k_s, k_l, k_p = jax.random.split(key, 4)
    x_b = jax.random.normal(k_x, (B, N, C), jnp.float32)
    # auxiliary inputs (pass-through on the use_score=False path)
    x_s = jax.random.normal(k_s, (B, 8, C), jnp.float32)
    pos_emb_s = jnp.zeros((1, 8, C), jnp.float32)
    x_l = jax.random.normal(k_l, (B, 8, C), jnp.float32)
    pos_emb_l = jnp.zeros((1, 8, C), jnp.float32)
    x_i = [[x_s, pos_emb_s], [x_l, pos_emb_l]]

    params = init_params(k_p, C, mlp_hidden)
    # hoisted out of the forward: one-time weight cast/reshape (cache & reuse)
    kparams = jax.tree_util.tree_map(jax.block_until_ready,
                                     prepare_params(params, num_heads=num_heads))

    out, x_i_out, tokens = block_forward(x_b, x_i, kparams, num_heads=num_heads)
    out = jax.block_until_ready(out)

    ref = block_reference(x_b, params, num_heads=num_heads)
    assert out.shape == (B, N, C)
    # bf16 MXU operands -> slightly looser tolerance than pure f32
    assert jnp.allclose(out, ref, atol=2e-2, rtol=2e-2), \
        f"max err {jnp.max(jnp.abs(out - ref))}"

    print("KERNEL_OK")
</pallas_src>

<mosaic_0001>
module attributes {stable_mosaic.version = 11 : i64} {
  func.func @_block_kernel(%arg0: i32, %arg1: memref<1x16x32xf32, #tpu.memory_space<vmem>>, %arg2: memref<1x32xf32, #tpu.memory_space<vmem>>, %arg3: memref<1x32xf32, #tpu.memory_space<vmem>>, %arg4: memref<32x96xbf16, #tpu.memory_space<vmem>>, %arg5: memref<4x8x32xbf16, #tpu.memory_space<vmem>>, %arg6: memref<1x32xf32, #tpu.memory_space<vmem>>, %arg7: memref<1x32xf32, #tpu.memory_space<vmem>>, %arg8: memref<1x32xf32, #tpu.memory_space<vmem>>, %arg9: memref<32x128xbf16, #tpu.memory_space<vmem>>, %arg10: memref<1x128xf32, #tpu.memory_space<vmem>>, %arg11: memref<128x32xbf16, #tpu.memory_space<vmem>>, %arg12: memref<1x32xf32, #tpu.memory_space<vmem>>, %arg13: memref<1x16x32xf32, #tpu.memory_space<vmem>>) attributes {dimension_semantics = [#tpu.dimension_semantics<parallel>], iteration_bounds = array<i64: 2>, scalar_prefetch = 0 : i64, scratch_operands = 0 : i64, tpu.core_type = #tpu.core_type<tc>, window_params = [{transform_indices = @transform_0, window_bounds = array<i64: 1, 16, 32>}, {pipeline_mode = #tpu.pipeline_mode<synchronous>, transform_indices = @transform_1, window_bounds = array<i64: 1, 32>}, {pipeline_mode = #tpu.pipeline_mode<synchronous>, transform_indices = @transform_2, window_bounds = array<i64: 1, 32>}, {pipeline_mode = #tpu.pipeline_mode<synchronous>, transform_indices = @transform_3, window_bounds = array<i64: 32, 96>}, {pipeline_mode = #tpu.pipeline_mode<synchronous>, transform_indices = @transform_4, window_bounds = array<i64: 4, 8, 32>}, {pipeline_mode = #tpu.pipeline_mode<synchronous>, transform_indices = @transform_5, window_bounds = array<i64: 1, 32>}, {pipeline_mode = #tpu.pipeline_mode<synchronous>, transform_indices = @transform_6, window_bounds = array<i64: 1, 32>}, {pipeline_mode = #tpu.pipeline_mode<synchronous>, transform_indices = @transform_7, window_bounds = array<i64: 1, 32>}, {pipeline_mode = #tpu.pipeline_mode<synchronous>, transform_indices = @transform_8, window_bounds = array<i64: 32, 128>}, {pipeline_mode = #tpu.pipeline_mode<synchronous>, transform_indices = @transform_9, window_bounds = array<i64: 1, 128>}, {pipeline_mode = #tpu.pipeline_mode<synchronous>, transform_indices = @transform_10, window_bounds = array<i64: 128, 32>}, {pipeline_mode = #tpu.pipeline_mode<synchronous>, transform_indices = @transform_11, window_bounds = array<i64: 1, 32>}, {transform_indices = @transform_12, window_bounds = array<i64: 1, 16, 32>}]} {
    %c0 = arith.constant 0 : index
    %c0_0 = arith.constant 0 : index
    %c0_1 = arith.constant 0 : index
    %0 = vector.load %arg1[%c0, %c0_0, %c0_1] : memref<1x16x32xf32, #tpu.memory_space<vmem>>, vector<1x16x32xf32>
    %1 = vector.shape_cast %0 : vector<1x16x32xf32> to vector<16x32xf32>
    %c0_2 = arith.constant 0 : index
    %c0_3 = arith.constant 0 : index
    %2 = vector.load %arg2[%c0_2, %c0_3] : memref<1x32xf32, #tpu.memory_space<vmem>>, vector<1x32xf32>
    %c0_4 = arith.constant 0 : index
    %c0_5 = arith.constant 0 : index
    %3 = vector.load %arg3[%c0_4, %c0_5] : memref<1x32xf32, #tpu.memory_space<vmem>>, vector<1x32xf32>
    %cst = arith.constant dense<0.000000e+00> : vector<16xf32>
    %4 = vector.multi_reduction <add>, %1, %cst [1] : vector<16x32xf32> to vector<16xf32>
    %5 = vector.shape_cast %4 : vector<16xf32> to vector<16x1xf32>
    %cst_6 = arith.constant 3.200000e+01 : f32
    %6 = vector.broadcast %cst_6 : f32 to vector<16x1xf32>
    %7 = arith.divf %5, %6 : vector<16x1xf32>
    %8 = vector.broadcast %7 : vector<16x1xf32> to vector<16x32xf32>
    %9 = arith.subf %1, %8 : vector<16x32xf32>
    %10 = arith.mulf %9, %9 : vector<16x32xf32>
    %cst_7 = arith.constant dense<0.000000e+00> : vector<16xf32>
    %11 = vector.multi_reduction <add>, %10, %cst_7 [1] : vector<16x32xf32> to vector<16xf32>
    %12 = vector.shape_cast %11 : vector<16xf32> to vector<16x1xf32>
    %cst_8 = arith.constant 3.200000e+01 : f32
    %13 = vector.broadcast %cst_8 : f32 to vector<16x1xf32>
    %14 = arith.divf %12, %13 : vector<16x1xf32>
    %cst_9 = arith.constant 9.99999974E-6 : f32
    %15 = vector.broadcast %cst_9 : f32 to vector<16x1xf32>
    %16 = arith.addf %14, %15 : vector<16x1xf32>
    %17 = math.rsqrt %16 : vector<16x1xf32>
    %18 = vector.broadcast %17 : vector<16x1xf32> to vector<16x32xf32>
    %19 = arith.mulf %9, %18 : vector<16x32xf32>
    %20 = vector.broadcast %2 : vector<1x32xf32> to vector<16x32xf32>
    %21 = arith.mulf %19, %20 : vector<16x32xf32>
    %22 = vector.broadcast %3 : vector<1x32xf32> to vector<16x32xf32>
    %23 = arith.addf %21, %22 : vector<16x32xf32>
    %24 = arith.truncf %23 : vector<16x32xf32> to vector<16x32xbf16>
    %c0_10 = arith.constant 0 : index
    %c0_11 = arith.constant 0 : index
    %25 = vector.load %arg4[%c0_10, %c0_11] : memref<32x96xbf16, #tpu.memory_space<vmem>>, vector<32x96xbf16>
    %cst_12 = arith.constant dense<0.000000e+00> : vector<16x96xf32>
    %26 = tpu.matmul %24, %25, %cst_12 {dimension_numbers = #tpu.dot_dimension_numbers<[1], [0], [0], [1], [0, 0, 1, 1], [], []>} : vector<16x32xbf16>, vector<32x96xbf16>, vector<16x96xf32> -> vector<16x96xf32>
    %27 = arith.truncf %26 : vector<16x96xf32> to vector<16x96xbf16>
    %cst_13 = arith.constant 0.000000e+00 : f32
    %28 = vector.broadcast %cst_13 : f32 to vector<16x32xf32>
    %29 = vector.extract_strided_slice %27 {offsets = [0, 0], sizes = [16, 8], strides = [1, 1]} : vector<16x96xbf16> to vector<16x8xbf16>
    %30 = vector.extract_strided_slice %27 {offsets = [0, 32], sizes = [16, 8], strides = [1, 1]} : vector<16x96xbf16> to vector<16x8xbf16>
    %31 = vector.extract_strided_slice %27 {offsets = [0, 64], sizes = [16, 8], strides = [1, 1]} : vector<16x96xbf16> to vector<16x8xbf16>
    "tpu.trace_start"() <{level = 10 : i32, message = "nd,md->nm"}> : () -> ()
    %cst_14 = arith.constant dense<0.000000e+00> : vector<16x16xf32>
    %32 = tpu.matmul %29, %30, %cst_14 {dimension_numbers = #tpu.dot_dimension_numbers<[1], [1], [0], [0], [0, 0, 1, 0], [], []>} : vector<16x8xbf16>, vector<16x8xbf16>, vector<16x16xf32> -> vector<16x16xf32>
    "tpu.trace_stop"() : () -> ()
    %cst_15 = arith.constant dense<0xFF800000> : vector<16xf32>
    %33 = vector.multi_reduction <maximumf>, %32, %cst_15 [1] : vector<16x16xf32> to vector<16xf32>
    %34 = vector.shape_cast %33 : vector<16xf32> to vector<16x1xf32>
    %35 = vector.broadcast %34 : vector<16x1xf32> to vector<16x16xf32>
    %36 = arith.subf %32, %35 : vector<16x16xf32>
    %37 = math.exp %36 : vector<16x16xf32>
    %cst_16 = arith.constant dense<0.000000e+00> : vector<16xf32>
    %38 = vector.multi_reduction <add>, %37, %cst_16 [1] : vector<16x16xf32> to vector<16xf32>
    %39 = vector.shape_cast %38 : vector<16xf32> to vector<16x1xf32>
    %40 = tpu.reciprocal %39 {approx = true} : vector<16x1xf32> -> vector<16x1xf32>
    %41 = vector.broadcast %40 : vector<16x1xf32> to vector<16x16xf32>
    %42 = arith.mulf %37, %41 : vector<16x16xf32>
    %43 = arith.truncf %42 : vector<16x16xf32> to vector<16x16xbf16>
    %cst_17 = arith.constant dense<0.000000e+00> : vector<16x8xf32>
    %44 = tpu.matmul %43, %31, %cst_17 {dimension_numbers = #tpu.dot_dimension_numbers<[1], [0], [0], [1], [0, 0, 1, 1], [], []>} : vector<16x16xbf16>, vector<16x8xbf16>, vector<16x8xf32> -> vector<16x8xf32>
    %45 = arith.truncf %44 : vector<16x8xf32> to vector<16x8xbf16>
    %c0_18 = arith.constant 0 : index
    %c0_19 = arith.constant 0 : index
    %c0_20 = arith.constant 0 : index
    %46 = vector.load %arg5[%c0_18, %c0_19, %c0_20] : memref<4x8x32xbf16, #tpu.memory_space<vmem>>, vector<1x8x32xbf16>
    %47 = vector.shape_cast %46 : vector<1x8x32xbf16> to vector<8x32xbf16>
    %cst_21 = arith.constant dense<0.000000e+00> : vector<16x32xf32>
    %48 = tpu.matmul %45, %47, %cst_21 {dimension_numbers = #tpu.dot_dimension_numbers<[1], [0], [0], [1], [0, 0, 1, 1], [], []>} : vector<16x8xbf16>, vector<8x32xbf16>, vector<16x32xf32> -> vector<16x32xf32>
    %49 = arith.addf %28, %48 : vector<16x32xf32>
    %50 = vector.extract_strided_slice %27 {offsets = [0, 8], sizes = [16, 8], strides = [1, 1]} : vector<16x96xbf16> to vector<16x8xbf16>
    %51 = vector.extract_strided_slice %27 {offsets = [0, 40], sizes = [16, 8], strides = [1, 1]} : vector<16x96xbf16> to vector<16x8xbf16>
    %52 = vector.extract_strided_slice %27 {offsets = [0, 72], sizes = [16, 8], strides = [1, 1]} : vector<16x96xbf16> to vector<16x8xbf16>
    "tpu.trace_start"() <{level = 10 : i32, message = "nd,md->nm"}> : () -> ()
    %cst_22 = arith.constant dense<0.000000e+00> : vector<16x16xf32>
    %53 = tpu.matmul %50, %51, %cst_22 {dimension_numbers = #tpu.dot_dimension_numbers<[1], [1], [0], [0], [0, 0, 1, 0], [], []>} : vector<16x8xbf16>, vector<16x8xbf16>, vector<16x16xf32> -> vector<16x16xf32>
    "tpu.trace_stop"() : () -> ()
    %cst_23 = arith.constant dense<0xFF800000> : vector<16xf32>
    %54 = vector.multi_reduction <maximumf>, %53, %cst_23 [1] : vector<16x16xf32> to vector<16xf32>
    %55 = vector.shape_cast %54 : vector<16xf32> to vector<16x1xf32>
    %56 = vector.broadcast %55 : vector<16x1xf32> to vector<16x16xf32>
    %57 = arith.subf %53, %56 : vector<16x16xf32>
    %58 = math.exp %57 : vector<16x16xf32>
    %cst_24 = arith.constant dense<0.000000e+00> : vector<16xf32>
    %59 = vector.multi_reduction <add>, %58, %cst_24 [1] : vector<16x16xf32> to vector<16xf32>
    %60 = vector.shape_cast %59 : vector<16xf32> to vector<16x1xf32>
    %61 = tpu.reciprocal %60 {approx = true} : vector<16x1xf32> -> vector<16x1xf32>
    %62 = vector.broadcast %61 : vector<16x1xf32> to vector<16x16xf32>
    %63 = arith.mulf %58, %62 : vector<16x16xf32>
    %64 = arith.truncf %63 : vector<16x16xf32> to vector<16x16xbf16>
    %cst_25 = arith.constant dense<0.000000e+00> : vector<16x8xf32>
    %65 = tpu.matmul %64, %52, %cst_25 {dimension_numbers = #tpu.dot_dimension_numbers<[1], [0], [0], [1], [0, 0, 1, 1], [], []>} : vector<16x16xbf16>, vector<16x8xbf16>, vector<16x8xf32> -> vector<16x8xf32>
    %66 = arith.truncf %65 : vector<16x8xf32> to vector<16x8xbf16>
    %c1 = arith.constant 1 : index
    %c0_26 = arith.constant 0 : index
    %c0_27 = arith.constant 0 : index
    %67 = vector.load %arg5[%c1, %c0_26, %c0_27] : memref<4x8x32xbf16, #tpu.memory_space<vmem>>, vector<1x8x32xbf16>
    %68 = vector.shape_cast %67 : vector<1x8x32xbf16> to vector<8x32xbf16>
    %cst_28 = arith.constant dense<0.000000e+00> : vector<16x32xf32>
    %69 = tpu.matmul %66, %68, %cst_28 {dimension_numbers = #tpu.dot_dimension_numbers<[1], [0], [0], [1], [0, 0, 1, 1], [], []>} : vector<16x8xbf16>, vector<8x32xbf16>, vector<16x32xf32> -> vector<16x32xf32>
    %70 = arith.addf %49, %69 : vector<16x32xf32>
    %71 = vector.extract_strided_slice %27 {offsets = [0, 16], sizes = [16, 8], strides = [1, 1]} : vector<16x96xbf16> to vector<16x8xbf16>
    %72 = vector.extract_strided_slice %27 {offsets = [0, 48], sizes = [16, 8], strides = [1, 1]} : vector<16x96xbf16> to vector<16x8xbf16>
    %73 = vector.extract_strided_slice %27 {offsets = [0, 80], sizes = [16, 8], strides = [1, 1]} : vector<16x96xbf16> to vector<16x8xbf16>
    "tpu.trace_start"() <{level = 10 : i32, message = "nd,md->nm"}> : () -> ()
    %cst_29 = arith.constant dense<0.000000e+00> : vector<16x16xf32>
    %74 = tpu.matmul %71, %72, %cst_29 {dimension_numbers = #tpu.dot_dimension_numbers<[1], [1], [0], [0], [0, 0, 1, 0], [], []>} : vector<16x8xbf16>, vector<16x8xbf16>, vector<16x16xf32> -> vector<16x16xf32>
    "tpu.trace_stop"() : () -> ()
    %cst_30 = arith.constant dense<0xFF800000> : vector<16xf32>
    %75 = vector.multi_reduction <maximumf>, %74, %cst_30 [1] : vector<16x16xf32> to vector<16xf32>
    %76 = vector.shape_cast %75 : vector<16xf32> to vector<16x1xf32>
    %77 = vector.broadcast %76 : vector<16x1xf32> to vector<16x16xf32>
    %78 = arith.subf %74, %77 : vector<16x16xf32>
    %79 = math.exp %78 : vector<16x16xf32>
    %cst_31 = arith.constant dense<0.000000e+00> : vector<16xf32>
    %80 = vector.multi_reduction <add>, %79, %cst_31 [1] : vector<16x16xf32> to vector<16xf32>
    %81 = vector.shape_cast %80 : vector<16xf32> to vector<16x1xf32>
    %82 = tpu.reciprocal %81 {approx = true} : vector<16x1xf32> -> vector<16x1xf32>
    %83 = vector.broadcast %82 : vector<16x1xf32> to vector<16x16xf32>
    %84 = arith.mulf %79, %83 : vector<16x16xf32>
    %85 = arith.truncf %84 : vector<16x16xf32> to vector<16x16xbf16>
    %cst_32 = arith.constant dense<0.000000e+00> : vector<16x8xf32>
    %86 = tpu.matmul %85, %73, %cst_32 {dimension_numbers = #tpu.dot_dimension_numbers<[1], [0], [0], [1], [0, 0, 1, 1], [], []>} : vector<16x16xbf16>, vector<16x8xbf16>, vector<16x8xf32> -> vector<16x8xf32>
    %87 = arith.truncf %86 : vector<16x8xf32> to vector<16x8xbf16>
    %c2 = arith.constant 2 : index
    %c0_33 = arith.constant 0 : index
    %c0_34 = arith.constant 0 : index
    %88 = vector.load %arg5[%c2, %c0_33, %c0_34] : memref<4x8x32xbf16, #tpu.memory_space<vmem>>, vector<1x8x32xbf16>
    %89 = vector.shape_cast %88 : vector<1x8x32xbf16> to vector<8x32xbf16>
    %cst_35 = arith.constant dense<0.000000e+00> : vector<16x32xf32>
    %90 = tpu.matmul %87, %89, %cst_35 {dimension_numbers = #tpu.dot_dimension_numbers<[1], [0], [0], [1], [0, 0, 1, 1], [], []>} : vector<16x8xbf16>, vector<8x32xbf16>, vector<16x32xf32> -> vector<16x32xf32>
    %91 = arith.addf %70, %90 : vector<16x32xf32>
    %92 = vector.extract_strided_slice %27 {offsets = [0, 24], sizes = [16, 8], strides = [1, 1]} : vector<16x96xbf16> to vector<16x8xbf16>
    %93 = vector.extract_strided_slice %27 {offsets = [0, 56], sizes = [16, 8], strides = [1, 1]} : vector<16x96xbf16> to vector<16x8xbf16>
    %94 = vector.extract_strided_slice %27 {offsets = [0, 88], sizes = [16, 8], strides = [1, 1]} : vector<16x96xbf16> to vector<16x8xbf16>
    "tpu.trace_start"() <{level = 10 : i32, message = "nd,md->nm"}> : () -> ()
    %cst_36 = arith.constant dense<0.000000e+00> : vector<16x16xf32>
    %95 = tpu.matmul %92, %93, %cst_36 {dimension_numbers = #tpu.dot_dimension_numbers<[1], [1], [0], [0], [0, 0, 1, 0], [], []>} : vector<16x8xbf16>, vector<16x8xbf16>, vector<16x16xf32> -> vector<16x16xf32>
    "tpu.trace_stop"() : () -> ()
    %cst_37 = arith.constant dense<0xFF800000> : vector<16xf32>
    %96 = vector.multi_reduction <maximumf>, %95, %cst_37 [1] : vector<16x16xf32> to vector<16xf32>
    %97 = vector.shape_cast %96 : vector<16xf32> to vector<16x1xf32>
    %98 = vector.broadcast %97 : vector<16x1xf32> to vector<16x16xf32>
    %99 = arith.subf %95, %98 : vector<16x16xf32>
    %100 = math.exp %99 : vector<16x16xf32>
    %cst_38 = arith.constant dense<0.000000e+00> : vector<16xf32>
    %101 = vector.multi_reduction <add>, %100, %cst_38 [1] : vector<16x16xf32> to vector<16xf32>
    %102 = vector.shape_cast %101 : vector<16xf32> to vector<16x1xf32>
    %103 = tpu.reciprocal %102 {approx = true} : vector<16x1xf32> -> vector<16x1xf32>
    %104 = vector.broadcast %103 : vector<16x1xf32> to vector<16x16xf32>
    %105 = arith.mulf %100, %104 : vector<16x16xf32>
    %106 = arith.truncf %105 : vector<16x16xf32> to vector<16x16xbf16>
    %cst_39 = arith.constant dense<0.000000e+00> : vector<16x8xf32>
    %107 = tpu.matmul %106, %94, %cst_39 {dimension_numbers = #tpu.dot_dimension_numbers<[1], [0], [0], [1], [0, 0, 1, 1], [], []>} : vector<16x16xbf16>, vector<16x8xbf16>, vector<16x8xf32> -> vector<16x8xf32>
    %108 = arith.truncf %107 : vector<16x8xf32> to vector<16x8xbf16>
    %c3 = arith.constant 3 : index
    %c0_40 = arith.constant 0 : index
    %c0_41 = arith.constant 0 : index
    %109 = vector.load %arg5[%c3, %c0_40, %c0_41] : memref<4x8x32xbf16, #tpu.memory_space<vmem>>, vector<1x8x32xbf16>
    %110 = vector.shape_cast %109 : vector<1x8x32xbf16> to vector<8x32xbf16>
    %cst_42 = arith.constant dense<0.000000e+00> : vector<16x32xf32>
    %111 = tpu.matmul %108, %110, %cst_42 {dimension_numbers = #tpu.dot_dimension_numbers<[1], [0], [0], [1], [0, 0, 1, 1], [], []>} : vector<16x8xbf16>, vector<8x32xbf16>, vector<16x32xf32> -> vector<16x32xf32>
    %112 = arith.addf %91, %111 : vector<16x32xf32>
    %113 = arith.addf %1, %112 : vector<16x32xf32>
    %c0_43 = arith.constant 0 : index
    %c0_44 = arith.constant 0 : index
    %114 = vector.load %arg6[%c0_43, %c0_44] : memref<1x32xf32, #tpu.memory_space<vmem>>, vector<1x32xf32>
    %115 = vector.broadcast %114 : vector<1x32xf32> to vector<16x32xf32>
    %116 = arith.addf %113, %115 : vector<16x32xf32>
    %c0_45 = arith.constant 0 : index
    %c0_46 = arith.constant 0 : index
    %117 = vector.load %arg7[%c0_45, %c0_46] : memref<1x32xf32, #tpu.memory_space<vmem>>, vector<1x32xf32>
    %c0_47 = arith.constant 0 : index
    %c0_48 = arith.constant 0 : index
    %118 = vector.load %arg8[%c0_47, %c0_48] : memref<1x32xf32, #tpu.memory_space<vmem>>, vector<1x32xf32>
    %cst_49 = arith.constant dense<0.000000e+00> : vector<16xf32>
    %119 = vector.multi_reduction <add>, %116, %cst_49 [1] : vector<16x32xf32> to vector<16xf32>
    %120 = vector.shape_cast %119 : vector<16xf32> to vector<16x1xf32>
    %cst_50 = arith.constant 3.200000e+01 : f32
    %121 = vector.broadcast %cst_50 : f32 to vector<16x1xf32>
    %122 = arith.divf %120, %121 : vector<16x1xf32>
    %123 = vector.broadcast %122 : vector<16x1xf32> to vector<16x32xf32>
    %124 = arith.subf %116, %123 : vector<16x32xf32>
    %125 = arith.mulf %124, %124 : vector<16x32xf32>
    %cst_51 = arith.constant dense<0.000000e+00> : vector<16xf32>
    %126 = vector.multi_reduction <add>, %125, %cst_51 [1] : vector<16x32xf32> to vector<16xf32>
    %127 = vector.shape_cast %126 : vector<16xf32> to vector<16x1xf32>
    %cst_52 = arith.constant 3.200000e+01 : f32
    %128 = vector.broadcast %cst_52 : f32 to vector<16x1xf32>
    %129 = arith.divf %127, %128 : vector<16x1xf32>
    %cst_53 = arith.constant 9.99999974E-6 : f32
    %130 = vector.broadcast %cst_53 : f32 to vector<16x1xf32>
    %131 = arith.addf %129, %130 : vector<16x1xf32>
    %132 = math.rsqrt %131 : vector<16x1xf32>
    %133 = vector.broadcast %132 : vector<16x1xf32> to vector<16x32xf32>
    %134 = arith.mulf %124, %133 : vector<16x32xf32>
    %135 = vector.broadcast %117 : vector<1x32xf32> to vector<16x32xf32>
    %136 = arith.mulf %134, %135 : vector<16x32xf32>
    %137 = vector.broadcast %118 : vector<1x32xf32> to vector<16x32xf32>
    %138 = arith.addf %136, %137 : vector<16x32xf32>
    %139 = arith.truncf %138 : vector<16x32xf32> to vector<16x32xbf16>
    %c0_54 = arith.constant 0 : index
    %c0_55 = arith.constant 0 : index
    %140 = vector.load %arg9[%c0_54, %c0_55] : memref<32x128xbf16, #tpu.memory_space<vmem>>, vector<32x128xbf16>
    %cst_56 = arith.constant dense<0.000000e+00> : vector<16x128xf32>
    %141 = tpu.matmul %139, %140, %cst_56 {dimension_numbers = #tpu.dot_dimension_numbers<[1], [0], [0], [1], [0, 0, 1, 1], [], []>} : vector<16x32xbf16>, vector<32x128xbf16>, vector<16x128xf32> -> vector<16x128xf32>
    %c0_57 = arith.constant 0 : index
    %c0_58 = arith.constant 0 : index
    %142 = vector.load %arg10[%c0_57, %c0_58] : memref<1x128xf32, #tpu.memory_space<vmem>>, vector<1x128xf32>
    %143 = vector.broadcast %142 : vector<1x128xf32> to vector<16x128xf32>
    %144 = arith.addf %141, %143 : vector<16x128xf32>
    %cst_59 = arith.constant 5.000000e-01 : f32
    %145 = vector.broadcast %cst_59 : f32 to vector<16x128xf32>
    %146 = arith.mulf %145, %144 : vector<16x128xf32>
    %cst_60 = arith.constant 0.707106769 : f32
    %147 = vector.broadcast %cst_60 : f32 to vector<16x128xf32>
    %148 = arith.mulf %144, %147 : vector<16x128xf32>
    %149 = math.erf %148 : vector<16x128xf32>
    %cst_61 = arith.constant 1.000000e+00 : f32
    %150 = vector.broadcast %cst_61 : f32 to vector<16x128xf32>
    %151 = arith.addf %150, %149 : vector<16x128xf32>
    %152 = arith.mulf %146, %151 : vector<16x128xf32>
    %153 = arith.truncf %152 : vector<16x128xf32> to vector<16x128xbf16>
    %c0_62 = arith.constant 0 : index
    %c0_63 = arith.constant 0 : index
    %154 = vector.load %arg11[%c0_62, %c0_63] : memref<128x32xbf16, #tpu.memory_space<vmem>>, vector<128x32xbf16>
    %cst_64 = arith.constant dense<0.000000e+00> : vector<16x32xf32>
    %155 = tpu.matmul %153, %154, %cst_64 {dimension_numbers = #tpu.dot_dimension_numbers<[1], [0], [0], [1], [0, 0, 1, 1], [], []>} : vector<16x128xbf16>, vector<128x32xbf16>, vector<16x32xf32> -> vector<16x32xf32>
    %c0_65 = arith.constant 0 : index
    %c0_66 = arith.constant 0 : index
    %156 = vector.load %arg12[%c0_65, %c0_66] : memref<1x32xf32, #tpu.memory_space<vmem>>, vector<1x32xf32>
    %157 = vector.broadcast %156 : vector<1x32xf32> to vector<16x32xf32>
    %158 = arith.addf %155, %157 : vector<16x32xf32>
    %159 = arith.addf %116, %158 : vector<16x32xf32>
    %c0_67 = arith.constant 0 : index
    %c0_68 = arith.constant 0 : index
    %c0_69 = arith.constant 0 : index
    %160 = vector.load %arg13[%c0_67, %c0_68, %c0_69] : memref<1x16x32xf32, #tpu.memory_space<vmem>>, vector<1x16x32xf32>
    %161 = vector.shape_cast %160 : vector<1x16x32xf32> to vector<16x32xf32>
    %162 = vector.shape_cast %159 : vector<16x32xf32> to vector<1x16x32xf32>
    tpu.vector_store %arg13[%c0_67, %c0_68, %c0_69], %162 {strides = array<i32>} : memref<1x16x32xf32, #tpu.memory_space<vmem>>, vector<1x16x32xf32>,
    return
  }
  func.func @transform_0(%arg0: i32) -> (i32, i32, i32) {
    %c0_i32 = arith.constant 0 : i32
    %c0_i32_0 = arith.constant 0 : i32
    %c0_i32_1 = arith.constant 0 : i32
    return %arg0, %c0_i32, %c0_i32_0 : i32, i32, i32
  }
  func.func @transform_1(%arg0: i32) -> (i32, i32) {
    %c0_i32 = arith.constant 0 : i32
    %c0_i32_0 = arith.constant 0 : i32
    %c0_i32_1 = arith.constant 0 : i32
    return %c0_i32, %c0_i32_0 : i32, i32
  }
  func.func @transform_2(%arg0: i32) -> (i32, i32) {
    %c0_i32 = arith.constant 0 : i32
    %c0_i32_0 = arith.constant 0 : i32
    %c0_i32_1 = arith.constant 0 : i32
    return %c0_i32, %c0_i32_0 : i32, i32
  }
  func.func @transform_3(%arg0: i32) -> (i32, i32) {
    %c0_i32 = arith.constant 0 : i32
    %c0_i32_0 = arith.constant 0 : i32
    %c0_i32_1 = arith.constant 0 : i32
    return %c0_i32, %c0_i32_0 : i32, i32
  }
  func.func @transform_4(%arg0: i32) -> (i32, i32, i32) {
    %c0_i32 = arith.constant 0 : i32
    %c0_i32_0 = arith.constant 0 : i32
    %c0_i32_1 = arith.constant 0 : i32
    %c0_i32_2 = arith.constant 0 : i32
    return %c0_i32, %c0_i32_0, %c0_i32_1 : i32, i32, i32
  }
  func.func @transform_5(%arg0: i32) -> (i32, i32) {
    %c0_i32 = arith.constant 0 : i32
    %c0_i32_0 = arith.constant 0 : i32
    %c0_i32_1 = arith.constant 0 : i32
    return %c0_i32, %c0_i32_0 : i32, i32
  }
  func.func @transform_6(%arg0: i32) -> (i32, i32) {
    %c0_i32 = arith.constant 0 : i32
    %c0_i32_0 = arith.constant 0 : i32
    %c0_i32_1 = arith.constant 0 : i32
    return %c0_i32, %c0_i32_0 : i32, i32
  }
  func.func @transform_7(%arg0: i32) -> (i32, i32) {
    %c0_i32 = arith.constant 0 : i32
    %c0_i32_0 = arith.constant 0 : i32
    %c0_i32_1 = arith.constant 0 : i32
    return %c0_i32, %c0_i32_0 : i32, i32
  }
  func.func @transform_8(%arg0: i32) -> (i32, i32) {
    %c0_i32 = arith.constant 0 : i32
    %c0_i32_0 = arith.constant 0 : i32
    %c0_i32_1 = arith.constant 0 : i32
    return %c0_i32, %c0_i32_0 : i32, i32
  }
  func.func @transform_9(%arg0: i32) -> (i32, i32) {
    %c0_i32 = arith.constant 0 : i32
    %c0_i32_0 = arith.constant 0 : i32
    %c0_i32_1 = arith.constant 0 : i32
    return %c0_i32, %c0_i32_0 : i32, i32
  }
  func.func @transform_10(%arg0: i32) -> (i32, i32) {
    %c0_i32 = arith.constant 0 : i32
    %c0_i32_0 = arith.constant 0 : i32
    %c0_i32_1 = arith.constant 0 : i32
    return %c0_i32, %c0_i32_0 : i32, i32
  }
  func.func @transform_11(%arg0: i32) -> (i32, i32) {
    %c0_i32 = arith.constant 0 : i32
    %c0_i32_0 = arith.constant 0 : i32
    %c0_i32_1 = arith.constant 0 : i32
    return %c0_i32, %c0_i32_0 : i32, i32
  }
  func.func @transform_12(%arg0: i32) -> (i32, i32, i32) {
    %c0_i32 = arith.constant 0 : i32
    %c0_i32_0 = arith.constant 0 : i32
    %c0_i32_1 = arith.constant 0 : i32
    return %arg0, %c0_i32, %c0_i32_0 : i32, i32, i32
  }
}

module attributes {stable_mosaic.version = 11 : i64} {
  func.func @_block_kernel(%arg0: i32, %arg1: memref<1x16x32xf32, #tpu.memory_space<vmem>>, %arg2: memref<1x32xf32, #tpu.memory_space<vmem>>, %arg3: memref<1x32xf32, #tpu.memory_space<vmem>>, %arg4: memref<32x96xbf16, #tpu.memory_space<vmem>>, %arg5: memref<4x8x32xbf16, #tpu.memory_space<vmem>>, %arg6: memref<1x32xf32, #tpu.memory_space<vmem>>, %arg7: memref<1x32xf32, #tpu.memory_space<vmem>>, %arg8: memref<1x32xf32, #tpu.memory_space<vmem>>, %arg9: memref<32x128xbf16, #tpu.memory_space<vmem>>, %arg10: memref<1x128xf32, #tpu.memory_space<vmem>>, %arg11: memref<128x32xbf16, #tpu.memory_space<vmem>>, %arg12: memref<1x32xf32, #tpu.memory_space<vmem>>, %arg13: memref<1x16x32xf32, #tpu.memory_space<vmem>>) attributes {dimension_semantics = [#tpu.dimension_semantics<parallel>], iteration_bounds = array<i64: 2>, scalar_prefetch = 0 : i64, scratch_operands = 0 : i64, tpu.core_type = #tpu.core_type<tc>, window_params = [{transform_indices = @transform_0, window_bounds = array<i64: 1, 16, 32>}, {pipeline_mode = #tpu.pipeline_mode<synchronous>, transform_indices = @transform_1, window_bounds = array<i64: 1, 32>}, {pipeline_mode = #tpu.pipeline_mode<synchronous>, transform_indices = @transform_2, window_bounds = array<i64: 1, 32>}, {pipeline_mode = #tpu.pipeline_mode<synchronous>, transform_indices = @transform_3, window_bounds = array<i64: 32, 96>}, {pipeline_mode = #tpu.pipeline_mode<synchronous>, transform_indices = @transform_4, window_bounds = array<i64: 4, 8, 32>}, {pipeline_mode = #tpu.pipeline_mode<synchronous>, transform_indices = @transform_5, window_bounds = array<i64: 1, 32>}, {pipeline_mode = #tpu.pipeline_mode<synchronous>, transform_indices = @transform_6, window_bounds = array<i64: 1, 32>}, {pipeline_mode = #tpu.pipeline_mode<synchronous>, transform_indices = @transform_7, window_bounds = array<i64: 1, 32>}, {pipeline_mode = #tpu.pipeline_mode<synchronous>, transform_indices = @transform_8, window_bounds = array<i64: 32, 128>}, {pipeline_mode = #tpu.pipeline_mode<synchronous>, transform_indices = @transform_9, window_bounds = array<i64: 1, 128>}, {pipeline_mode = #tpu.pipeline_mode<synchronous>, transform_indices = @transform_10, window_bounds = array<i64: 128, 32>}, {pipeline_mode = #tpu.pipeline_mode<synchronous>, transform_indices = @transform_11, window_bounds = array<i64: 1, 32>}, {transform_indices = @transform_12, window_bounds = array<i64: 1, 16, 32>}]} {
    %c0 = arith.constant 0 : index
    %c0_0 = arith.constant 0 : index
    %c0_1 = arith.constant 0 : index
    %0 = vector.load %arg1[%c0, %c0_0, %c0_1] : memref<1x16x32xf32, #tpu.memory_space<vmem>>, vector<1x16x32xf32>
    %1 = vector.shape_cast %0 : vector<1x16x32xf32> to vector<16x32xf32>
    %c0_2 = arith.constant 0 : index
    %c0_3 = arith.constant 0 : index
    %2 = vector.load %arg2[%c0_2, %c0_3] : memref<1x32xf32, #tpu.memory_space<vmem>>, vector<1x32xf32>
    %c0_4 = arith.constant 0 : index
    %c0_5 = arith.constant 0 : index
    %3 = vector.load %arg3[%c0_4, %c0_5] : memref<1x32xf32, #tpu.memory_space<vmem>>, vector<1x32xf32>
    %cst = arith.constant dense<0.000000e+00> : vector<16xf32>
    %4 = vector.multi_reduction <add>, %1, %cst [1] : vector<16x32xf32> to vector<16xf32>
    %5 = vector.shape_cast %4 : vector<16xf32> to vector<16x1xf32>
    %cst_6 = arith.constant 3.200000e+01 : f32
    %6 = vector.broadcast %cst_6 : f32 to vector<16x1xf32>
    %7 = arith.divf %5, %6 : vector<16x1xf32>
    %8 = vector.broadcast %7 : vector<16x1xf32> to vector<16x32xf32>
    %9 = arith.subf %1, %8 : vector<16x32xf32>
    %10 = arith.mulf %9, %9 : vector<16x32xf32>
    %cst_7 = arith.constant dense<0.000000e+00> : vector<16xf32>
    %11 = vector.multi_reduction <add>, %10, %cst_7 [1] : vector<16x32xf32> to vector<16xf32>
    %12 = vector.shape_cast %11 : vector<16xf32> to vector<16x1xf32>
    %cst_8 = arith.constant 3.200000e+01 : f32
    %13 = vector.broadcast %cst_8 : f32 to vector<16x1xf32>
    %14 = arith.divf %12, %13 : vector<16x1xf32>
    %cst_9 = arith.constant 9.99999974E-6 : f32
    %15 = vector.broadcast %cst_9 : f32 to vector<16x1xf32>
    %16 = arith.addf %14, %15 : vector<16x1xf32>
    %17 = math.rsqrt %16 : vector<16x1xf32>
    %18 = vector.broadcast %17 : vector<16x1xf32> to vector<16x32xf32>
    %19 = arith.mulf %9, %18 : vector<16x32xf32>
    %20 = vector.broadcast %2 : vector<1x32xf32> to vector<16x32xf32>
    %21 = arith.mulf %19, %20 : vector<16x32xf32>
    %22 = vector.broadcast %3 : vector<1x32xf32> to vector<16x32xf32>
    %23 = arith.addf %21, %22 : vector<16x32xf32>
    %24 = arith.truncf %23 : vector<16x32xf32> to vector<16x32xbf16>
    %c0_10 = arith.constant 0 : index
    %c0_11 = arith.constant 0 : index
    %25 = vector.load %arg4[%c0_10, %c0_11] : memref<32x96xbf16, #tpu.memory_space<vmem>>, vector<32x96xbf16>
    %cst_12 = arith.constant dense<0.000000e+00> : vector<16x96xf32>
    %26 = tpu.matmul %24, %25, %cst_12 {dimension_numbers = #tpu.dot_dimension_numbers<[1], [0], [0], [1], [0, 0, 1, 1], [], []>} : vector<16x32xbf16>, vector<32x96xbf16>, vector<16x96xf32> -> vector<16x96xf32>
    %27 = arith.truncf %26 : vector<16x96xf32> to vector<16x96xbf16>
    %cst_13 = arith.constant 0.000000e+00 : f32
    %28 = vector.broadcast %cst_13 : f32 to vector<16x32xf32>
    %29 = vector.extract_strided_slice %27 {offsets = [0, 0], sizes = [16, 8], strides = [1, 1]} : vector<16x96xbf16> to vector<16x8xbf16>
    %30 = vector.extract_strided_slice %27 {offsets = [0, 32], sizes = [16, 8], strides = [1, 1]} : vector<16x96xbf16> to vector<16x8xbf16>
    %31 = vector.extract_strided_slice %27 {offsets = [0, 64], sizes = [16, 8], strides = [1, 1]} : vector<16x96xbf16> to vector<16x8xbf16>
    "tpu.trace_start"() <{level = 10 : i32, message = "nd,md->nm"}> : () -> ()
    %cst_14 = arith.constant dense<0.000000e+00> : vector<16x16xf32>
    %32 = tpu.matmul %29, %30, %cst_14 {dimension_numbers = #tpu.dot_dimension_numbers<[1], [1], [0], [0], [0, 0, 1, 0], [], []>} : vector<16x8xbf16>, vector<16x8xbf16>, vector<16x16xf32> -> vector<16x16xf32>
    "tpu.trace_stop"() : () -> ()
    %cst_15 = arith.constant dense<0xFF800000> : vector<16xf32>
    %33 = vector.multi_reduction <maximumf>, %32, %cst_15 [1] : vector<16x16xf32> to vector<16xf32>
    %34 = vector.shape_cast %33 : vector<16xf32> to vector<16x1xf32>
    %35 = vector.broadcast %34 : vector<16x1xf32> to vector<16x16xf32>
    %36 = arith.subf %32, %35 : vector<16x16xf32>
    %37 = math.exp %36 : vector<16x16xf32>
    %cst_16 = arith.constant dense<0.000000e+00> : vector<16xf32>
    %38 = vector.multi_reduction <add>, %37, %cst_16 [1] : vector<16x16xf32> to vector<16xf32>
    %39 = vector.shape_cast %38 : vector<16xf32> to vector<16x1xf32>
    %40 = tpu.reciprocal %39 {approx = true} : vector<16x1xf32> -> vector<16x1xf32>
    %41 = vector.broadcast %40 : vector<16x1xf32> to vector<16x16xf32>
    %42 = arith.mulf %37, %41 : vector<16x16xf32>
    %43 = arith.truncf %42 : vector<16x16xf32> to vector<16x16xbf16>
    %cst_17 = arith.constant dense<0.000000e+00> : vector<16x8xf32>
    %44 = tpu.matmul %43, %31, %cst_17 {dimension_numbers = #tpu.dot_dimension_numbers<[1], [0], [0], [1], [0, 0, 1, 1], [], []>} : vector<16x16xbf16>, vector<16x8xbf16>, vector<16x8xf32> -> vector<16x8xf32>
    %45 = arith.truncf %44 : vector<16x8xf32> to vector<16x8xbf16>
    %c0_18 = arith.constant 0 : index
    %c0_19 = arith.constant 0 : index
    %c0_20 = arith.constant 0 : index
    %46 = vector.load %arg5[%c0_18, %c0_19, %c0_20] : memref<4x8x32xbf16, #tpu.memory_space<vmem>>, vector<1x8x32xbf16>
    %47 = vector.shape_cast %46 : vector<1x8x32xbf16> to vector<8x32xbf16>
    %cst_21 = arith.constant dense<0.000000e+00> : vector<16x32xf32>
    %48 = tpu.matmul %45, %47, %cst_21 {dimension_numbers = #tpu.dot_dimension_numbers<[1], [0], [0], [1], [0, 0, 1, 1], [], []>} : vector<16x8xbf16>, vector<8x32xbf16>, vector<16x32xf32> -> vector<16x32xf32>
    %49 = arith.addf %28, %48 : vector<16x32xf32>
    %50 = vector.extract_strided_slice %27 {offsets = [0, 8], sizes = [16, 8], strides = [1, 1]} : vector<16x96xbf16> to vector<16x8xbf16>
    %51 = vector.extract_strided_slice %27 {offsets = [0, 40], sizes = [16, 8], strides = [1, 1]} : vector<16x96xbf16> to vector<16x8xbf16>
    %52 = vector.extract_strided_slice %27 {offsets = [0, 72], sizes = [16, 8], strides = [1, 1]} : vector<16x96xbf16> to vector<16x8xbf16>
    "tpu.trace_start"() <{level = 10 : i32, message = "nd,md->nm"}> : () -> ()
    %cst_22 = arith.constant dense<0.000000e+00> : vector<16x16xf32>
    %53 = tpu.matmul %50, %51, %cst_22 {dimension_numbers = #tpu.dot_dimension_numbers<[1], [1], [0], [0], [0, 0, 1, 0], [], []>} : vector<16x8xbf16>, vector<16x8xbf16>, vector<16x16xf32> -> vector<16x16xf32>
    "tpu.trace_stop"() : () -> ()
    %cst_23 = arith.constant dense<0xFF800000> : vector<16xf32>
    %54 = vector.multi_reduction <maximumf>, %53, %cst_23 [1] : vector<16x16xf32> to vector<16xf32>
    %55 = vector.shape_cast %54 : vector<16xf32> to vector<16x1xf32>
    %56 = vector.broadcast %55 : vector<16x1xf32> to vector<16x16xf32>
    %57 = arith.subf %53, %56 : vector<16x16xf32>
    %58 = math.exp %57 : vector<16x16xf32>
    %cst_24 = arith.constant dense<0.000000e+00> : vector<16xf32>
    %59 = vector.multi_reduction <add>, %58, %cst_24 [1] : vector<16x16xf32> to vector<16xf32>
    %60 = vector.shape_cast %59 : vector<16xf32> to vector<16x1xf32>
    %61 = tpu.reciprocal %60 {approx = true} : vector<16x1xf32> -> vector<16x1xf32>
    %62 = vector.broadcast %61 : vector<16x1xf32> to vector<16x16xf32>
    %63 = arith.mulf %58, %62 : vector<16x16xf32>
    %64 = arith.truncf %63 : vector<16x16xf32> to vector<16x16xbf16>
    %cst_25 = arith.constant dense<0.000000e+00> : vector<16x8xf32>
    %65 = tpu.matmul %64, %52, %cst_25 {dimension_numbers = #tpu.dot_dimension_numbers<[1], [0], [0], [1], [0, 0, 1, 1], [], []>} : vector<16x16xbf16>, vector<16x8xbf16>, vector<16x8xf32> -> vector<16x8xf32>
    %66 = arith.truncf %65 : vector<16x8xf32> to vector<16x8xbf16>
    %c1 = arith.constant 1 : index
    %c0_26 = arith.constant 0 : index
    %c0_27 = arith.constant 0 : index
    %67 = vector.load %arg5[%c1, %c0_26, %c0_27] : memref<4x8x32xbf16, #tpu.memory_space<vmem>>, vector<1x8x32xbf16>
    %68 = vector.shape_cast %67 : vector<1x8x32xbf16> to vector<8x32xbf16>
    %cst_28 = arith.constant dense<0.000000e+00> : vector<16x32xf32>
    %69 = tpu.matmul %66, %68, %cst_28 {dimension_numbers = #tpu.dot_dimension_numbers<[1], [0], [0], [1], [0, 0, 1, 1], [], []>} : vector<16x8xbf16>, vector<8x32xbf16>, vector<16x32xf32> -> vector<16x32xf32>
    %70 = arith.addf %49, %69 : vector<16x32xf32>
    %71 = vector.extract_strided_slice %27 {offsets = [0, 16], sizes = [16, 8], strides = [1, 1]} : vector<16x96xbf16> to vector<16x8xbf16>
    %72 = vector.extract_strided_slice %27 {offsets = [0, 48], sizes = [16, 8], strides = [1, 1]} : vector<16x96xbf16> to vector<16x8xbf16>
    %73 = vector.extract_strided_slice %27 {offsets = [0, 80], sizes = [16, 8], strides = [1, 1]} : vector<16x96xbf16> to vector<16x8xbf16>
    "tpu.trace_start"() <{level = 10 : i32, message = "nd,md->nm"}> : () -> ()
    %cst_29 = arith.constant dense<0.000000e+00> : vector<16x16xf32>
    %74 = tpu.matmul %71, %72, %cst_29 {dimension_numbers = #tpu.dot_dimension_numbers<[1], [1], [0], [0], [0, 0, 1, 0], [], []>} : vector<16x8xbf16>, vector<16x8xbf16>, vector<16x16xf32> -> vector<16x16xf32>
    "tpu.trace_stop"() : () -> ()
    %cst_30 = arith.constant dense<0xFF800000> : vector<16xf32>
    %75 = vector.multi_reduction <maximumf>, %74, %cst_30 [1] : vector<16x16xf32> to vector<16xf32>
    %76 = vector.shape_cast %75 : vector<16xf32> to vector<16x1xf32>
    %77 = vector.broadcast %76 : vector<16x1xf32> to vector<16x16xf32>
    %78 = arith.subf %74, %77 : vector<16x16xf32>
    %79 = math.exp %78 : vector<16x16xf32>
    %cst_31 = arith.constant dense<0.000000e+00> : vector<16xf32>
    %80 = vector.multi_reduction <add>, %79, %cst_31 [1] : vector<16x16xf32> to vector<16xf32>
    %81 = vector.shape_cast %80 : vector<16xf32> to vector<16x1xf32>
    %82 = tpu.reciprocal %81 {approx = true} : vector<16x1xf32> -> vector<16x1xf32>
    %83 = vector.broadcast %82 : vector<16x1xf32> to vector<16x16xf32>
    %84 = arith.mulf %79, %83 : vector<16x16xf32>
    %85 = arith.truncf %84 : vector<16x16xf32> to vector<16x16xbf16>
    %cst_32 = arith.constant dense<0.000000e+00> : vector<16x8xf32>
    %86 = tpu.matmul %85, %73, %cst_32 {dimension_numbers = #tpu.dot_dimension_numbers<[1], [0], [0], [1], [0, 0, 1, 1], [], []>} : vector<16x16xbf16>, vector<16x8xbf16>, vector<16x8xf32> -> vector<16x8xf32>
    %87 = arith.truncf %86 : vector<16x8xf32> to vector<16x8xbf16>
    %c2 = arith.constant 2 : index
    %c0_33 = arith.constant 0 : index
    %c0_34 = arith.constant 0 : index
    %88 = vector.load %arg5[%c2, %c0_33, %c0_34] : memref<4x8x32xbf16, #tpu.memory_space<vmem>>, vector<1x8x32xbf16>
    %89 = vector.shape_cast %88 : vector<1x8x32xbf16> to vector<8x32xbf16>
    %cst_35 = arith.constant dense<0.000000e+00> : vector<16x32xf32>
    %90 = tpu.matmul %87, %89, %cst_35 {dimension_numbers = #tpu.dot_dimension_numbers<[1], [0], [0], [1], [0, 0, 1, 1], [], []>} : vector<16x8xbf16>, vector<8x32xbf16>, vector<16x32xf32> -> vector<16x32xf32>
    %91 = arith.addf %70, %90 : vector<16x32xf32>
    %92 = vector.extract_strided_slice %27 {offsets = [0, 24], sizes = [16, 8], strides = [1, 1]} : vector<16x96xbf16> to vector<16x8xbf16>
    %93 = vector.extract_strided_slice %27 {offsets = [0, 56], sizes = [16, 8], strides = [1, 1]} : vector<16x96xbf16> to vector<16x8xbf16>
    %94 = vector.extract_strided_slice %27 {offsets = [0, 88], sizes = [16, 8], strides = [1, 1]} : vector<16x96xbf16> to vector<16x8xbf16>
    "tpu.trace_start"() <{level = 10 : i32, message = "nd,md->nm"}> : () -> ()
    %cst_36 = arith.constant dense<0.000000e+00> : vector<16x16xf32>
    %95 = tpu.matmul %92, %93, %cst_36 {dimension_numbers = #tpu.dot_dimension_numbers<[1], [1], [0], [0], [0, 0, 1, 0], [], []>} : vector<16x8xbf16>, vector<16x8xbf16>, vector<16x16xf32> -> vector<16x16xf32>
    "tpu.trace_stop"() : () -> ()
    %cst_37 = arith.constant dense<0xFF800000> : vector<16xf32>
    %96 = vector.multi_reduction <maximumf>, %95, %cst_37 [1] : vector<16x16xf32> to vector<16xf32>
    %97 = vector.shape_cast %96 : vector<16xf32> to vector<16x1xf32>
    %98 = vector.broadcast %97 : vector<16x1xf32> to vector<16x16xf32>
    %99 = arith.subf %95, %98 : vector<16x16xf32>
    %100 = math.exp %99 : vector<16x16xf32>
    %cst_38 = arith.constant dense<0.000000e+00> : vector<16xf32>
    %101 = vector.multi_reduction <add>, %100, %cst_38 [1] : vector<16x16xf32> to vector<16xf32>
    %102 = vector.shape_cast %101 : vector<16xf32> to vector<16x1xf32>
    %103 = tpu.reciprocal %102 {approx = true} : vector<16x1xf32> -> vector<16x1xf32>
    %104 = vector.broadcast %103 : vector<16x1xf32> to vector<16x16xf32>
    %105 = arith.mulf %100, %104 : vector<16x16xf32>
    %106 = arith.truncf %105 : vector<16x16xf32> to vector<16x16xbf16>
    %cst_39 = arith.constant dense<0.000000e+00> : vector<16x8xf32>
    %107 = tpu.matmul %106, %94, %cst_39 {dimension_numbers = #tpu.dot_dimension_numbers<[1], [0], [0], [1], [0, 0, 1, 1], [], []>} : vector<16x16xbf16>, vector<16x8xbf16>, vector<16x8xf32> -> vector<16x8xf32>
    %108 = arith.truncf %107 : vector<16x8xf32> to vector<16x8xbf16>
    %c3 = arith.constant 3 : index
    %c0_40 = arith.constant 0 : index
    %c0_41 = arith.constant 0 : index
    %109 = vector.load %arg5[%c3, %c0_40, %c0_41] : memref<4x8x32xbf16, #tpu.memory_space<vmem>>, vector<1x8x32xbf16>
    %110 = vector.shape_cast %109 : vector<1x8x32xbf16> to vector<8x32xbf16>
    %cst_42 = arith.constant dense<0.000000e+00> : vector<16x32xf32>
    %111 = tpu.matmul %108, %110, %cst_42 {dimension_numbers = #tpu.dot_dimension_numbers<[1], [0], [0], [1], [0, 0, 1, 1], [], []>} : vector<16x8xbf16>, vector<8x32xbf16>, vector<16x32xf32> -> vector<16x32xf32>
    %112 = arith.addf %91, %111 : vector<16x32xf32>
    %113 = arith.addf %1, %112 : vector<16x32xf32>
    %c0_43 = arith.constant 0 : index
    %c0_44 = arith.constant 0 : index
    %114 = vector.load %arg6[%c0_43, %c0_44] : memref<1x32xf32, #tpu.memory_space<vmem>>, vector<1x32xf32>
    %115 = vector.broadcast %114 : vector<1x32xf32> to vector<16x32xf32>
    %116 = arith.addf %113, %115 : vector<16x32xf32>
    %c0_45 = arith.constant 0 : index
    %c0_46 = arith.constant 0 : index
    %117 = vector.load %arg7[%c0_45, %c0_46] : memref<1x32xf32, #tpu.memory_space<vmem>>, vector<1x32xf32>
    %c0_47 = arith.constant 0 : index
    %c0_48 = arith.constant 0 : index
    %118 = vector.load %arg8[%c0_47, %c0_48] : memref<1x32xf32, #tpu.memory_space<vmem>>, vector<1x32xf32>
    %cst_49 = arith.constant dense<0.000000e+00> : vector<16xf32>
    %119 = vector.multi_reduction <add>, %116, %cst_49 [1] : vector<16x32xf32> to vector<16xf32>
    %120 = vector.shape_cast %119 : vector<16xf32> to vector<16x1xf32>
    %cst_50 = arith.constant 3.200000e+01 : f32
    %121 = vector.broadcast %cst_50 : f32 to vector<16x1xf32>
    %122 = arith.divf %120, %121 : vector<16x1xf32>
    %123 = vector.broadcast %122 : vector<16x1xf32> to vector<16x32xf32>
    %124 = arith.subf %116, %123 : vector<16x32xf32>
    %125 = arith.mulf %124, %124 : vector<16x32xf32>
    %cst_51 = arith.constant dense<0.000000e+00> : vector<16xf32>
    %126 = vector.multi_reduction <add>, %125, %cst_51 [1] : vector<16x32xf32> to vector<16xf32>
    %127 = vector.shape_cast %126 : vector<16xf32> to vector<16x1xf32>
    %cst_52 = arith.constant 3.200000e+01 : f32
    %128 = vector.broadcast %cst_52 : f32 to vector<16x1xf32>
    %129 = arith.divf %127, %128 : vector<16x1xf32>
    %cst_53 = arith.constant 9.99999974E-6 : f32
    %130 = vector.broadcast %cst_53 : f32 to vector<16x1xf32>
    %131 = arith.addf %129, %130 : vector<16x1xf32>
    %132 = math.rsqrt %131 : vector<16x1xf32>
    %133 = vector.broadcast %132 : vector<16x1xf32> to vector<16x32xf32>
    %134 = arith.mulf %124, %133 : vector<16x32xf32>
    %135 = vector.broadcast %117 : vector<1x32xf32> to vector<16x32xf32>
    %136 = arith.mulf %134, %135 : vector<16x32xf32>
    %137 = vector.broadcast %118 : vector<1x32xf32> to vector<16x32xf32>
    %138 = arith.addf %136, %137 : vector<16x32xf32>
    %139 = arith.truncf %138 : vector<16x32xf32> to vector<16x32xbf16>
    %c0_54 = arith.constant 0 : index
    %c0_55 = arith.constant 0 : index
    %140 = vector.load %arg9[%c0_54, %c0_55] : memref<32x128xbf16, #tpu.memory_space<vmem>>, vector<32x128xbf16>
    %cst_56 = arith.constant dense<0.000000e+00> : vector<16x128xf32>
    %141 = tpu.matmul %139, %140, %cst_56 {dimension_numbers = #tpu.dot_dimension_numbers<[1], [0], [0], [1], [0, 0, 1, 1], [], []>} : vector<16x32xbf16>, vector<32x128xbf16>, vector<16x128xf32> -> vector<16x128xf32>
    %c0_57 = arith.constant 0 : index
    %c0_58 = arith.constant 0 : index
    %142 = vector.load %arg10[%c0_57, %c0_58] : memref<1x128xf32, #tpu.memory_space<vmem>>, vector<1x128xf32>
    %143 = vector.broadcast %142 : vector<1x128xf32> to vector<16x128xf32>
    %144 = arith.addf %141, %143 : vector<16x128xf32>
    %cst_59 = arith.constant 5.000000e-01 : f32
    %145 = vector.broadcast %cst_59 : f32 to vector<16x128xf32>
    %146 = arith.mulf %145, %144 : vector<16x128xf32>
    %cst_60 = arith.constant 0.707106769 : f32
    %147 = vector.broadcast %cst_60 : f32 to vector<16x128xf32>
    %148 = arith.mulf %144, %147 : vector<16x128xf32>
    %149 = math.erf %148 : vector<16x128xf32>
    %cst_61 = arith.constant 1.000000e+00 : f32
    %150 = vector.broadcast %cst_61 : f32 to vector<16x128xf32>
    %151 = arith.addf %150, %149 : vector<16x128xf32>
    %152 = arith.mulf %146, %151 : vector<16x128xf32>
    %153 = arith.truncf %152 : vector<16x128xf32> to vector<16x128xbf16>
    %c0_62 = arith.constant 0 : index
    %c0_63 = arith.constant 0 : index
    %154 = vector.load %arg11[%c0_62, %c0_63] : memref<128x32xbf16, #tpu.memory_space<vmem>>, vector<128x32xbf16>
    %cst_64 = arith.constant dense<0.000000e+00> : vector<16x32xf32>
    %155 = tpu.matmul %153, %154, %cst_64 {dimension_numbers = #tpu.dot_dimension_numbers<[1], [0], [0], [1], [0, 0, 1, 1], [], []>} : vector<16x128xbf16>, vector<128x32xbf16>, vector<16x32xf32> -> vector<16x32xf32>
    %c0_65 = arith.constant 0 : index
    %c0_66 = arith.constant 0 : index
    %156 = vector.load %arg12[%c0_65, %c0_66] : memref<1x32xf32, #tpu.memory_space<vmem>>, vector<1x32xf32>
    %157 = vector.broadcast %156 : vector<1x32xf32> to vector<16x32xf32>
    %158 = arith.addf %155, %157 : vector<16x32xf32>
    %159 = arith.addf %116, %158 : vector<16x32xf32>
    %c0_67 = arith.constant 0 : index
    %c0_68 = arith.constant 0 : index
    %c0_69 = arith.constant 0 : index
    %160 = vector.load %arg13[%c0_67, %c0_68, %c0_69] : memref<1x16x32xf32, #tpu.memory_space<vmem>>, vector<1x16x32xf32>
    %161 = vector.shape_cast %160 : vector<1x16x32xf32> to vector<16x32xf32>
    %162 = vector.shape_cast %159 : vector<16x32xf32> to vector<1x16x32xf32>
    tpu.vector_store %arg13[%c0_67, %c0_68, %c0_69], %162 {strides = array<i32>} : memref<1x16x32xf32, #tpu.memory_space<vmem>>, vector<1x16x32xf32>,
    return
  }
  func.func @transform_0(%arg0: i32) -> (i32, i32, i32) {
    %c0_i32 = arith.constant 0 : i32
    %c0_i32_0 = arith.constant 0 : i32
    %c0_i32_1 = arith.constant 0 : i32
    return %arg0, %c0_i32, %c0_i32_0 : i32, i32, i32
  }
  func.func @transform_1(%arg0: i32) -> (i32, i32) {
    %c0_i32 = arith.constant 0 : i32
    %c0_i32_0 = arith.constant 0 : i32
    %c0_i32_1 = arith.constant 0 : i32
    return %c0_i32, %c0_i32_0 : i32, i32
  }
  func.func @transform_2(%arg0: i32) -> (i32, i32) {
    %c0_i32 = arith.constant 0 : i32
    %c0_i32_0 = arith.constant 0 : i32
    %c0_i32_1 = arith.constant 0 : i32
    return %c0_i32, %c0_i32_0 : i32, i32
  }
  func.func @transform_3(%arg0: i32) -> (i32, i32) {
    %c0_i32 = arith.constant 0 : i32
    %c0_i32_0 = arith.constant 0 : i32
    %c0_i32_1 = arith.constant 0 : i32
    return %c0_i32, %c0_i32_0 : i32, i32
  }
  func.func @transform_4(%arg0: i32) -> (i32, i32, i32) {
    %c0_i32 = arith.constant 0 : i32
    %c0_i32_0 = arith.constant 0 : i32
    %c0_i32_1 = arith.constant 0 : i32
    %c0_i32_2 = arith.constant 0 : i32
    return %c0_i32, %c0_i32_0, %c0_i32_1 : i32, i32, i32
  }
  func.func @transform_5(%arg0: i32) -> (i32, i32) {
    %c0_i32 = arith.constant 0 : i32
    %c0_i32_0 = arith.constant 0 : i32
    %c0_i32_1 = arith.constant 0 : i32
    return %c0_i32, %c0_i32_0 : i32, i32
  }
  func.func @transform_6(%arg0: i32) -> (i32, i32) {
    %c0_i32 = arith.constant 0 : i32
    %c0_i32_0 = arith.constant 0 : i32
    %c0_i32_1 = arith.constant 0 : i32
    return %c0_i32, %c0_i32_0 : i32, i32
  }
  func.func @transform_7(%arg0: i32) -> (i32, i32) {
    %c0_i32 = arith.constant 0 : i32
    %c0_i32_0 = arith.constant 0 : i32
    %c0_i32_1 = arith.constant 0 : i32
    return %c0_i32, %c0_i32_0 : i32, i32
  }
  func.func @transform_8(%arg0: i32) -> (i32, i32) {
    %c0_i32 = arith.constant 0 : i32
    %c0_i32_0 = arith.constant 0 : i32
    %c0_i32_1 = arith.constant 0 : i32
    return %c0_i32, %c0_i32_0 : i32, i32
  }
  func.func @transform_9(%arg0: i32) -> (i32, i32) {
    %c0_i32 = arith.constant 0 : i32
    %c0_i32_0 = arith.constant 0 : i32
    %c0_i32_1 = arith.constant 0 : i32
    return %c0_i32, %c0_i32_0 : i32, i32
  }
  func.func @transform_10(%arg0: i32) -> (i32, i32) {
    %c0_i32 = arith.constant 0 : i32
    %c0_i32_0 = arith.constant 0 : i32
    %c0_i32_1 = arith.constant 0 : i32
    return %c0_i32, %c0_i32_0 : i32, i32
  }
  func.func @transform_11(%arg0: i32) -> (i32, i32) {
    %c0_i32 = arith.constant 0 : i32
    %c0_i32_0 = arith.constant 0 : i32
    %c0_i32_1 = arith.constant 0 : i32
    return %c0_i32, %c0_i32_0 : i32, i32
  }
  func.func @transform_12(%arg0: i32) -> (i32, i32, i32) {
    %c0_i32 = arith.constant 0 : i32
    %c0_i32_0 = arith.constant 0 : i32
    %c0_i32_1 = arith.constant 0 : i32
    return %arg0, %c0_i32, %c0_i32_0 : i32, i32, i32
  }
}

</mosaic_0001>

<llo_original>
// kernel: tpu_custom_call.1
$region0: #{tpu_custom_call.1}
  #allocation0 [shape = 'u32[]', space=smem, size = 0x4, offset = 0x4, fixed_abs, tag = 'smem constant byte address 0x4 - core index']
  #allocation1 [shape = 'u32[144,128]{1,0:T(1,128)}', space=vmem, size = 0x12000, scoped, tag = 'internal scratch']
  %s0 = inlined_call_operand.hbm [shape: f32[2,16,32], index: 0, kind: input, shape index: {}]
  %s1 = inlined_call_operand.hbm [shape: f32[1,32], index: 1, kind: input, shape index: {}]
  %s2 = inlined_call_operand.hbm [shape: f32[1,32], index: 2, kind: input, shape index: {}]
  %s3 = inlined_call_operand.hbm [shape: bf16[32,96], index: 3, kind: input, shape index: {}]
  %s4 = inlined_call_operand.hbm [shape: bf16[4,8,32], index: 4, kind: input, shape index: {}]
  %s5 = inlined_call_operand.hbm [shape: f32[1,32], index: 5, kind: input, shape index: {}]
  %s6 = inlined_call_operand.hbm [shape: f32[1,32], index: 6, kind: input, shape index: {}]
  %s7 = inlined_call_operand.hbm [shape: f32[1,32], index: 7, kind: input, shape index: {}]
  %s8 = inlined_call_operand.hbm [shape: bf16[32,128], index: 8, kind: input, shape index: {}]
  %s9 = inlined_call_operand.hbm [shape: f32[1,128], index: 9, kind: input, shape index: {}]
  %s10 = inlined_call_operand.hbm [shape: bf16[128,32], index: 10, kind: input, shape index: {}]
  %s11 = inlined_call_operand.hbm [shape: f32[1,32], index: 11, kind: input, shape index: {}]
  %s12 = inlined_call_operand.hbm [shape: f32[2,16,32], index: 12, kind: output, shape index: {}]
  %s13 = sld [smem:[#allocation0]]
  $region129: #{tpu_custom_call.1} parent=0
    _
  %s15 = ssub.s32 1, %s13
  %s16 = scalar_select 0, %s15, %s13
  $region1: #{tpu_custom_call.1} parent=0
    #allocation2 [shape = 'u8[16384]{0}', space=vmem, size = 0x4000, scoped, tag = 'input window, operand 0']
    #allocation3 [shape = 's32[2]{0}', space=sflag, size = 0x8, scoped, tag = 'scoped memory for tpu_custom_call.1']
    #allocation4 [shape = 's32[2]{0}', space=sflag, size = 0x8, scoped, tag = 'scoped memory for tpu_custom_call.1']
    #allocation5 [shape = 'u8[512]{0}', space=vmem, size = 0x400, scoped, tag = 'input window, operand 1, single buffered']
    #allocation6 [shape = 's32[1]{0}', space=sflag, size = 0x4, scoped, tag = 'scoped memory for tpu_custom_call.1']
    #allocation7 [shape = 'u8[512]{0}', space=vmem, size = 0x400, scoped, tag = 'input window, operand 2, single buffered']
    #allocation8 [shape = 'u8[8192]{0}', space=vmem, size = 0x2000, scoped, tag = 'input window, operand 3, single buffered']
    #allocation9 [shape = 's32[1]{0}', space=sflag, size = 0x4, scoped, tag = 'scoped memory for tpu_custom_call.1']
    #allocation10 [shape = 'u8[8192]{0}', space=vmem, size = 0x2000, scoped, tag = 'input window, operand 4, single buffered']
    #allocation11 [shape = 'u8[512]{0}', space=vmem, size = 0x400, scoped, tag = 'input window, operand 5, single buffered']
    #allocation12 [shape = 's32[1]{0}', space=sflag, size = 0x4, scoped, tag = 'scoped memory for tpu_custom_call.1']
    #allocation13 [shape = 'u8[512]{0}', space=vmem, size = 0x400, scoped, tag = 'input window, operand 6, single buffered']
    #allocation14 [shape = 'u8[512]{0}', space=vmem, size = 0x400, scoped, tag = 'input window, operand 7, single buffered']
    #allocation15 [shape = 's32[1]{0}', space=sflag, size = 0x4, scoped, tag = 'scoped memory for tpu_custom_call.1']
    #allocation16 [shape = 'u8[8192]{0}', space=vmem, size = 0x2000, scoped, tag = 'input window, operand 8, single buffered']
    #allocation17 [shape = 'u8[512]{0}', space=vmem, size = 0x400, scoped, tag = 'input window, operand 9, single buffered']
    #allocation18 [shape = 's32[1]{0}', space=sflag, size = 0x4, scoped, tag = 'scoped memory for tpu_custom_call.1']
    #allocation19 [shape = 'u8[32768]{0}', space=vmem, size = 0x8000, scoped, tag = 'input window, operand 10, single buffered']
    #allocation20 [shape = 'u8[512]{0}', space=vmem, size = 0x400, scoped, tag = 'input window, operand 11, single buffered']
    #allocation21 [shape = 's32[1]{0}', space=sflag, size = 0x4, scoped, tag = 'scoped memory for tpu_custom_call.1']
    #allocation22 [shape = 'u8[16384]{0}', space=vmem, size = 0x4000, scoped, tag = 'output window, operand 0']
    %17 = vsyncpa [#allocation3], 0
    %s18 = scalar_lea.sflag [#allocation3], 1
    %19 = vsyncpa %s18, 0
    %20 = vsyncpa [#allocation6], 0
    %21 = vsyncpa [#allocation9], 0
    %22 = vsyncpa [#allocation12], 0
    %23 = vsyncpa [#allocation15], 0
    %24 = vsyncpa [#allocation18], 0
    %25 = vsyncpa [#allocation21], 0
    %26 = vsyncpa [#allocation4], 0
    %s27 = scalar_lea.sflag [#allocation4], 1
    %28 = vsyncpa %s27, 0
    loop: start=0, step=1, limit=4
    $region2: #{tpu_custom_call.1} parent=1 // loop_pre_header
      _
    $region3: #{tpu_custom_call.1} parent=1 // loop_header
      %s30 = sphi 0, %s34
      %p31 = scmp.ge.s32.totalorder %s30, 4
      %s40 = sphi 0, %s42
      %s43 = sphi 0, %s40
      %s44 = sphi 0, %s43
      %s60 = sphi 0, %s44
      %s64 = sphi 0, %s64
      %s66 = sphi 0, %s64
      %s67 = sphi 0, %s66
      %s81 = sphi 0, %s67
      %s85 = sphi 0, %s85
      %s87 = sphi 0, %s85
      %s88 = sphi 0, %s87
      %s102 = sphi 0, %s88
      %s106 = sphi 0, %s106
      %s108 = sphi 0, %s106
      %s109 = sphi 0, %s108
      %s123 = sphi 0, %s109
      %s127 = sphi 0, %s127
      %s129 = sphi 0, %s127
      %s130 = sphi 0, %s129
      %s144 = sphi 0, %s130
      %s148 = sphi 0, %s148
      %s150 = sphi 0, %s148
      %s151 = sphi 0, %s150
      %s165 = sphi 0, %s151
      %s169 = sphi 0, %s169
      %s171 = sphi 0, %s169
      %s172 = sphi 0, %s171
      %s186 = sphi 0, %s172
      %s190 = sphi 0, %s190
      %s192 = sphi 0, %s190
      %s193 = sphi 0, %s192
      %s207 = sphi 0, %s193
      %s211 = sphi 0, %s211
      %s213 = sphi 0, %s211
      %s214 = sphi 0, %s213
      %s228 = sphi 0, %s214
      %s232 = sphi 0, %s232
      %s234 = sphi 0, %s232
      %s235 = sphi 0, %s234
      %s249 = sphi 0, %s235
      %s253 = sphi 0, %s253
      %s255 = sphi 0, %s253
      %s256 = sphi 0, %s255
      %s270 = sphi 0, %s256
      %s274 = sphi 0, %s274
      %s276 = sphi 0, %s274
      %s277 = sphi 0, %s276
      %s291 = sphi 0, %s277
      %s297 = sphi 0, %s299
      %s300 = sphi 0, %s297
      %s301 = sphi 0, %s300
      %s317 = sphi 0, %s301
    $region4: #{tpu_custom_call.1} parent=1 // loop_header_branch
      %33 = sbr.rel (%p31) target = $region8
    $region5: #{tpu_custom_call.1} parent=1 // loop_body
      %s35 = ssub.s32 %s30, 1
      %s36 = ssub.s32 %s30, 2
      %s37 = sadd.s32 %s30, 1
      %s38 = ssub.s32 %s30, %s37
      %p39 = scmp.eq.s32.totalorder %s38, 0
      %s41 = sadd.s32 %s40, 1
      %s42 = scalar_select %p39, %s40, %s41
      %p45 = pneg %p39
      %p46 = scmp.eq.s32.totalorder %s30, 1
      %p47 = por %p45, %p46
      %p48 = scmp.ne.s32.totalorder %s40, %s43
      %p49 = scmp.eq.s32.totalorder %s30, 0
      %p50 = por %p48, %p49
      %p51 = scmp.ne.s32.totalorder %s40, %s43
      %p52 = scmp.eq.s32.totalorder %s35, 1
      %p53 = por %p51, %p52
      %p54 = scmp.ne.s32.totalorder %s43, %s44
      %p55 = scmp.eq.s32.totalorder %s35, 0
      %p56 = por %p54, %p55
      %p57 = scmp.ne.s32.totalorder %s43, %s44
      %p58 = scmp.eq.s32.totalorder %s36, 1
      %p59 = por %p57, %p58
      %p61 = scmp.ne.s32.totalorder %s44, %s60
      %p62 = scmp.eq.s32.totalorder %s36, 0
      %p63 = por %p61, %p62
      %s65 = sadd.s32 %s64, 1
      %p68 = scmp.eq.s32.totalorder %s30, 1
      %p69 = scmp.ne.s32.totalorder %s64, %s66
      %p70 = scmp.eq.s32.totalorder %s30, 0
      %p71 = por %p69, %p70
      %p72 = scmp.ne.s32.totalorder %s64, %s66
      %p73 = scmp.eq.s32.totalorder %s35, 1
      %p74 = por %p72, %p73
      %p75 = scmp.ne.s32.totalorder %s66, %s67
      %p76 = scmp.eq.s32.totalorder %s35, 0
      %p77 = por %p75, %p76
      %p78 = scmp.ne.s32.totalorder %s66, %s67
      %p79 = scmp.eq.s32.totalorder %s36, 1
      %p80 = por %p78, %p79
      %p82 = scmp.ne.s32.totalorder %s67, %s81
      %p83 = scmp.eq.s32.totalorder %s36, 0
      %p84 = por %p82, %p83
      %s86 = sadd.s32 %s85, 1
      %p89 = scmp.eq.s32.totalorder %s30, 1
      %p90 = scmp.ne.s32.totalorder %s85, %s87
      %p91 = scmp.eq.s32.totalorder %s30, 0
      %p92 = por %p90, %p91
      %p93 = scmp.ne.s32.totalorder %s85, %s87
      %p94 = scmp.eq.s32.totalorder %s35, 1
      %p95 = por %p93, %p94
      %p96 = scmp.ne.s32.totalorder %s87, %s88
      %p97 = scmp.eq.s32.totalorder %s35, 0
      %p98 = por %p96, %p97
      %p99 = scmp.ne.s32.totalorder %s87, %s88
      %p100 = scmp.eq.s32.totalorder %s36, 1
      %p101 = por %p99, %p100
      %p103 = scmp.ne.s32.totalorder %s88, %s102
      %p104 = scmp.eq.s32.totalorder %s36, 0
      %p105 = por %p103, %p104
      %s107 = sadd.s32 %s106, 1
      %p110 = scmp.eq.s32.totalorder %s30, 1
      %p111 = scmp.ne.s32.totalorder %s106, %s108
      %p112 = scmp.eq.s32.totalorder %s30, 0
      %p113 = por %p111, %p112
      %p114 = scmp.ne.s32.totalorder %s106, %s108
      %p115 = scmp.eq.s32.totalorder %s35, 1
      %p116 = por %p114, %p115
      %p117 = scmp.ne.s32.totalorder %s108, %s109
      %p118 = scmp.eq.s32.totalorder %s35, 0
      %p119 = por %p117, %p118
      %p120 = scmp.ne.s32.totalorder %s108, %s109
      %p121 = scmp.eq.s32.totalorder %s36, 1
      %p122 = por %p120, %p121
      %p124 = scmp.ne.s32.totalorder %s109, %s123
      %p125 = scmp.eq.s32.totalorder %s36, 0
      %p126 = por %p124, %p125
      %s128 = sadd.s32 %s127, 1
      %p131 = scmp.eq.s32.totalorder %s30, 1
      %p132 = scmp.ne.s32.totalorder %s127, %s129
      %p133 = scmp.eq.s32.totalorder %s30, 0
      %p134 = por %p132, %p133
      %p135 = scmp.ne.s32.totalorder %s127, %s129
      %p136 = scmp.eq.s32.totalorder %s35, 1
      %p137 = por %p135, %p136
      %p138 = scmp.ne.s32.totalorder %s129, %s130
      %p139 = scmp.eq.s32.totalorder %s35, 0
      %p140 = por %p138, %p139
      %p141 = scmp.ne.s32.totalorder %s129, %s130
      %p142 = scmp.eq.s32.totalorder %s36, 1
      %p143 = por %p141, %p142
      %p145 = scmp.ne.s32.totalorder %s130, %s144
      %p146 = scmp.eq.s32.totalorder %s36, 0
      %p147 = por %p145, %p146
      %s149 = sadd.s32 %s148, 1
      %p152 = scmp.eq.s32.totalorder %s30, 1
      %p153 = scmp.ne.s32.totalorder %s148, %s150
      %p154 = scmp.eq.s32.totalorder %s30, 0
      %p155 = por %p153, %p154
      %p156 = scmp.ne.s32.totalorder %s148, %s150
      %p157 = scmp.eq.s32.totalorder %s35, 1
      %p158 = por %p156, %p157
      %p159 = scmp.ne.s32.totalorder %s150, %s151
      %p160 = scmp.eq.s32.totalorder %s35, 0
      %p161 = por %p159, %p160
      %p162 = scmp.ne.s32.totalorder %s150, %s151
      %p163 = scmp.eq.s32.totalorder %s36, 1
      %p164 = por %p162, %p163
      %p166 = scmp.ne.s32.totalorder %s151, %s165
      %p167 = scmp.eq.s32.totalorder %s36, 0
      %p168 = por %p166, %p167
      %s170 = sadd.s32 %s169, 1
      %p173 = scmp.eq.s32.totalorder %s30, 1
      %p174 = scmp.ne.s32.totalorder %s169, %s171
      %p175 = scmp.eq.s32.totalorder %s30, 0
      %p176 = por %p174, %p175
      %p177 = scmp.ne.s32.totalorder %s169, %s171
      %p178 = scmp.eq.s32.totalorder %s35, 1
      %p179 = por %p177, %p178
      %p180 = scmp.ne.s32.totalorder %s171, %s172
      %p181 = scmp.eq.s32.totalorder %s35, 0
      %p182 = por %p180, %p181
      %p183 = scmp.ne.s32.totalorder %s171, %s172
      %p184 = scmp.eq.s32.totalorder %s36, 1
      %p185 = por %p183, %p184
      %p187 = scmp.ne.s32.totalorder %s172, %s186
      %p188 = scmp.eq.s32.totalorder %s36, 0
      %p189 = por %p187, %p188
      %s191 = sadd.s32 %s190, 1
      %p194 = scmp.eq.s32.totalorder %s30, 1
      %p195 = scmp.ne.s32.totalorder %s190, %s192
      %p196 = scmp.eq.s32.totalorder %s30, 0
      %p197 = por %p195, %p196
      %p198 = scmp.ne.s32.totalorder %s190, %s192
      %p199 = scmp.eq.s32.totalorder %s35, 1
      %p200 = por %p198, %p199
      %p201 = scmp.ne.s32.totalorder %s192, %s193
      %p202 = scmp.eq.s32.totalorder %s35, 0
      %p203 = por %p201, %p202
      %p204 = scmp.ne.s32.totalorder %s192, %s193
      %p205 = scmp.eq.s32.totalorder %s36, 1
      %p206 = por %p204, %p205
      %p208 = scmp.ne.s32.totalorder %s193, %s207
      %p209 = scmp.eq.s32.totalorder %s36, 0
      %p210 = por %p208, %p209
      %s212 = sadd.s32 %s211, 1
      %p215 = scmp.eq.s32.totalorder %s30, 1
      %p216 = scmp.ne.s32.totalorder %s211, %s213
      %p217 = scmp.eq.s32.totalorder %s30, 0
      %p218 = por %p216, %p217
      %p219 = scmp.ne.s32.totalorder %s211, %s213
      %p220 = scmp.eq.s32.totalorder %s35, 1
      %p221 = por %p219, %p220
      %p222 = scmp.ne.s32.totalorder %s213, %s214
      %p223 = scmp.eq.s32.totalorder %s35, 0
      %p224 = por %p222, %p223
      %p225 = scmp.ne.s32.totalorder %s213, %s214
      %p226 = scmp.eq.s32.totalorder %s36, 1
      %p227 = por %p225, %p226
      %p229 = scmp.ne.s32.totalorder %s214, %s228
      %p230 = scmp.eq.s32.totalorder %s36, 0
      %p231 = por %p229, %p230
      %s233 = sadd.s32 %s232, 1
      %p236 = scmp.eq.s32.totalorder %s30, 1
      %p237 = scmp.ne.s32.totalorder %s232, %s234
      %p238 = scmp.eq.s32.totalorder %s30, 0
      %p239 = por %p237, %p238
      %p240 = scmp.ne.s32.totalorder %s232, %s234
      %p241 = scmp.eq.s32.totalorder %s35, 1
      %p242 = por %p240, %p241
      %p243 = scmp.ne.s32.totalorder %s234, %s235
      %p244 = scmp.eq.s32.totalorder %s35, 0
      %p245 = por %p243, %p244
      %p246 = scmp.ne.s32.totalorder %s234, %s235
      %p247 = scmp.eq.s32.totalorder %s36, 1
      %p248 = por %p246, %p247
      %p250 = scmp.ne.s32.totalorder %s235, %s249
      %p251 = scmp.eq.s32.totalorder %s36, 0
      %p252 = por %p250, %p251
      %s254 = sadd.s32 %s253, 1
      %p257 = scmp.eq.s32.totalorder %s30, 1
      %p258 = scmp.ne.s32.totalorder %s253, %s255
      %p259 = scmp.eq.s32.totalorder %s30, 0
      %p260 = por %p258, %p259
      %p261 = scmp.ne.s32.totalorder %s253, %s255
      %p262 = scmp.eq.s32.totalorder %s35, 1
      %p263 = por %p261, %p262
      %p264 = scmp.ne.s32.totalorder %s255, %s256
      %p265 = scmp.eq.s32.totalorder %s35, 0
      %p266 = por %p264, %p265
      %p267 = scmp.ne.s32.totalorder %s255, %s256
      %p268 = scmp.eq.s32.totalorder %s36, 1
      %p269 = por %p267, %p268
      %p271 = scmp.ne.s32.totalorder %s256, %s270
      %p272 = scmp.eq.s32.totalorder %s36, 0
      %p273 = por %p271, %p272
      %s275 = sadd.s32 %s274, 1
      %p278 = scmp.eq.s32.totalorder %s30, 1
      %p279 = scmp.ne.s32.totalorder %s274, %s276
      %p280 = scmp.eq.s32.totalorder %s30, 0
      %p281 = por %p279, %p280
      %p282 = scmp.ne.s32.totalorder %s274, %s276
      %p283 = scmp.eq.s32.totalorder %s35, 1
      %p284 = por %p282, %p283
      %p285 = scmp.ne.s32.totalorder %s276, %s277
      %p286 = scmp.eq.s32.totalorder %s35, 0
      %p287 = por %p285, %p286
      %p288 = scmp.ne.s32.totalorder %s276, %s277
      %p289 = scmp.eq.s32.totalorder %s36, 1
      %p290 = por %p288, %p289
      %p292 = scmp.ne.s32.totalorder %s277, %s291
      %p293 = scmp.eq.s32.totalorder %s36, 0
      %p294 = por %p292, %p293
      %s295 = ssub.s32 %s30, %s37
      %p296 = scmp.eq.s32.totalorder %s295, 0
      %s298 = sadd.s32 %s297, 1
      %s299 = scalar_select %p296, %s297, %s298
      %p302 = pneg %p296
      %p303 = scmp.eq.s32.totalorder %s30, 1
      %p304 = por %p302, %p303
      %p305 = scmp.ne.s32.totalorder %s297, %s300
      %p306 = scmp.eq.s32.totalorder %s30, 0
      %p307 = por %p305, %p306
      %p308 = scmp.ne.s32.totalorder %s297, %s300
      %p309 = scmp.eq.s32.totalorder %s35, 1
      %p310 = por %p308, %p309
      %p311 = scmp.ne.s32.totalorder %s300, %s301
      %p312 = scmp.eq.s32.totalorder %s35, 0
      %p313 = por %p311, %p312
      %p314 = scmp.ne.s32.totalorder %s300, %s301
      %p315 = scmp.eq.s32.totalorder %s36, 1
      %p316 = por %p314, %p315
      %p318 = scmp.ne.s32.totalorder %s301, %s317
      %p319 = scmp.eq.s32.totalorder %s36, 0
      %p320 = por %p318, %p319
      %p321 = scmp.le.s32.totalorder 1, %s30
      %p322 = scmp.lt.s32.totalorder %s30, 3
      %p323 = pnand %p321, %p322
      %p324 = pneg %p323
      // Predicated region
      $region9: #{tpu_custom_call.1} parent=5 // pred_check
        _
      $region10: #{tpu_custom_call.1} parent=5 // pred_check_branch
        %326 = sbr.rel (%p323) target = $region12
      $region11: #{tpu_custom_call.1} parent=5 // pred_region
        %s327 = ssub.s32 %s30, 1
        // Predicated region
        $region13: #{tpu_custom_call.1} parent=11 // pred_check
          %p328 = pneg %p77
        $region14: #{tpu_custom_call.1} parent=11 // pred_check_branch
          %330 = sbr.rel (%p328) target = $region16
        $region15: #{tpu_custom_call.1} parent=11 // pred_region
          %s332 = ssub.s32 16, 16
          %333 = vsyncadd [#allocation6], %s332
          %s335 = sshll.u32 [#allocation5], 4
          %s336 = int_to_ptr.vmem [resolvable:$true] %s335
          %338 = dma.hbm_to_vmem [thread:$0]  %s1, 16, %s336, [#allocation6]
        $region16: #{tpu_custom_call.1} parent=11 // pred_fallthru
          _
        // Predicated region
        $region17: #{tpu_custom_call.1} parent=11 // pred_check
          %p339 = pneg %p98
        $region18: #{tpu_custom_call.1} parent=11 // pred_check_branch
          %341 = sbr.rel (%p339) target = $region20
        $region19: #{tpu_custom_call.1} parent=11 // pred_region
          %s343 = ssub.s32 16, 16
          %344 = vsyncadd [#allocation6], %s343
          %s346 = sshll.u32 [#allocation7], 4
          %s347 = int_to_ptr.vmem [resolvable:$true] %s346
          %349 = dma.hbm_to_vmem [thread:$0]  %s2, 16, %s347, [#allocation6]
        $region20: #{tpu_custom_call.1} parent=11 // pred_fallthru
          _
        // Predicated region
        $region21: #{tpu_custom_call.1} parent=11 // pred_check
          %p350 = pneg %p119
        $region22: #{tpu_custom_call.1} parent=11 // pred_check_branch
          %352 = sbr.rel (%p350) target = $region24
        $region23: #{tpu_custom_call.1} parent=11 // pred_region
          %s354 = ssub.s32 256, 256
          %355 = vsyncadd [#allocation9], %s354
          %s356 = sshll.u32 [#allocation8], 4
          %s357 = int_to_ptr.vmem [resolvable:$true] %s356
          %362 = dma.hbm_to_vmem [thread:$0]  %s3, 256, %s357, [#allocation9], 64, 64, 4
        $region24: #{tpu_custom_call.1} parent=11 // pred_fallthru
          _
        // Predicated region
        $region25: #{tpu_custom_call.1} parent=11 // pred_check
          %p363 = pneg %p140
        $region26: #{tpu_custom_call.1} parent=11 // pred_check_branch
          %365 = sbr.rel (%p363) target = $region28
        $region27: #{tpu_custom_call.1} parent=11 // pred_region
          %s367 = ssub.s32 256, 256
          %368 = vsyncadd [#allocation9], %s367
          %s369 = sshll.u32 [#allocation10], 4
          %s370 = int_to_ptr.vmem [resolvable:$true] %s369
          %375 = dma.hbm_to_vmem [thread:$0]  %s4, 256, %s370, [#allocation9], 64, 64, 4
        $region28: #{tpu_custom_call.1} parent=11 // pred_fallthru
          _
        // Predicated region
        $region29: #{tpu_custom_call.1} parent=11 // pred_check
          %p376 = pneg %p161
        $region30: #{tpu_custom_call.1} parent=11 // pred_check_branch
          %378 = sbr.rel (%p376) target = $region32
        $region31: #{tpu_custom_call.1} parent=11 // pred_region
          %s380 = ssub.s32 16, 16
          %381 = vsyncadd [#allocation12], %s380
          %s383 = sshll.u32 [#allocation11], 4
          %s384 = int_to_ptr.vmem [resolvable:$true] %s383
          %386 = dma.hbm_to_vmem [thread:$0]  %s5, 16, %s384, [#allocation12]
        $region32: #{tpu_custom_call.1} parent=11 // pred_fallthru
          _
        // Predicated region
        $region33: #{tpu_custom_call.1} parent=11 // pred_check
          %p387 = pneg %p182
        $region34: #{tpu_custom_call.1} parent=11 // pred_check_branch
          %389 = sbr.rel (%p387) target = $region36
        $region35: #{tpu_custom_call.1} parent=11 // pred_region
          %s391 = ssub.s32 16, 16
          %392 = vsyncadd [#allocation12], %s391
          %s394 = sshll.u32 [#allocation13], 4
          %s395 = int_to_ptr.vmem [resolvable:$true] %s394
          %397 = dma.hbm_to_vmem [thread:$0]  %s6, 16, %s395, [#allocation12]
        $region36: #{tpu_custom_call.1} parent=11 // pred_fallthru
          _
        // Predicated region
        $region37: #{tpu_custom_call.1} parent=11 // pred_check
          %p398 = pneg %p203
        $region38: #{tpu_custom_call.1} parent=11 // pred_check_branch
          %400 = sbr.rel (%p398) target = $region40
        $region39: #{tpu_custom_call.1} parent=11 // pred_region
          %s402 = ssub.s32 16, 16
          %403 = vsyncadd [#allocation15], %s402
          %s405 = sshll.u32 [#allocation14], 4
          %s406 = int_to_ptr.vmem [resolvable:$true] %s405
          %408 = dma.hbm_to_vmem [thread:$0]  %s7, 16, %s406, [#allocation15]
        $region40: #{tpu_custom_call.1} parent=11 // pred_fallthru
          _
        // Predicated region
        $region41: #{tpu_custom_call.1} parent=11 // pred_check
          %p409 = pneg %p224
        $region42: #{tpu_custom_call.1} parent=11 // pred_check_branch
          %411 = sbr.rel (%p409) target = $region44
        $region43: #{tpu_custom_call.1} parent=11 // pred_region
          %s413 = ssub.s32 256, 256
          %414 = vsyncadd [#allocation15], %s413
          %s415 = sshll.u32 [#allocation16], 4
          %s416 = int_to_ptr.vmem [resolvable:$true] %s415
          %421 = dma.hbm_to_vmem [thread:$0]  %s8, 256, %s416, [#allocation15], 64, 64, 4
        $region44: #{tpu_custom_call.1} parent=11 // pred_fallthru
          _
        // Predicated region
        $region45: #{tpu_custom_call.1} parent=11 // pred_check
          %p422 = pneg %p245
        $region46: #{tpu_custom_call.1} parent=11 // pred_check_branch
          %424 = sbr.rel (%p422) target = $region48
        $region47: #{tpu_custom_call.1} parent=11 // pred_region
          %s426 = ssub.s32 16, 16
          %427 = vsyncadd [#allocation18], %s426
          %s429 = sshll.u32 [#allocation17], 4
          %s430 = int_to_ptr.vmem [resolvable:$true] %s429
          %432 = dma.hbm_to_vmem [thread:$0]  %s9, 16, %s430, [#allocation18]
        $region48: #{tpu_custom_call.1} parent=11 // pred_fallthru
          _
        // Predicated region
        $region49: #{tpu_custom_call.1} parent=11 // pred_check
          %p433 = pneg %p266
        $region50: #{tpu_custom_call.1} parent=11 // pred_check_branch
          %435 = sbr.rel (%p433) target = $region52
        $region51: #{tpu_custom_call.1} parent=11 // pred_region
          %s437 = ssub.s32 1024, 1024
          %438 = vsyncadd [#allocation18], %s437
          %s439 = sshll.u32 [#allocation19], 4
          %s440 = int_to_ptr.vmem [resolvable:$true] %s439
          %445 = dma.hbm_to_vmem [thread:$0]  %s10, 1024, %s440, [#allocation18], 64, 64, 4
        $region52: #{tpu_custom_call.1} parent=11 // pred_fallthru
          _
        // Predicated region
        $region53: #{tpu_custom_call.1} parent=11 // pred_check
          %p446 = pneg %p287
        $region54: #{tpu_custom_call.1} parent=11 // pred_check_branch
          %448 = sbr.rel (%p446) target = $region56
        $region55: #{tpu_custom_call.1} parent=11 // pred_region
          %s450 = ssub.s32 16, 16
          %451 = vsyncadd [#allocation21], %s450
          %s453 = sshll.u32 [#allocation20], 4
          %s454 = int_to_ptr.vmem [resolvable:$true] %s453
          %456 = dma.hbm_to_vmem [thread:$0]  %s11, 16, %s454, [#allocation21]
        $region56: #{tpu_custom_call.1} parent=11 // pred_fallthru
          _
      $region12: #{tpu_custom_call.1} parent=5 // pred_fallthru
        _
      %p457 = scmp.lt.s32.totalorder %s30, 2
      // Predicated region
      $region57: #{tpu_custom_call.1} parent=5 // pred_check
        %p458 = pneg %p457
      $region58: #{tpu_custom_call.1} parent=5 // pred_check_branch
        %460 = sbr.rel (%p458) target = $region60
      $region59: #{tpu_custom_call.1} parent=5 // pred_region
        // Predicated region
        $region61: #{tpu_custom_call.1} parent=59 // pred_check
          %p461 = pneg %p50
        $region62: #{tpu_custom_call.1} parent=59 // pred_check_branch
          %463 = sbr.rel (%p461) target = $region64
        $region63: #{tpu_custom_call.1} parent=59 // pred_region
          %s464 = sand.u32 %s40, 1
          %s465 = scalar_lea.sflag [#allocation3], %s464
          %s466 = sand.u32 %s40, 1
          %s467 = smul.addr %s466, 16
          %s468 = scalar_lea.vmem [#allocation2], %s467
          %s470 = ssub.s32 256, 256
          %471 = vsyncadd %s465, %s470
          %s472 = smul.addr %s30, 2
          %s473 = smul.addr %s472, 128
          %s474 = scalar_lea.hbm %s0, %s473
          %s475 = sshll.u32 %s468, 4
          %s476 = int_to_ptr.vmem [resolvable:$true] %s475
          %481 = dma.hbm_to_vmem [thread:$0]  %s474, 256, %s476, %s465, 128, 128, 8
        $region64: #{tpu_custom_call.1} parent=59 // pred_fallthru
          _
      $region60: #{tpu_custom_call.1} parent=5 // pred_fallthru
        _
      %p482 = scmp.le.s32.totalorder 1, %s30
      %p483 = scmp.lt.s32.totalorder %s30, 3
      %p484 = pnand %p482, %p483
      %p485 = pneg %p484
      // Predicated region
      $region65: #{tpu_custom_call.1} parent=5 // pred_check
        _
      $region66: #{tpu_custom_call.1} parent=5 // pred_check_branch
        %487 = sbr.rel (%p484) target = $region68
      $region67: #{tpu_custom_call.1} parent=5 // pred_region
        %s488 = ssub.s32 %s30, 1
        %s489 = sand.u32 %s43, 1
        %s490 = scalar_lea.sflag [#allocation3], %s489
        %s491 = sand.u32 %s43, 1
        %s492 = smul.addr %s491, 16
        %s493 = scalar_lea.vmem [#allocation2], %s492
        // Predicated region
        $region69: #{tpu_custom_call.1} parent=67 // pred_check
          %p494 = pneg %p56
        $region70: #{tpu_custom_call.1} parent=67 // pred_check_branch
          %496 = sbr.rel (%p494) target = $region72
        $region71: #{tpu_custom_call.1} parent=67 // pred_region
          %497 = dma.done %s490, 256
        $region72: #{tpu_custom_call.1} parent=67 // pred_fallthru
          _
        // Predicated region
        $region73: #{tpu_custom_call.1} parent=67 // pred_check
          %p498 = pneg %p77
        $region74: #{tpu_custom_call.1} parent=67 // pred_check_branch
          %500 = sbr.rel (%p498) target = $region76
        $region75: #{tpu_custom_call.1} parent=67 // pred_region
          %501 = dma.done [#allocation6], 16
        $region76: #{tpu_custom_call.1} parent=67 // pred_fallthru
          _
        // Predicated region
        $region77: #{tpu_custom_call.1} parent=67 // pred_check
          %p502 = pneg %p98
        $region78: #{tpu_custom_call.1} parent=67 // pred_check_branch
          %504 = sbr.rel (%p502) target = $region80
        $region79: #{tpu_custom_call.1} parent=67 // pred_region
          %505 = dma.done [#allocation6], 16
        $region80: #{tpu_custom_call.1} parent=67 // pred_fallthru
          _
        // Predicated region
        $region81: #{tpu_custom_call.1} parent=67 // pred_check
          %p506 = pneg %p119
        $region82: #{tpu_custom_call.1} parent=67 // pred_check_branch
          %508 = sbr.rel (%p506) target = $region84
        $region83: #{tpu_custom_call.1} parent=67 // pred_region
          %509 = dma.done [#allocation9], 256
        $region84: #{tpu_custom_call.1} parent=67 // pred_fallthru
          _
        // Predicated region
        $region85: #{tpu_custom_call.1} parent=67 // pred_check
          %p510 = pneg %p140
        $region86: #{tpu_custom_call.1} parent=67 // pred_check_branch
          %512 = sbr.rel (%p510) target = $region88
        $region87: #{tpu_custom_call.1} parent=67 // pred_region
          %513 = dma.done [#allocation9], 256
        $region88: #{tpu_custom_call.1} parent=67 // pred_fallthru
          _
        // Predicated region
        $region89: #{tpu_custom_call.1} parent=67 // pred_check
          %p514 = pneg %p161
        $region90: #{tpu_custom_call.1} parent=67 // pred_check_branch
          %516 = sbr.rel (%p514) target = $region92
        $region91: #{tpu_custom_call.1} parent=67 // pred_region
          %517 = dma.done [#allocation12], 16
        $region92: #{tpu_custom_call.1} parent=67 // pred_fallthru
          _
        // Predicated region
        $region93: #{tpu_custom_call.1} parent=67 // pred_check
          %p518 = pneg %p182
        $region94: #{tpu_custom_call.1} parent=67 // pred_check_branch
          %520 = sbr.rel (%p518) target = $region96
        $region95: #{tpu_custom_call.1} parent=67 // pred_region
          %521 = dma.done [#allocation12], 16
        $region96: #{tpu_custom_call.1} parent=67 // pred_fallthru
          _
        // Predicated region
        $region97: #{tpu_custom_call.1} parent=67 // pred_check
          %p522 = pneg %p203
        $region98: #{tpu_custom_call.1} parent=67 // pred_check_branch
          %524 = sbr.rel (%p522) target = $region100
        $region99: #{tpu_custom_call.1} parent=67 // pred_region
          %525 = dma.done [#allocation15], 16
        $region100: #{tpu_custom_call.1} parent=67 // pred_fallthru
          _
        // Predicated region
        $region101: #{tpu_custom_call.1} parent=67 // pred_check
          %p526 = pneg %p224
        $region102: #{tpu_custom_call.1} parent=67 // pred_check_branch
          %528 = sbr.rel (%p526) target = $region104
        $region103: #{tpu_custom_call.1} parent=67 // pred_region
          %529 = dma.done [#allocation15], 256
        $region104: #{tpu_custom_call.1} parent=67 // pred_fallthru
          _
        // Predicated region
        $region105: #{tpu_custom_call.1} parent=67 // pred_check
          %p530 = pneg %p245
        $region106: #{tpu_custom_call.1} parent=67 // pred_check_branch
          %532 = sbr.rel (%p530) target = $region108
        $region107: #{tpu_custom_call.1} parent=67 // pred_region
          %533 = dma.done [#allocation18], 16
        $region108: #{tpu_custom_call.1} parent=67 // pred_fallthru
          _
        // Predicated region
        $region109: #{tpu_custom_call.1} parent=67 // pred_check
          %p534 = pneg %p266
        $region110: #{tpu_custom_call.1} parent=67 // pred_check_branch
          %536 = sbr.rel (%p534) target = $region112
        $region111: #{tpu_custom_call.1} parent=67 // pred_region
          %537 = dma.done [#allocation18], 1024
        $region112: #{tpu_custom_call.1} parent=67 // pred_fallthru
          _
        // Predicated region
        $region113: #{tpu_custom_call.1} parent=67 // pred_check
          %p538 = pneg %p287
        $region114: #{tpu_custom_call.1} parent=67 // pred_check_branch
          %540 = sbr.rel (%p538) target = $region116
        $region115: #{tpu_custom_call.1} parent=67 // pred_region
          %541 = dma.done [#allocation21], 16
        $region116: #{tpu_custom_call.1} parent=67 // pred_fallthru
          _
        %s542 = sand.u32 %s43, 1
        %s543 = scalar_lea.sflag [#allocation3], %s542
        %s544 = sand.u32 %s43, 1
        %s545 = smul.addr %s544, 16
        %s546 = scalar_lea.vmem [#allocation2], %s545
        %p547 = pneg %p56
        %p548 = pneg %p53
        %p549 = pneg %p77
        %p550 = pneg %p74
        %p551 = pneg %p98
        %p552 = pneg %p95
        %p553 = pneg %p119
        %p554 = pneg %p116
        %p555 = pneg %p140
        %p556 = pneg %p137
        %p557 = pneg %p161
        %p558 = pneg %p158
        %p559 = pneg %p182
        %p560 = pneg %p179
        %p561 = pneg %p203
        %p562 = pneg %p200
        %p563 = pneg %p224
        %p564 = pneg %p221
        %p565 = pneg %p245
        %p566 = pneg %p242
        %p567 = pneg %p266
        %p568 = pneg %p263
        %p569 = pneg %p287
        %p570 = pneg %p284
        %p571 = pneg %p313
        %p572 = pneg %p310
        %s573 = sand.u32 %s300, 1
        %s574 = scalar_lea.sflag [#allocation4], %s573
        %s575 = sand.u32 %s300, 1
        %s576 = smul.addr %s575, 16
        %s577 = scalar_lea.vmem [#allocation22], %s576
        %v579 = vld [vmem:[%s493] sm:$0xff]
        %v580 = vld [vmem:[%s493 + $0x8] sm:$0xff]
        %v581 = vld [vmem:[#allocation5] sm:$0x1]
        %v582 = vld [vmem:[#allocation7] sm:$0x1]
        %vm583 = vcmask 261120
        %v584 = vsel %vm583, %v579, 0.0
        %585 = vadd.xlane.f32.xlu0 %v584
        %v586 = vpop.xlane.xlu0 %585
        %v587 = vsel %vm583, %v580, 0.0
        %588 = vadd.xlane.f32.xlu0 %v587
        %v589 = vpop.xlane.xlu0 %588
        %v590 = vrcp.pop 32.0
        %v591 = vmul.f32 %v586, %v590
        %v592 = vmul.f32 %v589, %v590
        %v593 = vsub.f32 %v579, %v591
        %v594 = vsub.f32 %v580, %v592
        %v595 = vmul.f32 %v593, %v593
        %v596 = vmul.f32 %v594, %v594
        %v597 = vsel %vm583, %v595, 0.0
        %598 = vadd.xlane.f32.xlu0 %v597
        %v599 = vpop.xlane.xlu0 %598
        %v600 = vsel %vm583, %v596, 0.0
        %601 = vadd.xlane.f32.xlu0 %v600
        %v602 = vpop.xlane.xlu0 %601
        %v603 = vmul.f32 %v599, %v590
        %v604 = vmul.f32 %v602, %v590
        %v605 = vadd.f32 %v603, 1e-05
        %v606 = vadd.f32 %v604, 1e-05
        %v607 = vrsqrt.pop %v605
        %v608 = vrsqrt.pop %v606
        %v609 = vmul.f32 %v593, %v607
        %v610 = vmul.f32 %v594, %v608
        %v612 = vlaneseq
        %v613 = vshrl.u32 %v612, 7
        %v614 = vsub.s32 0, %v613
        %v615 = vrot.slane %v581, %v614
        %v617 = vmul.f32 %v609, %v615
        %v618 = vmul.f32 %v610, %v615
        %v620 = vlaneseq
        %v621 = vshrl.u32 %v620, 7
        %v622 = vsub.s32 0, %v621
        %v623 = vrot.slane %v582, %v622
        %v625 = vadd.f32 %v617, %v623
        %v626 = vadd.f32 %v618, %v623
        %v627 = vpack.c.bf16 %v626, %v625
        %v628 = vld [vmem:[#allocation8] sm:$0xf]
        %v629 = vld [vmem:[#allocation8 + $0x4] sm:$0xf]
        %v630 = vld [vmem:[#allocation8 + $0x8] sm:$0xf]
        %v631 = vld [vmem:[#allocation8 + $0xc] sm:$0xf]
        %v636 = vunpack.c.l.b16 %v628
        %v637 = vunpack.c.l.b16 %v629
        %v638 = vunpack.c.l.b16 %v630
        %v639 = vunpack.c.l.b16 %v631
        %v640 = vpack.c.b16 %v637, %v636
        %v641 = vpack.c.b16 %v639, %v638
        %v645 = vsel %vm583, %v627, 0
        %647 = vmatprep.subr.bf16.mxu0 0
        %648 = vmatpush1.bf16.msra.mxu0 %v640
        %649 = vmatprep.subr.bf16.mxu0 0
        %650 = vmatpush1.bf16.msra.mxu0 %v641
        %651 = vmatprep.subr.bf16.mxu0 0
        %652 = vmatpush1.bf16.msra.mxu0 0
        %653 = vmatprep.subr.bf16.mxu0 0
        %654 = vmatpush1.bf16.msra.mxu0 0
        %655 = vmatprep.subr.bf16.mxu0 0
        %656 = vmatpush1.bf16.msra.mxu0 0
        %657 = vmatprep.subr.bf16.mxu0 0
        %658 = vmatpush1.bf16.msra.mxu0 0
        %659 = vmatprep.subr.bf16.mxu0 0
        %660 = vmatpush1.bf16.msra.mxu0 0
        %661 = vmatprep.subr.bf16.mxu0 0
        %662 = vmatpush1.bf16.msra.mxu0 0
        %663 = vmatprep.subr.bf16.mxu0 0
        %664 = vmatpush1.bf16.msra.mxu0 0
        %665 = vmatprep.subr.bf16.mxu0 0
        %666 = vmatpush1.bf16.msra.mxu0 0
        %667 = vmatprep.subr.bf16.mxu0 0
        %668 = vmatpush1.bf16.msra.mxu0 0
        %669 = vmatprep.subr.bf16.mxu0 0
        %670 = vmatpush1.bf16.msra.mxu0 0
        %671 = vmatprep.subr.bf16.mxu0 0
        %672 = vmatpush1.bf16.msra.mxu0 0
        %673 = vmatprep.subr.bf16.mxu0 0
        %674 = vmatpush1.bf16.msra.mxu0 0
        %675 = vmatprep.subr.bf16.mxu0 0
        %676 = vmatpush1.bf16.msra.mxu0 0
        %677 = vmatprep.subr.bf16.mxu0 0
        %678 = vmatpush1.bf16.msra.mxu0 0
        %679 = vmatprep.mubr.bf16.mxu0 0
        %680 = vmatmul.mubr.bf16.gmra.mrb[0].mxu0 %v645
        %v681 = vpop.f32.mrb[0].mxu0
        %v682 = vadd.f32 0.0, %v681
        %v683 = vpop.f32.mrb[0].mxu0
        %v684 = vpop.f32.mrb[0].mxu0
        %v685 = vadd.f32 0.0, %v684
        %v686 = vpop.f32.mrb[0].mxu0
        %687 = vdwg.mxu0
        %v688 = vpack.c.bf16 %v685, %v682
        %690 = vrot.lane.b32.xlu0 %v688, 96
        %v691 = vpop.permute.xlu0 %690
        %vm692 = vcmask 64512
        %v694 = vsel %vm692, %v688, 0
        %v697 = vsel %vm692, %v691, 0
        %699 = vmatprep.subr.bf16.mxu0 0
        %700 = vmatpush1.bf16.xpose.msra.mxu0 %v697
        %701 = vmatprep.subr.bf16.mxu0 0
        %702 = vmatpush1.bf16.xpose.msra.mxu0 0
        %703 = vmatprep.subr.bf16.mxu0 0
        %704 = vmatpush1.bf16.xpose.msra.mxu0 0
        %705 = vmatprep.subr.bf16.mxu0 0
        %706 = vmatpush1.bf16.xpose.msra.mxu0 0
        %707 = vmatprep.subr.bf16.mxu0 0
        %708 = vmatpush1.bf16.xpose.msra.mxu0 0
        %709 = vmatprep.subr.bf16.mxu0 0
        %710 = vmatpush1.bf16.xpose.msra.mxu0 0
        %711 = vmatprep.subr.bf16.mxu0 0
        %712 = vmatpush1.bf16.xpose.msra.mxu0 0
        %713 = vmatprep.subr.bf16.mxu0 0
        %714 = vmatpush1.bf16.xpose.msra.mxu0 0
        %715 = vmatprep.subr.bf16.mxu0 0
        %716 = vmatpush1.bf16.xpose.msra.mxu0 0
        %717 = vmatprep.subr.bf16.mxu0 0
        %718 = vmatpush1.bf16.xpose.msra.mxu0 0
        %719 = vmatprep.subr.bf16.mxu0 0
        %720 = vmatpush1.bf16.xpose.msra.mxu0 0
        %721 = vmatprep.subr.bf16.mxu0 0
        %722 = vmatpush1.bf16.xpose.msra.mxu0 0
        %723 = vmatprep.subr.bf16.mxu0 0
        %724 = vmatpush1.bf16.xpose.msra.mxu0 0
        %725 = vmatprep.subr.bf16.mxu0 0
        %726 = vmatpush1.bf16.xpose.msra.mxu0 0
        %727 = vmatprep.subr.bf16.mxu0 0
        %728 = vmatpush1.bf16.xpose.msra.mxu0 0
        %729 = vmatprep.subr.bf16.mxu0 0
        %730 = vmatpush1.bf16.xpose.msra.mxu0 0
        %731 = vmatprep.mubr.bf16.mxu0 0
        %732 = vmatmul.mubr.bf16.gmra.mrb[0].mxu0 %v694
        %v733 = vpop.f32.mrb[0].mxu0
        %v734 = vadd.f32 0.0, %v733
        %v735 = vpop.f32.mrb[0].mxu0
        %v736 = vpop.f32.mrb[0].mxu0
        %v737 = vadd.f32 0.0, %v736
        %v738 = vpop.f32.mrb[0].mxu0
        %739 = vdwg.mxu0
        %vm740 = vcmask 130048
        %v741 = vsel %vm740, %v734, -inf
        %742 = vmax.xlane.f32.xlu0 %v741
        %v743 = vpop.xlane.xlu0 %742
        %v744 = vsel %vm740, %v737, -inf
        %745 = vmax.xlane.f32.xlu0 %v744
        %v746 = vpop.xlane.xlu0 %745
        %v747 = vsub.f32 %v734, %v743
        %v748 = vsub.f32 %v737, %v746
        %v749 = vmul.f32 %v747, 1.442695
        %v750 = vpow.pop %v749
        %v751 = vmul.f32 %v748, 1.442695
        %v752 = vpow.pop %v751
        %v753 = vsel %vm740, %v750, 0.0
        %754 = vadd.xlane.f32.xlu0 %v753
        %v755 = vpop.xlane.xlu0 %754
        %v756 = vsel %vm740, %v752, 0.0
        %757 = vadd.xlane.f32.xlu0 %v756
        %v758 = vpop.xlane.xlu0 %757
        %v759 = vrcp.pop %v755
        %v760 = vrcp.pop %v758
        %v761 = vmul.f32 %v750, %v759
        %v762 = vmul.f32 %v752, %v760
        %v763 = vpack.c.bf16 %v762, %v761
        %764 = vrot.lane.b32.xlu0 %v688, 64
        %v765 = vpop.permute.xlu0 %764
        %v768 = vsel %vm740, %v763, 0
        %770 = vmatprep.subr.bf16.mxu0 0
        %771 = vmatpush1.bf16.msra.mxu0 %v765
        %772 = vmatprep.subr.bf16.mxu0 0
        %773 = vmatpush1.bf16.msra.mxu0 0
        %774 = vmatprep.subr.bf16.mxu0 0
        %775 = vmatpush1.bf16.msra.mxu0 0
        %776 = vmatprep.subr.bf16.mxu0 0
        %777 = vmatpush1.bf16.msra.mxu0 0
        %778 = vmatprep.subr.bf16.mxu0 0
        %779 = vmatpush1.bf16.msra.mxu0 0
        %780 = vmatprep.subr.bf16.mxu0 0
        %781 = vmatpush1.bf16.msra.mxu0 0
        %782 = vmatprep.subr.bf16.mxu0 0
        %783 = vmatpush1.bf16.msra.mxu0 0
        %784 = vmatprep.subr.bf16.mxu0 0
        %785 = vmatpush1.bf16.msra.mxu0 0
        %786 = vmatprep.subr.bf16.mxu0 0
        %787 = vmatpush1.bf16.msra.mxu0 0
        %788 = vmatprep.subr.bf16.mxu0 0
        %789 = vmatpush1.bf16.msra.mxu0 0
        %790 = vmatprep.subr.bf16.mxu0 0
        %791 = vmatpush1.bf16.msra.mxu0 0
        %792 = vmatprep.subr.bf16.mxu0 0
        %793 = vmatpush1.bf16.msra.mxu0 0
        %794 = vmatprep.subr.bf16.mxu0 0
        %795 = vmatpush1.bf16.msra.mxu0 0
        %796 = vmatprep.subr.bf16.mxu0 0
        %797 = vmatpush1.bf16.msra.mxu0 0
        %798 = vmatprep.subr.bf16.mxu0 0
        %799 = vmatpush1.bf16.msra.mxu0 0
        %800 = vmatprep.subr.bf16.mxu0 0
        %801 = vmatpush1.bf16.msra.mxu0 0
        %802 = vmatprep.mubr.bf16.mxu0 0
        %803 = vmatmul.mubr.bf16.gmra.mrb[0].mxu0 %v768
        %v804 = vpop.f32.mrb[0].mxu0
        %v805 = vadd.f32 0.0, %v804
        %v806 = vpop.f32.mrb[0].mxu0
        %v807 = vpop.f32.mrb[0].mxu0
        %v808 = vadd.f32 0.0, %v807
        %v809 = vpop.f32.mrb[0].mxu0
        %810 = vdwg.mxu0
        %v811 = vpack.c.bf16 %v808, %v805
        %v812 = vld [vmem:[#allocation10] sm:$0xf]
        %813 = vrot.lane.b32.xlu0 %v688, 120
        %v814 = vpop.permute.xlu0 %813
        %815 = vrot.lane.b32.xlu0 %v688, 88
        %v816 = vpop.permute.xlu0 %815
        %v818 = vsel %vm692, %v814, 0
        %v821 = vsel %vm692, %v816, 0
        %823 = vmatprep.subr.bf16.mxu0 0
        %824 = vmatpush1.bf16.xpose.msra.mxu0 %v821
        %825 = vmatprep.subr.bf16.mxu0 0
        %826 = vmatpush1.bf16.xpose.msra.mxu0 0
        %827 = vmatprep.subr.bf16.mxu0 0
        %828 = vmatpush1.bf16.xpose.msra.mxu0 0
        %829 = vmatprep.subr.bf16.mxu0 0
        %830 = vmatpush1.bf16.xpose.msra.mxu0 0
        %831 = vmatprep.subr.bf16.mxu0 0
        %832 = vmatpush1.bf16.xpose.msra.mxu0 0
        %833 = vmatprep.subr.bf16.mxu0 0
        %834 = vmatpush1.bf16.xpose.msra.mxu0 0
        %835 = vmatprep.subr.bf16.mxu0 0
        %836 = vmatpush1.bf16.xpose.msra.mxu0 0
        %837 = vmatprep.subr.bf16.mxu0 0
        %838 = vmatpush1.bf16.xpose.msra.mxu0 0
        %839 = vmatprep.subr.bf16.mxu0 0
        %840 = vmatpush1.bf16.xpose.msra.mxu0 0
        %841 = vmatprep.subr.bf16.mxu0 0
        %842 = vmatpush1.bf16.xpose.msra.mxu0 0
        %843 = vmatprep.subr.bf16.mxu0 0
        %844 = vmatpush1.bf16.xpose.msra.mxu0 0
        %845 = vmatprep.subr.bf16.mxu0 0
        %846 = vmatpush1.bf16.xpose.msra.mxu0 0
        %847 = vmatprep.subr.bf16.mxu0 0
        %848 = vmatpush1.bf16.xpose.msra.mxu0 0
        %849 = vmatprep.subr.bf16.mxu0 0
        %850 = vmatpush1.bf16.xpose.msra.mxu0 0
        %851 = vmatprep.subr.bf16.mxu0 0
        %852 = vmatpush1.bf16.xpose.msra.mxu0 0
        %853 = vmatprep.subr.bf16.mxu0 0
        %854 = vmatpush1.bf16.xpose.msra.mxu0 0
        %855 = vmatprep.mubr.bf16.mxu0 0
        %856 = vmatmul.mubr.bf16.gmra.mrb[0].mxu0 %v818
        %v857 = vpop.f32.mrb[0].mxu0
        %v858 = vadd.f32 0.0, %v857
        %v859 = vpop.f32.mrb[0].mxu0
        %v860 = vpop.f32.mrb[0].mxu0
        %v861 = vadd.f32 0.0, %v860
        %v862 = vpop.f32.mrb[0].mxu0
        %863 = vdwg.mxu0
        %v864 = vsel %vm740, %v858, -inf
        %865 = vmax.xlane.f32.xlu0 %v864
        %v866 = vpop.xlane.xlu0 %865
        %v867 = vsel %vm740, %v861, -inf
        %868 = vmax.xlane.f32.xlu0 %v867
        %v869 = vpop.xlane.xlu0 %868
        %v870 = vsub.f32 %v858, %v866
        %v871 = vsub.f32 %v861, %v869
        %v872 = vmul.f32 %v870, 1.442695
        %v873 = vpow.pop %v872
        %v874 = vmul.f32 %v871, 1.442695
        %v875 = vpow.pop %v874
        %v876 = vsel %vm740, %v873, 0.0
        %877 = vadd.xlane.f32.xlu0 %v876
        %v878 = vpop.xlane.xlu0 %877
        %v879 = vsel %vm740, %v875, 0.0
        %880 = vadd.xlane.f32.xlu0 %v879
        %v881 = vpop.xlane.xlu0 %880
        %v882 = vrcp.pop %v878
        %v883 = vrcp.pop %v881
        %v884 = vmul.f32 %v873, %v882
        %v885 = vmul.f32 %v875, %v883
        %v886 = vpack.c.bf16 %v885, %v884
        %887 = vrot.lane.b32.xlu0 %v688, 56
        %v888 = vpop.permute.xlu0 %887
        %v891 = vsel %vm740, %v886, 0
        %893 = vmatprep.subr.bf16.mxu0 0
        %894 = vmatpush1.bf16.msra.mxu0 %v888
        %895 = vmatprep.subr.bf16.mxu0 0
        %896 = vmatpush1.bf16.msra.mxu0 0
        %897 = vmatprep.subr.bf16.mxu0 0
        %898 = vmatpush1.bf16.msra.mxu0 0
        %899 = vmatprep.subr.bf16.mxu0 0
        %900 = vmatpush1.bf16.msra.mxu0 0
        %901 = vmatprep.subr.bf16.mxu0 0
        %902 = vmatpush1.bf16.msra.mxu0 0
        %903 = vmatprep.subr.bf16.mxu0 0
        %904 = vmatpush1.bf16.msra.mxu0 0
        %905 = vmatprep.subr.bf16.mxu0 0
        %906 = vmatpush1.bf16.msra.mxu0 0
        %907 = vmatprep.subr.bf16.mxu0 0
        %908 = vmatpush1.bf16.msra.mxu0 0
        %909 = vmatprep.subr.bf16.mxu0 0
        %910 = vmatpush1.bf16.msra.mxu0 0
        %911 = vmatprep.subr.bf16.mxu0 0
        %912 = vmatpush1.bf16.msra.mxu0 0
        %913 = vmatprep.subr.bf16.mxu0 0
        %914 = vmatpush1.bf16.msra.mxu0 0
        %915 = vmatprep.subr.bf16.mxu0 0
        %916 = vmatpush1.bf16.msra.mxu0 0
        %917 = vmatprep.subr.bf16.mxu0 0
        %918 = vmatpush1.bf16.msra.mxu0 0
        %919 = vmatprep.subr.bf16.mxu0 0
        %920 = vmatpush1.bf16.msra.mxu0 0
        %921 = vmatprep.subr.bf16.mxu0 0
        %922 = vmatpush1.bf16.msra.mxu0 0
        %923 = vmatprep.subr.bf16.mxu0 0
        %924 = vmatpush1.bf16.msra.mxu0 0
        %925 = vmatprep.mubr.bf16.mxu0 0
        %926 = vmatmul.mubr.bf16.gmra.mrb[0].mxu0 %v891
        %v927 = vpop.f32.mrb[0].mxu0
        %v928 = vadd.f32 0.0, %v927
        %v929 = vpop.f32.mrb[0].mxu0
        %v930 = vpop.f32.mrb[0].mxu0
        %v931 = vadd.f32 0.0, %v930
        %v932 = vpop.f32.mrb[0].mxu0
        %933 = vdwg.mxu0
        %v934 = vpack.c.bf16 %v931, %v928
        %s935 = scalar_lea.vmem [#allocation10], 4
        %v936 = vld [vmem:[%s935] sm:$0xf]
        %v938 = vsel %vm692, %v934, 0
        %vm940 = vcmask 1043456
        %v942 = vsel %vm940, %v936, 0
        %944 = vmatprep.subr.bf16.mxu0 0
        %945 = vmatpush1.bf16.msra.mxu0 %v942
        %946 = vmatprep.subr.bf16.mxu0 0
        %947 = vmatpush1.bf16.msra.mxu0 0
        %948 = vmatprep.subr.bf16.mxu0 0
        %949 = vmatpush1.bf16.msra.mxu0 0
        %950 = vmatprep.subr.bf16.mxu0 0
        %951 = vmatpush1.bf16.msra.mxu0 0
        %952 = vmatprep.subr.bf16.mxu0 0
        %953 = vmatpush1.bf16.msra.mxu0 0
        %954 = vmatprep.subr.bf16.mxu0 0
        %955 = vmatpush1.bf16.msra.mxu0 0
        %956 = vmatprep.subr.bf16.mxu0 0
        %957 = vmatpush1.bf16.msra.mxu0 0
        %958 = vmatprep.subr.bf16.mxu0 0
        %959 = vmatpush1.bf16.msra.mxu0 0
        %960 = vmatprep.subr.bf16.mxu0 0
        %961 = vmatpush1.bf16.msra.mxu0 0
        %962 = vmatprep.subr.bf16.mxu0 0
        %963 = vmatpush1.bf16.msra.mxu0 0
        %964 = vmatprep.subr.bf16.mxu0 0
        %965 = vmatpush1.bf16.msra.mxu0 0
        %966 = vmatprep.subr.bf16.mxu0 0
        %967 = vmatpush1.bf16.msra.mxu0 0
        %968 = vmatprep.subr.bf16.mxu0 0
        %969 = vmatpush1.bf16.msra.mxu0 0
        %970 = vmatprep.subr.bf16.mxu0 0
        %971 = vmatpush1.bf16.msra.mxu0 0
        %972 = vmatprep.subr.bf16.mxu0 0
        %973 = vmatpush1.bf16.msra.mxu0 0
        %974 = vmatprep.subr.bf16.mxu0 0
        %975 = vmatpush1.bf16.msra.mxu0 0
        %976 = vmatprep.mubr.bf16.mxu0 0
        %977 = vmatmul.mubr.bf16.gmra.mrb[0].mxu0 %v938
        %v978 = vpop.f32.mrb[0].mxu0
        %v979 = vadd.f32 0.0, %v978
        %v980 = vpop.f32.mrb[0].mxu0
        %v981 = vpop.f32.mrb[0].mxu0
        %v982 = vadd.f32 0.0, %v981
        %v983 = vpop.f32.mrb[0].mxu0
        %984 = vdwg.mxu0
        %v986 = vsel %vm692, %v811, 0
        %v989 = vsel %vm940, %v812, 0
        %991 = vmatprep.subr.bf16.mxu0 0
        %992 = vmatpush1.bf16.msra.mxu0 %v989
        %993 = vmatprep.subr.bf16.mxu0 0
        %994 = vmatpush1.bf16.msra.mxu0 0
        %995 = vmatprep.subr.bf16.mxu0 0
        %996 = vmatpush1.bf16.msra.mxu0 0
        %997 = vmatprep.subr.bf16.mxu0 0
        %998 = vmatpush1.bf16.msra.mxu0 0
        %999 = vmatprep.subr.bf16.mxu0 0
        %1000 = vmatpush1.bf16.msra.mxu0 0
        %1001 = vmatprep.subr.bf16.mxu0 0
        %1002 = vmatpush1.bf16.msra.mxu0 0
        %1003 = vmatprep.subr.bf16.mxu0 0
        %1004 = vmatpush1.bf16.msra.mxu0 0
        %1005 = vmatprep.subr.bf16.mxu0 0
        %1006 = vmatpush1.bf16.msra.mxu0 0
        %1007 = vmatprep.subr.bf16.mxu0 0
        %1008 = vmatpush1.bf16.msra.mxu0 0
        %1009 = vmatprep.subr.bf16.mxu0 0
        %1010 = vmatpush1.bf16.msra.mxu0 0
        %1011 = vmatprep.subr.bf16.mxu0 0
        %1012 = vmatpush1.bf16.msra.mxu0 0
        %1013 = vmatprep.subr.bf16.mxu0 0
        %1014 = vmatpush1.bf16.msra.mxu0 0
        %1015 = vmatprep.subr.bf16.mxu0 0
        %1016 = vmatpush1.bf16.msra.mxu0 0
        %1017 = vmatprep.subr.bf16.mxu0 0
        %1018 = vmatpush1.bf16.msra.mxu0 0
        %1019 = vmatprep.subr.bf16.mxu0 0
        %1020 = vmatpush1.bf16.msra.mxu0 0
        %1021 = vmatprep.subr.bf16.mxu0 0
        %1022 = vmatpush1.bf16.msra.mxu0 0
        %1023 = vmatprep.mubr.bf16.mxu0 0
        %1024 = vmatmul.mubr.bf16.gmra.mrb[0].mxu0 %v986
        %v1025 = vpop.f32.mrb[0].mxu0
        %v1026 = vadd.f32 %v979, %v1025
        %v1027 = vpop.f32.mrb[0].mxu0
        %v1028 = vpop.f32.mrb[0].mxu0
        %v1029 = vadd.f32 %v982, %v1028
        %v1030 = vpop.f32.mrb[0].mxu0
        %1031 = vdwg.mxu0
        %1032 = vrot.lane.b32.xlu0 %v688, 112
        %v1033 = vpop.permute.xlu0 %1032
        %1034 = vrot.lane.b32.xlu0 %v688, 80
        %v1035 = vpop.permute.xlu0 %1034
        %v1037 = vsel %vm692, %v1033, 0
        %v1040 = vsel %vm692, %v1035, 0
        %1042 = vmatprep.subr.bf16.mxu0 0
        %1043 = vmatpush1.bf16.xpose.msra.mxu0 %v1040
        %1044 = vmatprep.subr.bf16.mxu0 0
        %1045 = vmatpush1.bf16.xpose.msra.mxu0 0
        %1046 = vmatprep.subr.bf16.mxu0 0
        %1047 = vmatpush1.bf16.xpose.msra.mxu0 0
        %1048 = vmatprep.subr.bf16.mxu0 0
        %1049 = vmatpush1.bf16.xpose.msra.mxu0 0
        %1050 = vmatprep.subr.bf16.mxu0 0
        %1051 = vmatpush1.bf16.xpose.msra.mxu0 0
        %1052 = vmatprep.subr.bf16.mxu0 0
        %1053 = vmatpush1.bf16.xpose.msra.mxu0 0
        %1054 = vmatprep.subr.bf16.mxu0 0
        %1055 = vmatpush1.bf16.xpose.msra.mxu0 0
        %1056 = vmatprep.subr.bf16.mxu0 0
        %1057 = vmatpush1.bf16.xpose.msra.mxu0 0
        %1058 = vmatprep.subr.bf16.mxu0 0
        %1059 = vmatpush1.bf16.xpose.msra.mxu0 0
        %1060 = vmatprep.subr.bf16.mxu0 0
        %1061 = vmatpush1.bf16.xpose.msra.mxu0 0
        %1062 = vmatprep.subr.bf16.mxu0 0
        %1063 = vmatpush1.bf16.xpose.msra.mxu0 0
        %1064 = vmatprep.subr.bf16.mxu0 0
        %1065 = vmatpush1.bf16.xpose.msra.mxu0 0
        %1066 = vmatprep.subr.bf16.mxu0 0
        %1067 = vmatpush1.bf16.xpose.msra.mxu0 0
        %1068 = vmatprep.subr.bf16.mxu0 0
        %1069 = vmatpush1.bf16.xpose.msra.mxu0 0
        %1070 = vmatprep.subr.bf16.mxu0 0
        %1071 = vmatpush1.bf16.xpose.msra.mxu0 0
        %1072 = vmatprep.subr.bf16.mxu0 0
        %1073 = vmatpush1.bf16.xpose.msra.mxu0 0
        %1074 = vmatprep.mubr.bf16.mxu0 0
        %1075 = vmatmul.mubr.bf16.gmra.mrb[0].mxu0 %v1037
        %v1076 = vpop.f32.mrb[0].mxu0
        %v1077 = vadd.f32 0.0, %v1076
        %v1078 = vpop.f32.mrb[0].mxu0
        %v1079 = vpop.f32.mrb[0].mxu0
        %v1080 = vadd.f32 0.0, %v1079
        %v1081 = vpop.f32.mrb[0].mxu0
        %1082 = vdwg.mxu0
        %v1083 = vsel %vm740, %v1077, -inf
        %1084 = vmax.xlane.f32.xlu0 %v1083
        %v1085 = vpop.xlane.xlu0 %1084
        %v1086 = vsel %vm740, %v1080, -inf
        %1087 = vmax.xlane.f32.xlu0 %v1086
        %v1088 = vpop.xlane.xlu0 %1087
        %v1089 = vsub.f32 %v1077, %v1085
        %v1090 = vsub.f32 %v1080, %v1088
        %v1091 = vmul.f32 %v1089, 1.442695
        %v1092 = vpow.pop %v1091
        %v1093 = vmul.f32 %v1090, 1.442695
        %v1094 = vpow.pop %v1093
        %v1095 = vsel %vm740, %v1092, 0.0
        %1096 = vadd.xlane.f32.xlu0 %v1095
        %v1097 = vpop.xlane.xlu0 %1096
        %v1098 = vsel %vm740, %v1094, 0.0
        %1099 = vadd.xlane.f32.xlu0 %v1098
        %v1100 = vpop.xlane.xlu0 %1099
        %v1101 = vrcp.pop %v1097
        %v1102 = vrcp.pop %v1100
        %v1103 = vmul.f32 %v1092, %v1101
        %v1104 = vmul.f32 %v1094, %v1102
        %v1105 = vpack.c.bf16 %v1104, %v1103
        %1106 = vrot.lane.b32.xlu0 %v688, 48
        %v1107 = vpop.permute.xlu0 %1106
        %v1110 = vsel %vm740, %v1105, 0
        %1112 = vmatprep.subr.bf16.mxu0 0
        %1113 = vmatpush1.bf16.msra.mxu0 %v1107
        %1114 = vmatprep.subr.bf16.mxu0 0
        %1115 = vmatpush1.bf16.msra.mxu0 0
        %1116 = vmatprep.subr.bf16.mxu0 0
        %1117 = vmatpush1.bf16.msra.mxu0 0
        %1118 = vmatprep.subr.bf16.mxu0 0
        %1119 = vmatpush1.bf16.msra.mxu0 0
        %1120 = vmatprep.subr.bf16.mxu0 0
        %1121 = vmatpush1.bf16.msra.mxu0 0
        %1122 = vmatprep.subr.bf16.mxu0 0
        %1123 = vmatpush1.bf16.msra.mxu0 0
        %1124 = vmatprep.subr.bf16.mxu0 0
        %1125 = vmatpush1.bf16.msra.mxu0 0
        %1126 = vmatprep.subr.bf16.mxu0 0
        %1127 = vmatpush1.bf16.msra.mxu0 0
        %1128 = vmatprep.subr.bf16.mxu0 0
        %1129 = vmatpush1.bf16.msra.mxu0 0
        %1130 = vmatprep.subr.bf16.mxu0 0
        %1131 = vmatpush1.bf16.msra.mxu0 0
        %1132 = vmatprep.subr.bf16.mxu0 0
        %1133 = vmatpush1.bf16.msra.mxu0 0
        %1134 = vmatprep.subr.bf16.mxu0 0
        %1135 = vmatpush1.bf16.msra.mxu0 0
        %1136 = vmatprep.subr.bf16.mxu0 0
        %1137 = vmatpush1.bf16.msra.mxu0 0
        %1138 = vmatprep.subr.bf16.mxu0 0
        %1139 = vmatpush1.bf16.msra.mxu0 0
        %1140 = vmatprep.subr.bf16.mxu0 0
        %1141 = vmatpush1.bf16.msra.mxu0 0
        %1142 = vmatprep.subr.bf16.mxu0 0
        %1143 = vmatpush1.bf16.msra.mxu0 0
        %1144 = vmatprep.mubr.bf16.mxu0 0
        %1145 = vmatmul.mubr.bf16.gmra.mrb[0].mxu0 %v1110
        %v1146 = vpop.f32.mrb[0].mxu0
        %v1147 = vadd.f32 0.0, %v1146
        %v1148 = vpop.f32.mrb[0].mxu0
        %v1149 = vpop.f32.mrb[0].mxu0
        %v1150 = vadd.f32 0.0, %v1149
        %v1151 = vpop.f32.mrb[0].mxu0
        %1152 = vdwg.mxu0
        %v1153 = vpack.c.bf16 %v1150, %v1147
        %s1154 = scalar_lea.vmem [#allocation10], 8
        %v1155 = vld [vmem:[%s1154] sm:$0xf]
        %v1157 = vsel %vm692, %v1153, 0
        %v1160 = vsel %vm940, %v1155, 0
        %1162 = vmatprep.subr.bf16.mxu0 0
        %1163 = vmatpush1.bf16.msra.mxu0 %v1160
        %1164 = vmatprep.subr.bf16.mxu0 0
        %1165 = vmatpush1.bf16.msra.mxu0 0
        %1166 = vmatprep.subr.bf16.mxu0 0
        %1167 = vmatpush1.bf16.msra.mxu0 0
        %1168 = vmatprep.subr.bf16.mxu0 0
        %1169 = vmatpush1.bf16.msra.mxu0 0
        %1170 = vmatprep.subr.bf16.mxu0 0
        %1171 = vmatpush1.bf16.msra.mxu0 0
        %1172 = vmatprep.subr.bf16.mxu0 0
        %1173 = vmatpush1.bf16.msra.mxu0 0
        %1174 = vmatprep.subr.bf16.mxu0 0
        %1175 = vmatpush1.bf16.msra.mxu0 0
        %1176 = vmatprep.subr.bf16.mxu0 0
        %1177 = vmatpush1.bf16.msra.mxu0 0
        %1178 = vmatprep.subr.bf16.mxu0 0
        %1179 = vmatpush1.bf16.msra.mxu0 0
        %1180 = vmatprep.subr.bf16.mxu0 0
        %1181 = vmatpush1.bf16.msra.mxu0 0
        %1182 = vmatprep.subr.bf16.mxu0 0
        %1183 = vmatpush1.bf16.msra.mxu0 0
        %1184 = vmatprep.subr.bf16.mxu0 0
        %1185 = vmatpush1.bf16.msra.mxu0 0
        %1186 = vmatprep.subr.bf16.mxu0 0
        %1187 = vmatpush1.bf16.msra.mxu0 0
        %1188 = vmatprep.subr.bf16.mxu0 0
        %1189 = vmatpush1.bf16.msra.mxu0 0
        %1190 = vmatprep.subr.bf16.mxu0 0
        %1191 = vmatpush1.bf16.msra.mxu0 0
        %1192 = vmatprep.subr.bf16.mxu0 0
        %1193 = vmatpush1.bf16.msra.mxu0 0
        %1194 = vmatprep.mubr.bf16.mxu0 0
        %1195 = vmatmul.mubr.bf16.gmra.mrb[0].mxu0 %v1157
        %v1196 = vpop.f32.mrb[0].mxu0
        %v1197 = vadd.f32 0.0, %v1196
        %v1198 = vpop.f32.mrb[0].mxu0
        %v1199 = vpop.f32.mrb[0].mxu0
        %v1200 = vadd.f32 0.0, %v1199
        %v1201 = vpop.f32.mrb[0].mxu0
        %1202 = vdwg.mxu0
        %v1203 = vadd.f32 %v1026, %v1197
        %v1204 = vadd.f32 %v1029, %v1200
        %1205 = vrot.lane.b32.xlu0 %v688, 104
        %v1206 = vpop.permute.xlu0 %1205
        %1207 = vrot.lane.b32.xlu0 %v688, 72
        %v1208 = vpop.permute.xlu0 %1207
        %v1210 = vsel %vm692, %v1206, 0
        %v1213 = vsel %vm692, %v1208, 0
        %1215 = vmatprep.subr.bf16.mxu0 0
        %1216 = vmatpush1.bf16.xpose.msra.mxu0 %v1213
        %1217 = vmatprep.subr.bf16.mxu0 0
        %1218 = vmatpush1.bf16.xpose.msra.mxu0 0
        %1219 = vmatprep.subr.bf16.mxu0 0
        %1220 = vmatpush1.bf16.xpose.msra.mxu0 0
        %1221 = vmatprep.subr.bf16.mxu0 0
        %1222 = vmatpush1.bf16.xpose.msra.mxu0 0
        %1223 = vmatprep.subr.bf16.mxu0 0
        %1224 = vmatpush1.bf16.xpose.msra.mxu0 0
        %1225 = vmatprep.subr.bf16.mxu0 0
        %1226 = vmatpush1.bf16.xpose.msra.mxu0 0
        %1227 = vmatprep.subr.bf16.mxu0 0
        %1228 = vmatpush1.bf16.xpose.msra.mxu0 0
        %1229 = vmatprep.subr.bf16.mxu0 0
        %1230 = vmatpush1.bf16.xpose.msra.mxu0 0
        %1231 = vmatprep.subr.bf16.mxu0 0
        %1232 = vmatpush1.bf16.xpose.msra.mxu0 0
        %1233 = vmatprep.subr.bf16.mxu0 0
        %1234 = vmatpush1.bf16.xpose.msra.mxu0 0
        %1235 = vmatprep.subr.bf16.mxu0 0
        %1236 = vmatpush1.bf16.xpose.msra.mxu0 0
        %1237 = vmatprep.subr.bf16.mxu0 0
        %1238 = vmatpush1.bf16.xpose.msra.mxu0 0
        %1239 = vmatprep.subr.bf16.mxu0 0
        %1240 = vmatpush1.bf16.xpose.msra.mxu0 0
        %1241 = vmatprep.subr.bf16.mxu0 0
        %1242 = vmatpush1.bf16.xpose.msra.mxu0 0
        %1243 = vmatprep.subr.bf16.mxu0 0
        %1244 = vmatpush1.bf16.xpose.msra.mxu0 0
        %1245 = vmatprep.subr.bf16.mxu0 0
        %1246 = vmatpush1.bf16.xpose.msra.mxu0 0
        %1247 = vmatprep.mubr.bf16.mxu0 0
        %1248 = vmatmul.mubr.bf16.gmra.mrb[0].mxu0 %v1210
        %v1249 = vpop.f32.mrb[0].mxu0
        %v1250 = vadd.f32 0.0, %v1249
        %v1251 = vpop.f32.mrb[0].mxu0
        %v1252 = vpop.f32.mrb[0].mxu0
        %v1253 = vadd.f32 0.0, %v1252
        %v1254 = vpop.f32.mrb[0].mxu0
        %1255 = vdwg.mxu0
        %v1256 = vsel %vm740, %v1250, -inf
        %1257 = vmax.xlane.f32.xlu0 %v1256
        %v1258 = vpop.xlane.xlu0 %1257
        %v1259 = vsel %vm740, %v1253, -inf
        %1260 = vmax.xlane.f32.xlu0 %v1259
        %v1261 = vpop.xlane.xlu0 %1260
        %v1262 = vsub.f32 %v1250, %v1258
        %v1263 = vsub.f32 %v1253, %v1261
        %v1264 = vmul.f32 %v1262, 1.442695
        %v1265 = vpow.pop %v1264
        %v1266 = vmul.f32 %v1263, 1.442695
        %v1267 = vpow.pop %v1266
        %v1268 = vsel %vm740, %v1265, 0.0
        %1269 = vadd.xlane.f32.xlu0 %v1268
        %v1270 = vpop.xlane.xlu0 %1269
        %v1271 = vsel %vm740, %v1267, 0.0
        %1272 = vadd.xlane.f32.xlu0 %v1271
        %v1273 = vpop.xlane.xlu0 %1272
        %v1274 = vrcp.pop %v1270
        %v1275 = vrcp.pop %v1273
        %v1276 = vmul.f32 %v1265, %v1274
        %v1277 = vmul.f32 %v1267, %v1275
        %v1278 = vpack.c.bf16 %v1277, %v1276
        %1279 = vrot.lane.b32.xlu0 %v688, 40
        %v1280 = vpop.permute.xlu0 %1279
        %v1283 = vsel %vm740, %v1278, 0
        %1285 = vmatprep.subr.bf16.mxu0 0
        %1286 = vmatpush1.bf16.msra.mxu0 %v1280
        %1287 = vmatprep.subr.bf16.mxu0 0
        %1288 = vmatpush1.bf16.msra.mxu0 0
        %1289 = vmatprep.subr.bf16.mxu0 0
        %1290 = vmatpush1.bf16.msra.mxu0 0
        %1291 = vmatprep.subr.bf16.mxu0 0
        %1292 = vmatpush1.bf16.msra.mxu0 0
        %1293 = vmatprep.subr.bf16.mxu0 0
        %1294 = vmatpush1.bf16.msra.mxu0 0
        %1295 = vmatprep.subr.bf16.mxu0 0
        %1296 = vmatpush1.bf16.msra.mxu0 0
        %1297 = vmatprep.subr.bf16.mxu0 0
        %1298 = vmatpush1.bf16.msra.mxu0 0
        %1299 = vmatprep.subr.bf16.mxu0 0
        %1300 = vmatpush1.bf16.msra.mxu0 0
        %1301 = vmatprep.subr.bf16.mxu0 0
        %1302 = vmatpush1.bf16.msra.mxu0 0
        %1303 = vmatprep.subr.bf16.mxu0 0
        %1304 = vmatpush1.bf16.msra.mxu0 0
        %1305 = vmatprep.subr.bf16.mxu0 0
        %1306 = vmatpush1.bf16.msra.mxu0 0
        %1307 = vmatprep.subr.bf16.mxu0 0
        %1308 = vmatpush1.bf16.msra.mxu0 0
        %1309 = vmatprep.subr.bf16.mxu0 0
        %1310 = vmatpush1.bf16.msra.mxu0 0
        %1311 = vmatprep.subr.bf16.mxu0 0
        %1312 = vmatpush1.bf16.msra.mxu0 0
        %1313 = vmatprep.subr.bf16.mxu0 0
        %1314 = vmatpush1.bf16.msra.mxu0 0
        %1315 = vmatprep.subr.bf16.mxu0 0
        %1316 = vmatpush1.bf16.msra.mxu0 0
        %1317 = vmatprep.mubr.bf16.mxu0 0
        %1318 = vmatmul.mubr.bf16.gmra.mrb[0].mxu0 %v1283
        %v1319 = vpop.f32.mrb[0].mxu0
        %v1320 = vadd.f32 0.0, %v1319
        %v1321 = vpop.f32.mrb[0].mxu0
        %v1322 = vpop.f32.mrb[0].mxu0
        %v1323 = vadd.f32 0.0, %v1322
        %v1324 = vpop.f32.mrb[0].mxu0
        %1325 = vdwg.mxu0
        %v1326 = vpack.c.bf16 %v1323, %v1320
        %s1327 = scalar_lea.vmem [#allocation10], 12
        %v1328 = vld [vmem:[%s1327] sm:$0xf]
        %v1330 = vsel %vm692, %v1326, 0
        %v1333 = vsel %vm940, %v1328, 0
        %1335 = vmatprep.subr.bf16.mxu0 0
        %1336 = vmatpush1.bf16.msra.mxu0 %v1333
        %1337 = vmatprep.subr.bf16.mxu0 0
        %1338 = vmatpush1.bf16.msra.mxu0 0
        %1339 = vmatprep.subr.bf16.mxu0 0
        %1340 = vmatpush1.bf16.msra.mxu0 0
        %1341 = vmatprep.subr.bf16.mxu0 0
        %1342 = vmatpush1.bf16.msra.mxu0 0
        %1343 = vmatprep.subr.bf16.mxu0 0
        %1344 = vmatpush1.bf16.msra.mxu0 0
        %1345 = vmatprep.subr.bf16.mxu0 0
        %1346 = vmatpush1.bf16.msra.mxu0 0
        %1347 = vmatprep.subr.bf16.mxu0 0
        %1348 = vmatpush1.bf16.msra.mxu0 0
        %1349 = vmatprep.subr.bf16.mxu0 0
        %1350 = vmatpush1.bf16.msra.mxu0 0
        %1351 = vmatprep.subr.bf16.mxu0 0
        %1352 = vmatpush1.bf16.msra.mxu0 0
        %1353 = vmatprep.subr.bf16.mxu0 0
        %1354 = vmatpush1.bf16.msra.mxu0 0
        %1355 = vmatprep.subr.bf16.mxu0 0
        %1356 = vmatpush1.bf16.msra.mxu0 0
        %1357 = vmatprep.subr.bf16.mxu0 0
        %1358 = vmatpush1.bf16.msra.mxu0 0
        %1359 = vmatprep.subr.bf16.mxu0 0
        %1360 = vmatpush1.bf16.msra.mxu0 0
        %1361 = vmatprep.subr.bf16.mxu0 0
        %1362 = vmatpush1.bf16.msra.mxu0 0
        %1363 = vmatprep.subr.bf16.mxu0 0
        %1364 = vmatpush1.bf16.msra.mxu0 0
        %1365 = vmatprep.subr.bf16.mxu0 0
        %1366 = vmatpush1.bf16.msra.mxu0 0
        %1367 = vmatprep.mubr.bf16.mxu0 0
        %1368 = vmatmul.mubr.bf16.gmra.mrb[0].mxu0 %v1330
        %v1369 = vpop.f32.mrb[0].mxu0
        %v1370 = vadd.f32 0.0, %v1369
        %v1371 = vpop.f32.mrb[0].mxu0
        %v1372 = vpop.f32.mrb[0].mxu0
        %v1373 = vadd.f32 0.0, %v1372
        %v1374 = vpop.f32.mrb[0].mxu0
        %1375 = vdwg.mxu0
        %v1376 = vadd.f32 %v1203, %v1370
        %v1377 = vadd.f32 %v1204, %v1373
        %v1378 = vadd.f32 %v579, %v1376
        %v1379 = vadd.f32 %v580, %v1377
        %v1380 = vld [vmem:[#allocation11] sm:$0x1]
        %v1382 = vlaneseq
        %v1383 = vshrl.u32 %v1382, 7
        %v1384 = vsub.s32 0, %v1383
        %v1385 = vrot.slane %v1380, %v1384
        %v1387 = vadd.f32 %v1378, %v1385
        %v1388 = vadd.f32 %v1379, %v1385
        %v1389 = vld [vmem:[#allocation13] sm:$0x1]
        %v1390 = vld [vmem:[#allocation14] sm:$0x1]
        %v1391 = vsel %vm583, %v1387, 0.0
        %1392 = vadd.xlane.f32.xlu0 %v1391
        %v1393 = vpop.xlane.xlu0 %1392
        %v1394 = vsel %vm583, %v1388, 0.0
        %1395 = vadd.xlane.f32.xlu0 %v1394
        %v1396 = vpop.xlane.xlu0 %1395
        %v1397 = vmul.f32 %v1393, %v590
        %v1398 = vmul.f32 %v1396, %v590
        %v1399 = vsub.f32 %v1387, %v1397
        %v1400 = vsub.f32 %v1388, %v1398
        %v1401 = vmul.f32 %v1399, %v1399
        %v1402 = vmul.f32 %v1400, %v1400
        %v1403 = vsel %vm583, %v1401, 0.0
        %1404 = vadd.xlane.f32.xlu0 %v1403
        %v1405 = vpop.xlane.xlu0 %1404
        %v1406 = vsel %vm583, %v1402, 0.0
        %1407 = vadd.xlane.f32.xlu0 %v1406
        %v1408 = vpop.xlane.xlu0 %1407
        %v1409 = vmul.f32 %v1405, %v590
        %v1410 = vmul.f32 %v1408, %v590
        %v1411 = vadd.f32 %v1409, 1e-05
        %v1412 = vadd.f32 %v1410, 1e-05
        %v1413 = vrsqrt.pop %v1411
        %v1414 = vrsqrt.pop %v1412
        %v1415 = vmul.f32 %v1399, %v1413
        %v1416 = vmul.f32 %v1400, %v1414
        %v1418 = vlaneseq
        %v1419 = vshrl.u32 %v1418, 7
        %v1420 = vsub.s32 0, %v1419
        %v1421 = vrot.slane %v1389, %v1420
        %v1423 = vmul.f32 %v1415, %v1421
        %v1424 = vmul.f32 %v1416, %v1421
        %v1426 = vlaneseq
        %v1427 = vshrl.u32 %v1426, 7
        %v1428 = vsub.s32 0, %v1427
        %v1429 = vrot.slane %v1390, %v1428
        %v1431 = vadd.f32 %v1423, %v1429
        %v1432 = vadd.f32 %v1424, %v1429
        %v1433 = vpack.c.bf16 %v1432, %v1431
        %v1434 = vld [vmem:[#allocation16] sm:$0xf]
        %v1435 = vld [vmem:[#allocation16 + $0x4] sm:$0xf]
        %v1436 = vld [vmem:[#allocation16 + $0x8] sm:$0xf]
        %v1437 = vld [vmem:[#allocation16 + $0xc] sm:$0xf]
        %v1438 = vld [vmem:[#allocation17] sm:$0x1]
        %v1440 = vlaneseq
        %v1441 = vshrl.u32 %v1440, 7
        %v1442 = vsub.s32 0, %v1441
        %v1443 = vrot.slane %v1438, %v1442
        %v1449 = vunpack.c.l.b16 %v1434
        %v1450 = vunpack.c.l.b16 %v1435
        %v1451 = vunpack.c.l.b16 %v1436
        %v1452 = vunpack.c.l.b16 %v1437
        %v1453 = vpack.c.b16 %v1450, %v1449
        %v1454 = vpack.c.b16 %v1452, %v1451
        %v1458 = vsel %vm583, %v1433, 0
        %1460 = vmatprep.subr.bf16.mxu0 0
        %1461 = vmatpush1.bf16.msra.mxu0 %v1453
        %1462 = vmatprep.subr.bf16.mxu0 0
        %1463 = vmatpush1.bf16.msra.mxu0 %v1454
        %1464 = vmatprep.subr.bf16.mxu0 0
        %1465 = vmatpush1.bf16.msra.mxu0 0
        %1466 = vmatprep.subr.bf16.mxu0 0
        %1467 = vmatpush1.bf16.msra.mxu0 0
        %1468 = vmatprep.subr.bf16.mxu0 0
        %1469 = vmatpush1.bf16.msra.mxu0 0
        %1470 = vmatprep.subr.bf16.mxu0 0
        %1471 = vmatpush1.bf16.msra.mxu0 0
        %1472 = vmatprep.subr.bf16.mxu0 0
        %1473 = vmatpush1.bf16.msra.mxu0 0
        %1474 = vmatprep.subr.bf16.mxu0 0
        %1475 = vmatpush1.bf16.msra.mxu0 0
        %1476 = vmatprep.subr.bf16.mxu0 0
        %1477 = vmatpush1.bf16.msra.mxu0 0
        %1478 = vmatprep.subr.bf16.mxu0 0
        %1479 = vmatpush1.bf16.msra.mxu0 0
        %1480 = vmatprep.subr.bf16.mxu0 0
        %1481 = vmatpush1.bf16.msra.mxu0 0
        %1482 = vmatprep.subr.bf16.mxu0 0
        %1483 = vmatpush1.bf16.msra.mxu0 0
        %1484 = vmatprep.subr.bf16.mxu0 0
        %1485 = vmatpush1.bf16.msra.mxu0 0
        %1486 = vmatprep.subr.bf16.mxu0 0
        %1487 = vmatpush1.bf16.msra.mxu0 0
        %1488 = vmatprep.subr.bf16.mxu0 0
        %1489 = vmatpush1.bf16.msra.mxu0 0
        %1490 = vmatprep.subr.bf16.mxu0 0
        %1491 = vmatpush1.bf16.msra.mxu0 0
        %1492 = vmatprep.mubr.bf16.mxu0 0
        %1493 = vmatmul.mubr.bf16.gmra.mrb[0].mxu0 %v1458
        %v1494 = vpop.f32.mrb[0].mxu0
        %v1495 = vadd.f32 %v1443, %v1494
        %v1496 = vpop.f32.mrb[0].mxu0
        %v1497 = vpop.f32.mrb[0].mxu0
        %v1498 = vadd.f32 %v1443, %v1497
        %v1499 = vpop.f32.mrb[0].mxu0
        %1500 = vdwg.mxu0
        %v1501 = vmul.f32 %v1495, 0.5
        %v1502 = vmul.f32 %v1498, 0.5
        %v1503 = vmul.f32 %v1495, 0.70710677
        %v1504 = vmul.f32 %v1498, 0.70710677
        %v1505 = verf.f32.pop %v1503
        %v1506 = verf.f32.pop %v1504
        %v1507 = vadd.f32 %v1505, 1.0
        %v1508 = vadd.f32 %v1506, 1.0
        %v1509 = vmul.f32 %v1501, %v1507
        %v1510 = vmul.f32 %v1502, %v1508
        %v1511 = vpack.c.bf16 %v1510, %v1509
        %v1512 = vld [vmem:[#allocation19] sm:$0xf]
        %v1513 = vld [vmem:[#allocation19 + $0x4] sm:$0xf]
        %v1514 = vld [vmem:[#allocation19 + $0x8] sm:$0xf]
        %v1515 = vld [vmem:[#allocation19 + $0xc] sm:$0xf]
        %v1516 = vld [vmem:[#allocation19 + $0x10] sm:$0xf]
        %v1517 = vld [vmem:[#allocation19 + $0x14] sm:$0xf]
        %v1518 = vld [vmem:[#allocation19 + $0x18] sm:$0xf]
        %v1519 = vld [vmem:[#allocation19 + $0x1c] sm:$0xf]
        %v1520 = vld [vmem:[#allocation19 + $0x20] sm:$0xf]
        %v1521 = vld [vmem:[#allocation19 + $0x24] sm:$0xf]
        %v1522 = vld [vmem:[#allocation19 + $0x28] sm:$0xf]
        %v1523 = vld [vmem:[#allocation19 + $0x2c] sm:$0xf]
        %v1524 = vld [vmem:[#allocation19 + $0x30] sm:$0xf]
        %v1525 = vld [vmem:[#allocation19 + $0x34] sm:$0xf]
        %v1526 = vld [vmem:[#allocation19 + $0x38] sm:$0xf]
        %v1527 = vld [vmem:[#allocation19 + $0x3c] sm:$0xf]
        %v1528 = vld [vmem:[#allocation20] sm:$0x1]
        %v1530 = vlaneseq
        %v1531 = vshrl.u32 %v1530, 7
        %v1532 = vsub.s32 0, %v1531
        %v1533 = vrot.slane %v1528, %v1532
        %v1551 = vunpack.c.l.b16 %v1512
        %v1552 = vunpack.c.l.b16 %v1513
        %v1553 = vunpack.c.l.b16 %v1514
        %v1554 = vunpack.c.l.b16 %v1515
        %v1555 = vunpack.c.l.b16 %v1516
        %v1556 = vunpack.c.l.b16 %v1517
        %v1557 = vunpack.c.l.b16 %v1518
        %v1558 = vunpack.c.l.b16 %v1519
        %v1559 = vunpack.c.l.b16 %v1520
        %v1560 = vunpack.c.l.b16 %v1521
        %v1561 = vunpack.c.l.b16 %v1522
        %v1562 = vunpack.c.l.b16 %v1523
        %v1563 = vunpack.c.l.b16 %v1524
        %v1564 = vunpack.c.l.b16 %v1525
        %v1565 = vunpack.c.l.b16 %v1526
        %v1566 = vunpack.c.l.b16 %v1527
        %v1567 = vpack.c.b16 %v1552, %v1551
        %v1568 = vpack.c.b16 %v1554, %v1553
        %v1569 = vpack.c.b16 %v1556, %v1555
        %v1570 = vpack.c.b16 %v1558, %v1557
        %v1571 = vpack.c.b16 %v1560, %v1559
        %v1572 = vpack.c.b16 %v1562, %v1561
        %v1573 = vpack.c.b16 %v1564, %v1563
        %v1574 = vpack.c.b16 %v1566, %v1565
        %1583 = vmatprep.subr.bf16.mxu0 0
        %1584 = vmatpush1.bf16.msra.mxu0 %v1567
        %1585 = vmatprep.subr.bf16.mxu0 0
        %1586 = vmatpush1.bf16.msra.mxu0 %v1568
        %1587 = vmatprep.subr.bf16.mxu0 0
        %1588 = vmatpush1.bf16.msra.mxu0 %v1569
        %1589 = vmatprep.subr.bf16.mxu0 0
        %1590 = vmatpush1.bf16.msra.mxu0 %v1570
        %1591 = vmatprep.subr.bf16.mxu0 0
        %1592 = vmatpush1.bf16.msra.mxu0 %v1571
        %1593 = vmatprep.subr.bf16.mxu0 0
        %1594 = vmatpush1.bf16.msra.mxu0 %v1572
        %1595 = vmatprep.subr.bf16.mxu0 0
        %1596 = vmatpush1.bf16.msra.mxu0 %v1573
        %1597 = vmatprep.subr.bf16.mxu0 0
        %1598 = vmatpush1.bf16.msra.mxu0 %v1574
        %1599 = vmatprep.subr.bf16.mxu0 0
        %1600 = vmatpush1.bf16.msra.mxu0 0
        %1601 = vmatprep.subr.bf16.mxu0 0
        %1602 = vmatpush1.bf16.msra.mxu0 0
        %1603 = vmatprep.subr.bf16.mxu0 0
        %1604 = vmatpush1.bf16.msra.mxu0 0
        %1605 = vmatprep.subr.bf16.mxu0 0
        %1606 = vmatpush1.bf16.msra.mxu0 0
        %1607 = vmatprep.subr.bf16.mxu0 0
        %1608 = vmatpush1.bf16.msra.mxu0 0
        %1609 = vmatprep.subr.bf16.mxu0 0
        %1610 = vmatpush1.bf16.msra.mxu0 0
        %1611 = vmatprep.subr.bf16.mxu0 0
        %1612 = vmatpush1.bf16.msra.mxu0 0
        %1613 = vmatprep.subr.bf16.mxu0 0
        %1614 = vmatpush1.bf16.msra.mxu0 0
        %1615 = vmatprep.mubr.bf16.mxu0 0
        %1616 = vmatmul.mubr.bf16.gmra.mrb[0].mxu0 %v1511
        %v1617 = vpop.f32.mrb[0].mxu0
        %v1618 = vadd.f32 %v1533, %v1617
        %v1619 = vpop.f32.mrb[0].mxu0
        %v1620 = vpop.f32.mrb[0].mxu0
        %v1621 = vadd.f32 %v1533, %v1620
        %v1622 = vpop.f32.mrb[0].mxu0
        %1623 = vdwg.mxu0
        %v1624 = vadd.f32 %v1387, %v1618
        %v1625 = vadd.f32 %v1388, %v1621
        %1626 = vst.msk [vmem:[%s577] sm:$0xff] %vm583, %v1624
        %1627 = vst.msk [vmem:[%s577 + $0x8] sm:$0xff] %vm583, %v1625
        %s1628 = sand.u32 %s300, 1
        %s1629 = scalar_lea.sflag [#allocation4], %s1628
        %s1630 = sand.u32 %s300, 1
        %s1631 = smul.addr %s1630, 16
        %s1632 = scalar_lea.vmem [#allocation22], %s1631
        // Predicated region
        $region117: #{tpu_custom_call.1} parent=67 // pred_check
          %p1633 = pneg %p310
        $region118: #{tpu_custom_call.1} parent=67 // pred_check_branch
          %1635 = sbr.rel (%p1633) target = $region120
        $region119: #{tpu_custom_call.1} parent=67 // pred_region
          %s1637 = ssub.s32 256, 256
          %1638 = vsyncadd %s1629, %s1637
          %s1639 = smul.addr %s35, 2
          %s1640 = smul.addr %s1639, 128
          %s1641 = scalar_lea.hbm %s12, %s1640
          %s1642 = sshll.u32 %s1632, 4
          %s1643 = int_to_ptr.vmem [resolvable:$true] %s1642
          %1648 = dma.vmem_to_hbm [thread:$0]  %s1643, 256, %s1641, %s1629, 128, 128, 8
        $region120: #{tpu_custom_call.1} parent=67 // pred_fallthru
          _
      $region68: #{tpu_custom_call.1} parent=5 // pred_fallthru
        _
      %p1649 = scmp.le.s32.totalorder 2, %s30
      // Predicated region
      $region121: #{tpu_custom_call.1} parent=5 // pred_check
        %p1650 = pneg %p1649
      $region122: #{tpu_custom_call.1} parent=5 // pred_check_branch
        %1652 = sbr.rel (%p1650) target = $region124
      $region123: #{tpu_custom_call.1} parent=5 // pred_region
        %s1653 = ssub.s32 %s30, 2
        // Predicated region
        $region125: #{tpu_custom_call.1} parent=123 // pred_check
          %p1654 = pneg %p316
        $region126: #{tpu_custom_call.1} parent=123 // pred_check_branch
          %1656 = sbr.rel (%p1654) target = $region128
        $region127: #{tpu_custom_call.1} parent=123 // pred_region
          %s1657 = sand.u32 %s301, 1
          %s1658 = scalar_lea.sflag [#allocation4], %s1657
          %s1659 = sand.u32 %s301, 1
          %s1660 = smul.addr %s1659, 16
          %s1661 = scalar_lea.vmem [#allocation22], %s1660
          %1662 = dma.done %s1658, 256
        $region128: #{tpu_custom_call.1} parent=123 // pred_fallthru
          _
      $region124: #{tpu_custom_call.1} parent=5 // pred_fallthru
        _
    $region6: #{tpu_custom_call.1} parent=1 // loop_footer
      %s34 = sadd.s32 1, %s30
    $region7: #{tpu_custom_call.1} parent=1 // loop_footer_branch
      %29 = sbr.rel target = $region3
    $region8: #{tpu_custom_call.1} parent=1 // loop_exit
      _
    %1663 = vsyncpa [#allocation3], 1
    %s1664 = scalar_lea.sflag [#allocation3], 1
    %1665 = vsyncpa %s1664, 1
    %1666 = vsyncpa [#allocation6], 1
    %1667 = vsyncpa [#allocation9], 1
    %1668 = vsyncpa [#allocation12], 1
    %1669 = vsyncpa [#allocation15], 1
    %1670 = vsyncpa [#allocation18], 1
    %1671 = vsyncpa [#allocation21], 1
    %1672 = vsyncpa [#allocation4], 1
    %s1673 = scalar_lea.sflag [#allocation4], 1
    %1674 = vsyncpa %s1673, 1

// kernel: tpu_custom_call.1
$region0: #{tpu_custom_call.1}
  #allocation0 [shape = 'u32[]', space=smem, size = 0x4, offset = 0x4, fixed_abs, tag = 'smem constant byte address 0x4 - core index']
  #allocation1 [shape = 'u32[144,128]{1,0:T(1,128)}', space=vmem, size = 0x12000, scoped, tag = 'internal scratch']
  %s0 = inlined_call_operand.hbm [shape: f32[2,16,32], index: 0, kind: input, shape index: {}]
  %s1 = inlined_call_operand.hbm [shape: f32[1,32], index: 1, kind: input, shape index: {}]
  %s2 = inlined_call_operand.hbm [shape: f32[1,32], index: 2, kind: input, shape index: {}]
  %s3 = inlined_call_operand.hbm [shape: bf16[32,96], index: 3, kind: input, shape index: {}]
  %s4 = inlined_call_operand.hbm [shape: bf16[4,8,32], index: 4, kind: input, shape index: {}]
  %s5 = inlined_call_operand.hbm [shape: f32[1,32], index: 5, kind: input, shape index: {}]
  %s6 = inlined_call_operand.hbm [shape: f32[1,32], index: 6, kind: input, shape index: {}]
  %s7 = inlined_call_operand.hbm [shape: f32[1,32], index: 7, kind: input, shape index: {}]
  %s8 = inlined_call_operand.hbm [shape: bf16[32,128], index: 8, kind: input, shape index: {}]
  %s9 = inlined_call_operand.hbm [shape: f32[1,128], index: 9, kind: input, shape index: {}]
  %s10 = inlined_call_operand.hbm [shape: bf16[128,32], index: 10, kind: input, shape index: {}]
  %s11 = inlined_call_operand.hbm [shape: f32[1,32], index: 11, kind: input, shape index: {}]
  %s12 = inlined_call_operand.hbm [shape: f32[2,16,32], index: 12, kind: output, shape index: {}]
  %s13 = sld [smem:[#allocation0]]
  $region129: #{tpu_custom_call.1} parent=0
    _
  %s15 = ssub.s32 1, %s13
  %s16 = scalar_select 0, %s15, %s13
  $region1: #{tpu_custom_call.1} parent=0
    #allocation2 [shape = 'u8[16384]{0}', space=vmem, size = 0x4000, scoped, tag = 'input window, operand 0']
    #allocation3 [shape = 's32[2]{0}', space=sflag, size = 0x8, scoped, tag = 'scoped memory for tpu_custom_call.1']
    #allocation4 [shape = 's32[2]{0}', space=sflag, size = 0x8, scoped, tag = 'scoped memory for tpu_custom_call.1']
    #allocation5 [shape = 'u8[512]{0}', space=vmem, size = 0x400, scoped, tag = 'input window, operand 1, single buffered']
    #allocation6 [shape = 's32[1]{0}', space=sflag, size = 0x4, scoped, tag = 'scoped memory for tpu_custom_call.1']
    #allocation7 [shape = 'u8[512]{0}', space=vmem, size = 0x400, scoped, tag = 'input window, operand 2, single buffered']
    #allocation8 [shape = 'u8[8192]{0}', space=vmem, size = 0x2000, scoped, tag = 'input window, operand 3, single buffered']
    #allocation9 [shape = 's32[1]{0}', space=sflag, size = 0x4, scoped, tag = 'scoped memory for tpu_custom_call.1']
    #allocation10 [shape = 'u8[8192]{0}', space=vmem, size = 0x2000, scoped, tag = 'input window, operand 4, single buffered']
    #allocation11 [shape = 'u8[512]{0}', space=vmem, size = 0x400, scoped, tag = 'input window, operand 5, single buffered']
    #allocation12 [shape = 's32[1]{0}', space=sflag, size = 0x4, scoped, tag = 'scoped memory for tpu_custom_call.1']
    #allocation13 [shape = 'u8[512]{0}', space=vmem, size = 0x400, scoped, tag = 'input window, operand 6, single buffered']
    #allocation14 [shape = 'u8[512]{0}', space=vmem, size = 0x400, scoped, tag = 'input window, operand 7, single buffered']
    #allocation15 [shape = 's32[1]{0}', space=sflag, size = 0x4, scoped, tag = 'scoped memory for tpu_custom_call.1']
    #allocation16 [shape = 'u8[8192]{0}', space=vmem, size = 0x2000, scoped, tag = 'input window, operand 8, single buffered']
    #allocation17 [shape = 'u8[512]{0}', space=vmem, size = 0x400, scoped, tag = 'input window, operand 9, single buffered']
    #allocation18 [shape = 's32[1]{0}', space=sflag, size = 0x4, scoped, tag = 'scoped memory for tpu_custom_call.1']
    #allocation19 [shape = 'u8[32768]{0}', space=vmem, size = 0x8000, scoped, tag = 'input window, operand 10, single buffered']
    #allocation20 [shape = 'u8[512]{0}', space=vmem, size = 0x400, scoped, tag = 'input window, operand 11, single buffered']
    #allocation21 [shape = 's32[1]{0}', space=sflag, size = 0x4, scoped, tag = 'scoped memory for tpu_custom_call.1']
    #allocation22 [shape = 'u8[16384]{0}', space=vmem, size = 0x4000, scoped, tag = 'output window, operand 0']
    %17 = vsyncpa [#allocation3], 0
    %s18 = scalar_lea.sflag [#allocation3], 1
    %19 = vsyncpa %s18, 0
    %20 = vsyncpa [#allocation6], 0
    %21 = vsyncpa [#allocation9], 0
    %22 = vsyncpa [#allocation12], 0
    %23 = vsyncpa [#allocation15], 0
    %24 = vsyncpa [#allocation18], 0
    %25 = vsyncpa [#allocation21], 0
    %26 = vsyncpa [#allocation4], 0
    %s27 = scalar_lea.sflag [#allocation4], 1
    %28 = vsyncpa %s27, 0
    loop: start=0, step=1, limit=4
    $region2: #{tpu_custom_call.1} parent=1 // loop_pre_header
      _
    $region3: #{tpu_custom_call.1} parent=1 // loop_header
      %s30 = sphi 0, %s34
      %p31 = scmp.ge.s32.totalorder %s30, 4
      %s40 = sphi 0, %s42
      %s43 = sphi 0, %s40
      %s44 = sphi 0, %s43
      %s60 = sphi 0, %s44
      %s64 = sphi 0, %s64
      %s66 = sphi 0, %s64
      %s67 = sphi 0, %s66
      %s81 = sphi 0, %s67
      %s85 = sphi 0, %s85
      %s87 = sphi 0, %s85
      %s88 = sphi 0, %s87
      %s102 = sphi 0, %s88
      %s106 = sphi 0, %s106
      %s108 = sphi 0, %s106
      %s109 = sphi 0, %s108
      %s123 = sphi 0, %s109
      %s127 = sphi 0, %s127
      %s129 = sphi 0, %s127
      %s130 = sphi 0, %s129
      %s144 = sphi 0, %s130
      %s148 = sphi 0, %s148
      %s150 = sphi 0, %s148
      %s151 = sphi 0, %s150
      %s165 = sphi 0, %s151
      %s169 = sphi 0, %s169
      %s171 = sphi 0, %s169
      %s172 = sphi 0, %s171
      %s186 = sphi 0, %s172
      %s190 = sphi 0, %s190
      %s192 = sphi 0, %s190
      %s193 = sphi 0, %s192
      %s207 = sphi 0, %s193
      %s211 = sphi 0, %s211
      %s213 = sphi 0, %s211
      %s214 = sphi 0, %s213
      %s228 = sphi 0, %s214
      %s232 = sphi 0, %s232
      %s234 = sphi 0, %s232
      %s235 = sphi 0, %s234
      %s249 = sphi 0, %s235
      %s253 = sphi 0, %s253
      %s255 = sphi 0, %s253
      %s256 = sphi 0, %s255
      %s270 = sphi 0, %s256
      %s274 = sphi 0, %s274
      %s276 = sphi 0, %s274
      %s277 = sphi 0, %s276
      %s291 = sphi 0, %s277
      %s297 = sphi 0, %s299
      %s300 = sphi 0, %s297
      %s301 = sphi 0, %s300
      %s317 = sphi 0, %s301
    $region4: #{tpu_custom_call.1} parent=1 // loop_header_branch
      %33 = sbr.rel (%p31) target = $region8
    $region5: #{tpu_custom_call.1} parent=1 // loop_body
      %s35 = ssub.s32 %s30, 1
      %s36 = ssub.s32 %s30, 2
      %s37 = sadd.s32 %s30, 1
      %s38 = ssub.s32 %s30, %s37
      %p39 = scmp.eq.s32.totalorder %s38, 0
      %s41 = sadd.s32 %s40, 1
      %s42 = scalar_select %p39, %s40, %s41
      %p45 = pneg %p39
      %p46 = scmp.eq.s32.totalorder %s30, 1
      %p47 = por %p45, %p46
      %p48 = scmp.ne.s32.totalorder %s40, %s43
      %p49 = scmp.eq.s32.totalorder %s30, 0
      %p50 = por %p48, %p49
      %p51 = scmp.ne.s32.totalorder %s40, %s43
      %p52 = scmp.eq.s32.totalorder %s35, 1
      %p53 = por %p51, %p52
      %p54 = scmp.ne.s32.totalorder %s43, %s44
      %p55 = scmp.eq.s32.totalorder %s35, 0
      %p56 = por %p54, %p55
      %p57 = scmp.ne.s32.totalorder %s43, %s44
      %p58 = scmp.eq.s32.totalorder %s36, 1
      %p59 = por %p57, %p58
      %p61 = scmp.ne.s32.totalorder %s44, %s60
      %p62 = scmp.eq.s32.totalorder %s36, 0
      %p63 = por %p61, %p62
      %s65 = sadd.s32 %s64, 1
      %p68 = scmp.eq.s32.totalorder %s30, 1
      %p69 = scmp.ne.s32.totalorder %s64, %s66
      %p70 = scmp.eq.s32.totalorder %s30, 0
      %p71 = por %p69, %p70
      %p72 = scmp.ne.s32.totalorder %s64, %s66
      %p73 = scmp.eq.s32.totalorder %s35, 1
      %p74 = por %p72, %p73
      %p75 = scmp.ne.s32.totalorder %s66, %s67
      %p76 = scmp.eq.s32.totalorder %s35, 0
      %p77 = por %p75, %p76
      %p78 = scmp.ne.s32.totalorder %s66, %s67
      %p79 = scmp.eq.s32.totalorder %s36, 1
      %p80 = por %p78, %p79
      %p82 = scmp.ne.s32.totalorder %s67, %s81
      %p83 = scmp.eq.s32.totalorder %s36, 0
      %p84 = por %p82, %p83
      %s86 = sadd.s32 %s85, 1
      %p89 = scmp.eq.s32.totalorder %s30, 1
      %p90 = scmp.ne.s32.totalorder %s85, %s87
      %p91 = scmp.eq.s32.totalorder %s30, 0
      %p92 = por %p90, %p91
      %p93 = scmp.ne.s32.totalorder %s85, %s87
      %p94 = scmp.eq.s32.totalorder %s35, 1
      %p95 = por %p93, %p94
      %p96 = scmp.ne.s32.totalorder %s87, %s88
      %p97 = scmp.eq.s32.totalorder %s35, 0
      %p98 = por %p96, %p97
      %p99 = scmp.ne.s32.totalorder %s87, %s88
      %p100 = scmp.eq.s32.totalorder %s36, 1
      %p101 = por %p99, %p100
      %p103 = scmp.ne.s32.totalorder %s88, %s102
      %p104 = scmp.eq.s32.totalorder %s36, 0
      %p105 = por %p103, %p104
      %s107 = sadd.s32 %s106, 1
      %p110 = scmp.eq.s32.totalorder %s30, 1
      %p111 = scmp.ne.s32.totalorder %s106, %s108
      %p112 = scmp.eq.s32.totalorder %s30, 0
      %p113 = por %p111, %p112
      %p114 = scmp.ne.s32.totalorder %s106, %s108
      %p115 = scmp.eq.s32.totalorder %s35, 1
      %p116 = por %p114, %p115
      %p117 = scmp.ne.s32.totalorder %s108, %s109
      %p118 = scmp.eq.s32.totalorder %s35, 0
      %p119 = por %p117, %p118
      %p120 = scmp.ne.s32.totalorder %s108, %s109
      %p121 = scmp.eq.s32.totalorder %s36, 1
      %p122 = por %p120, %p121
      %p124 = scmp.ne.s32.totalorder %s109, %s123
      %p125 = scmp.eq.s32.totalorder %s36, 0
      %p126 = por %p124, %p125
      %s128 = sadd.s32 %s127, 1
      %p131 = scmp.eq.s32.totalorder %s30, 1
      %p132 = scmp.ne.s32.totalorder %s127, %s129
      %p133 = scmp.eq.s32.totalorder %s30, 0
      %p134 = por %p132, %p133
      %p135 = scmp.ne.s32.totalorder %s127, %s129
      %p136 = scmp.eq.s32.totalorder %s35, 1
      %p137 = por %p135, %p136
      %p138 = scmp.ne.s32.totalorder %s129, %s130
      %p139 = scmp.eq.s32.totalorder %s35, 0
      %p140 = por %p138, %p139
      %p141 = scmp.ne.s32.totalorder %s129, %s130
      %p142 = scmp.eq.s32.totalorder %s36, 1
      %p143 = por %p141, %p142
      %p145 = scmp.ne.s32.totalorder %s130, %s144
      %p146 = scmp.eq.s32.totalorder %s36, 0
      %p147 = por %p145, %p146
      %s149 = sadd.s32 %s148, 1
      %p152 = scmp.eq.s32.totalorder %s30, 1
      %p153 = scmp.ne.s32.totalorder %s148, %s150
      %p154 = scmp.eq.s32.totalorder %s30, 0
      %p155 = por %p153, %p154
      %p156 = scmp.ne.s32.totalorder %s148, %s150
      %p157 = scmp.eq.s32.totalorder %s35, 1
      %p158 = por %p156, %p157
      %p159 = scmp.ne.s32.totalorder %s150, %s151
      %p160 = scmp.eq.s32.totalorder %s35, 0
      %p161 = por %p159, %p160
      %p162 = scmp.ne.s32.totalorder %s150, %s151
      %p163 = scmp.eq.s32.totalorder %s36, 1
      %p164 = por %p162, %p163
      %p166 = scmp.ne.s32.totalorder %s151, %s165
      %p167 = scmp.eq.s32.totalorder %s36, 0
      %p168 = por %p166, %p167
      %s170 = sadd.s32 %s169, 1
      %p173 = scmp.eq.s32.totalorder %s30, 1
      %p174 = scmp.ne.s32.totalorder %s169, %s171
      %p175 = scmp.eq.s32.totalorder %s30, 0
      %p176 = por %p174, %p175
      %p177 = scmp.ne.s32.totalorder %s169, %s171
      %p178 = scmp.eq.s32.totalorder %s35, 1
      %p179 = por %p177, %p178
      %p180 = scmp.ne.s32.totalorder %s171, %s172
      %p181 = scmp.eq.s32.totalorder %s35, 0
      %p182 = por %p180, %p181
      %p183 = scmp.ne.s32.totalorder %s171, %s172
      %p184 = scmp.eq.s32.totalorder %s36, 1
      %p185 = por %p183, %p184
      %p187 = scmp.ne.s32.totalorder %s172, %s186
      %p188 = scmp.eq.s32.totalorder %s36, 0
      %p189 = por %p187, %p188
      %s191 = sadd.s32 %s190, 1
      %p194 = scmp.eq.s32.totalorder %s30, 1
      %p195 = scmp.ne.s32.totalorder %s190, %s192
      %p196 = scmp.eq.s32.totalorder %s30, 0
      %p197 = por %p195, %p196
      %p198 = scmp.ne.s32.totalorder %s190, %s192
      %p199 = scmp.eq.s32.totalorder %s35, 1
      %p200 = por %p198, %p199
      %p201 = scmp.ne.s32.totalorder %s192, %s193
      %p202 = scmp.eq.s32.totalorder %s35, 0
      %p203 = por %p201, %p202
      %p204 = scmp.ne.s32.totalorder %s192, %s193
      %p205 = scmp.eq.s32.totalorder %s36, 1
      %p206 = por %p204, %p205
      %p208 = scmp.ne.s32.totalorder %s193, %s207
      %p209 = scmp.eq.s32.totalorder %s36, 0
      %p210 = por %p208, %p209
      %s212 = sadd.s32 %s211, 1
      %p215 = scmp.eq.s32.totalorder %s30, 1
      %p216 = scmp.ne.s32.totalorder %s211, %s213
      %p217 = scmp.eq.s32.totalorder %s30, 0
      %p218 = por %p216, %p217
      %p219 = scmp.ne.s32.totalorder %s211, %s213
      %p220 = scmp.eq.s32.totalorder %s35, 1
      %p221 = por %p219, %p220
      %p222 = scmp.ne.s32.totalorder %s213, %s214
      %p223 = scmp.eq.s32.totalorder %s35, 0
      %p224 = por %p222, %p223
      %p225 = scmp.ne.s32.totalorder %s213, %s214
      %p226 = scmp.eq.s32.totalorder %s36, 1
      %p227 = por %p225, %p226
      %p229 = scmp.ne.s32.totalorder %s214, %s228
      %p230 = scmp.eq.s32.totalorder %s36, 0
      %p231 = por %p229, %p230
      %s233 = sadd.s32 %s232, 1
      %p236 = scmp.eq.s32.totalorder %s30, 1
      %p237 = scmp.ne.s32.totalorder %s232, %s234
      %p238 = scmp.eq.s32.totalorder %s30, 0
      %p239 = por %p237, %p238
      %p240 = scmp.ne.s32.totalorder %s232, %s234
      %p241 = scmp.eq.s32.totalorder %s35, 1
      %p242 = por %p240, %p241
      %p243 = scmp.ne.s32.totalorder %s234, %s235
      %p244 = scmp.eq.s32.totalorder %s35, 0
      %p245 = por %p243, %p244
      %p246 = scmp.ne.s32.totalorder %s234, %s235
      %p247 = scmp.eq.s32.totalorder %s36, 1
      %p248 = por %p246, %p247
      %p250 = scmp.ne.s32.totalorder %s235, %s249
      %p251 = scmp.eq.s32.totalorder %s36, 0
      %p252 = por %p250, %p251
      %s254 = sadd.s32 %s253, 1
      %p257 = scmp.eq.s32.totalorder %s30, 1
      %p258 = scmp.ne.s32.totalorder %s253, %s255
      %p259 = scmp.eq.s32.totalorder %s30, 0
      %p260 = por %p258, %p259
      %p261 = scmp.ne.s32.totalorder %s253, %s255
      %p262 = scmp.eq.s32.totalorder %s35, 1
      %p263 = por %p261, %p262
      %p264 = scmp.ne.s32.totalorder %s255, %s256
      %p265 = scmp.eq.s32.totalorder %s35, 0
      %p266 = por %p264, %p265
      %p267 = scmp.ne.s32.totalorder %s255, %s256
      %p268 = scmp.eq.s32.totalorder %s36, 1
      %p269 = por %p267, %p268
      %p271 = scmp.ne.s32.totalorder %s256, %s270
      %p272 = scmp.eq.s32.totalorder %s36, 0
      %p273 = por %p271, %p272
      %s275 = sadd.s32 %s274, 1
      %p278 = scmp.eq.s32.totalorder %s30, 1
      %p279 = scmp.ne.s32.totalorder %s274, %s276
      %p280 = scmp.eq.s32.totalorder %s30, 0
      %p281 = por %p279, %p280
      %p282 = scmp.ne.s32.totalorder %s274, %s276
      %p283 = scmp.eq.s32.totalorder %s35, 1
      %p284 = por %p282, %p283
      %p285 = scmp.ne.s32.totalorder %s276, %s277
      %p286 = scmp.eq.s32.totalorder %s35, 0
      %p287 = por %p285, %p286
      %p288 = scmp.ne.s32.totalorder %s276, %s277
      %p289 = scmp.eq.s32.totalorder %s36, 1
      %p290 = por %p288, %p289
      %p292 = scmp.ne.s32.totalorder %s277, %s291
      %p293 = scmp.eq.s32.totalorder %s36, 0
      %p294 = por %p292, %p293
      %s295 = ssub.s32 %s30, %s37
      %p296 = scmp.eq.s32.totalorder %s295, 0
      %s298 = sadd.s32 %s297, 1
      %s299 = scalar_select %p296, %s297, %s298
      %p302 = pneg %p296
      %p303 = scmp.eq.s32.totalorder %s30, 1
      %p304 = por %p302, %p303
      %p305 = scmp.ne.s32.totalorder %s297, %s300
      %p306 = scmp.eq.s32.totalorder %s30, 0
      %p307 = por %p305, %p306
      %p308 = scmp.ne.s32.totalorder %s297, %s300
      %p309 = scmp.eq.s32.totalorder %s35, 1
      %p310 = por %p308, %p309
      %p311 = scmp.ne.s32.totalorder %s300, %s301
      %p312 = scmp.eq.s32.totalorder %s35, 0
      %p313 = por %p311, %p312
      %p314 = scmp.ne.s32.totalorder %s300, %s301
      %p315 = scmp.eq.s32.totalorder %s36, 1
      %p316 = por %p314, %p315
      %p318 = scmp.ne.s32.totalorder %s301, %s317
      %p319 = scmp.eq.s32.totalorder %s36, 0
      %p320 = por %p318, %p319
      %p321 = scmp.le.s32.totalorder 1, %s30
      %p322 = scmp.lt.s32.totalorder %s30, 3
      %p323 = pnand %p321, %p322
      %p324 = pneg %p323
      // Predicated region
      $region9: #{tpu_custom_call.1} parent=5 // pred_check
        _
      $region10: #{tpu_custom_call.1} parent=5 // pred_check_branch
        %326 = sbr.rel (%p323) target = $region12
      $region11: #{tpu_custom_call.1} parent=5 // pred_region
        %s327 = ssub.s32 %s30, 1
        // Predicated region
        $region13: #{tpu_custom_call.1} parent=11 // pred_check
          %p328 = pneg %p77
        $region14: #{tpu_custom_call.1} parent=11 // pred_check_branch
          %330 = sbr.rel (%p328) target = $region16
        $region15: #{tpu_custom_call.1} parent=11 // pred_region
          %s332 = ssub.s32 16, 16
          %333 = vsyncadd [#allocation6], %s332
          %s335 = sshll.u32 [#allocation5], 4
          %s336 = int_to_ptr.vmem [resolvable:$true] %s335
          %338 = dma.hbm_to_vmem [thread:$0]  %s1, 16, %s336, [#allocation6]
        $region16: #{tpu_custom_call.1} parent=11 // pred_fallthru
          _
        // Predicated region
        $region17: #{tpu_custom_call.1} parent=11 // pred_check
          %p339 = pneg %p98
        $region18: #{tpu_custom_call.1} parent=11 // pred_check_branch
          %341 = sbr.rel (%p339) target = $region20
        $region19: #{tpu_custom_call.1} parent=11 // pred_region
          %s343 = ssub.s32 16, 16
          %344 = vsyncadd [#allocation6], %s343
          %s346 = sshll.u32 [#allocation7], 4
          %s347 = int_to_ptr.vmem [resolvable:$true] %s346
          %349 = dma.hbm_to_vmem [thread:$0]  %s2, 16, %s347, [#allocation6]
        $region20: #{tpu_custom_call.1} parent=11 // pred_fallthru
          _
        // Predicated region
        $region21: #{tpu_custom_call.1} parent=11 // pred_check
          %p350 = pneg %p119
        $region22: #{tpu_custom_call.1} parent=11 // pred_check_branch
          %352 = sbr.rel (%p350) target = $region24
        $region23: #{tpu_custom_call.1} parent=11 // pred_region
          %s354 = ssub.s32 256, 256
          %355 = vsyncadd [#allocation9], %s354
          %s356 = sshll.u32 [#allocation8], 4
          %s357 = int_to_ptr.vmem [resolvable:$true] %s356
          %362 = dma.hbm_to_vmem [thread:$0]  %s3, 256, %s357, [#allocation9], 64, 64, 4
        $region24: #{tpu_custom_call.1} parent=11 // pred_fallthru
          _
        // Predicated region
        $region25: #{tpu_custom_call.1} parent=11 // pred_check
          %p363 = pneg %p140
        $region26: #{tpu_custom_call.1} parent=11 // pred_check_branch
          %365 = sbr.rel (%p363) target = $region28
        $region27: #{tpu_custom_call.1} parent=11 // pred_region
          %s367 = ssub.s32 256, 256
          %368 = vsyncadd [#allocation9], %s367
          %s369 = sshll.u32 [#allocation10], 4
          %s370 = int_to_ptr.vmem [resolvable:$true] %s369
          %375 = dma.hbm_to_vmem [thread:$0]  %s4, 256, %s370, [#allocation9], 64, 64, 4
        $region28: #{tpu_custom_call.1} parent=11 // pred_fallthru
          _
        // Predicated region
        $region29: #{tpu_custom_call.1} parent=11 // pred_check
          %p376 = pneg %p161
        $region30: #{tpu_custom_call.1} parent=11 // pred_check_branch
          %378 = sbr.rel (%p376) target = $region32
        $region31: #{tpu_custom_call.1} parent=11 // pred_region
          %s380 = ssub.s32 16, 16
          %381 = vsyncadd [#allocation12], %s380
          %s383 = sshll.u32 [#allocation11], 4
          %s384 = int_to_ptr.vmem [resolvable:$true] %s383
          %386 = dma.hbm_to_vmem [thread:$0]  %s5, 16, %s384, [#allocation12]
        $region32: #{tpu_custom_call.1} parent=11 // pred_fallthru
          _
        // Predicated region
        $region33: #{tpu_custom_call.1} parent=11 // pred_check
          %p387 = pneg %p182
        $region34: #{tpu_custom_call.1} parent=11 // pred_check_branch
          %389 = sbr.rel (%p387) target = $region36
        $region35: #{tpu_custom_call.1} parent=11 // pred_region
          %s391 = ssub.s32 16, 16
          %392 = vsyncadd [#allocation12], %s391
          %s394 = sshll.u32 [#allocation13], 4
          %s395 = int_to_ptr.vmem [resolvable:$true] %s394
          %397 = dma.hbm_to_vmem [thread:$0]  %s6, 16, %s395, [#allocation12]
        $region36: #{tpu_custom_call.1} parent=11 // pred_fallthru
          _
        // Predicated region
        $region37: #{tpu_custom_call.1} parent=11 // pred_check
          %p398 = pneg %p203
        $region38: #{tpu_custom_call.1} parent=11 // pred_check_branch
          %400 = sbr.rel (%p398) target = $region40
        $region39: #{tpu_custom_call.1} parent=11 // pred_region
          %s402 = ssub.s32 16, 16
          %403 = vsyncadd [#allocation15], %s402
          %s405 = sshll.u32 [#allocation14], 4
          %s406 = int_to_ptr.vmem [resolvable:$true] %s405
          %408 = dma.hbm_to_vmem [thread:$0]  %s7, 16, %s406, [#allocation15]
        $region40: #{tpu_custom_call.1} parent=11 // pred_fallthru
          _
        // Predicated region
        $region41: #{tpu_custom_call.1} parent=11 // pred_check
          %p409 = pneg %p224
        $region42: #{tpu_custom_call.1} parent=11 // pred_check_branch
          %411 = sbr.rel (%p409) target = $region44
        $region43: #{tpu_custom_call.1} parent=11 // pred_region
          %s413 = ssub.s32 256, 256
          %414 = vsyncadd [#allocation15], %s413
          %s415 = sshll.u32 [#allocation16], 4
          %s416 = int_to_ptr.vmem [resolvable:$true] %s415
          %421 = dma.hbm_to_vmem [thread:$0]  %s8, 256, %s416, [#allocation15], 64, 64, 4
        $region44: #{tpu_custom_call.1} parent=11 // pred_fallthru
          _
        // Predicated region
        $region45: #{tpu_custom_call.1} parent=11 // pred_check
          %p422 = pneg %p245
        $region46: #{tpu_custom_call.1} parent=11 // pred_check_branch
          %424 = sbr.rel (%p422) target = $region48
        $region47: #{tpu_custom_call.1} parent=11 // pred_region
          %s426 = ssub.s32 16, 16
          %427 = vsyncadd [#allocation18], %s426
          %s429 = sshll.u32 [#allocation17], 4
          %s430 = int_to_ptr.vmem [resolvable:$true] %s429
          %432 = dma.hbm_to_vmem [thread:$0]  %s9, 16, %s430, [#allocation18]
        $region48: #{tpu_custom_call.1} parent=11 // pred_fallthru
          _
        // Predicated region
        $region49: #{tpu_custom_call.1} parent=11 // pred_check
          %p433 = pneg %p266
        $region50: #{tpu_custom_call.1} parent=11 // pred_check_branch
          %435 = sbr.rel (%p433) target = $region52
        $region51: #{tpu_custom_call.1} parent=11 // pred_region
          %s437 = ssub.s32 1024, 1024
          %438 = vsyncadd [#allocation18], %s437
          %s439 = sshll.u32 [#allocation19], 4
          %s440 = int_to_ptr.vmem [resolvable:$true] %s439
          %445 = dma.hbm_to_vmem [thread:$0]  %s10, 1024, %s440, [#allocation18], 64, 64, 4
        $region52: #{tpu_custom_call.1} parent=11 // pred_fallthru
          _
        // Predicated region
        $region53: #{tpu_custom_call.1} parent=11 // pred_check
          %p446 = pneg %p287
        $region54: #{tpu_custom_call.1} parent=11 // pred_check_branch
          %448 = sbr.rel (%p446) target = $region56
        $region55: #{tpu_custom_call.1} parent=11 // pred_region
          %s450 = ssub.s32 16, 16
          %451 = vsyncadd [#allocation21], %s450
          %s453 = sshll.u32 [#allocation20], 4
          %s454 = int_to_ptr.vmem [resolvable:$true] %s453
          %456 = dma.hbm_to_vmem [thread:$0]  %s11, 16, %s454, [#allocation21]
        $region56: #{tpu_custom_call.1} parent=11 // pred_fallthru
          _
      $region12: #{tpu_custom_call.1} parent=5 // pred_fallthru
        _
      %p457 = scmp.lt.s32.totalorder %s30, 2
      // Predicated region
      $region57: #{tpu_custom_call.1} parent=5 // pred_check
        %p458 = pneg %p457
      $region58: #{tpu_custom_call.1} parent=5 // pred_check_branch
        %460 = sbr.rel (%p458) target = $region60
      $region59: #{tpu_custom_call.1} parent=5 // pred_region
        // Predicated region
        $region61: #{tpu_custom_call.1} parent=59 // pred_check
          %p461 = pneg %p50
        $region62: #{tpu_custom_call.1} parent=59 // pred_check_branch
          %463 = sbr.rel (%p461) target = $region64
        $region63: #{tpu_custom_call.1} parent=59 // pred_region
          %s464 = sand.u32 %s40, 1
          %s465 = scalar_lea.sflag [#allocation3], %s464
          %s466 = sand.u32 %s40, 1
          %s467 = smul.addr %s466, 16
          %s468 = scalar_lea.vmem [#allocation2], %s467
          %s470 = ssub.s32 256, 256
          %471 = vsyncadd %s465, %s470
          %s472 = smul.addr %s30, 2
          %s473 = smul.addr %s472, 128
          %s474 = scalar_lea.hbm %s0, %s473
          %s475 = sshll.u32 %s468, 4
          %s476 = int_to_ptr.vmem [resolvable:$true] %s475
          %481 = dma.hbm_to_vmem [thread:$0]  %s474, 256, %s476, %s465, 128, 128, 8
        $region64: #{tpu_custom_call.1} parent=59 // pred_fallthru
          _
      $region60: #{tpu_custom_call.1} parent=5 // pred_fallthru
        _
      %p482 = scmp.le.s32.totalorder 1, %s30
      %p483 = scmp.lt.s32.totalorder %s30, 3
      %p484 = pnand %p482, %p483
      %p485 = pneg %p484
      // Predicated region
      $region65: #{tpu_custom_call.1} parent=5 // pred_check
        _
      $region66: #{tpu_custom_call.1} parent=5 // pred_check_branch
        %487 = sbr.rel (%p484) target = $region68
      $region67: #{tpu_custom_call.1} parent=5 // pred_region
        %s488 = ssub.s32 %s30, 1
        %s489 = sand.u32 %s43, 1
        %s490 = scalar_lea.sflag [#allocation3], %s489
        %s491 = sand.u32 %s43, 1
        %s492 = smul.addr %s491, 16
        %s493 = scalar_lea.vmem [#allocation2], %s492
        // Predicated region
        $region69: #{tpu_custom_call.1} parent=67 // pred_check
          %p494 = pneg %p56
        $region70: #{tpu_custom_call.1} parent=67 // pred_check_branch
          %496 = sbr.rel (%p494) target = $region72
        $region71: #{tpu_custom_call.1} parent=67 // pred_region
          %497 = dma.done %s490, 256
        $region72: #{tpu_custom_call.1} parent=67 // pred_fallthru
          _
        // Predicated region
        $region73: #{tpu_custom_call.1} parent=67 // pred_check
          %p498 = pneg %p77
        $region74: #{tpu_custom_call.1} parent=67 // pred_check_branch
          %500 = sbr.rel (%p498) target = $region76
        $region75: #{tpu_custom_call.1} parent=67 // pred_region
          %501 = dma.done [#allocation6], 16
        $region76: #{tpu_custom_call.1} parent=67 // pred_fallthru
          _
        // Predicated region
        $region77: #{tpu_custom_call.1} parent=67 // pred_check
          %p502 = pneg %p98
        $region78: #{tpu_custom_call.1} parent=67 // pred_check_branch
          %504 = sbr.rel (%p502) target = $region80
        $region79: #{tpu_custom_call.1} parent=67 // pred_region
          %505 = dma.done [#allocation6], 16
        $region80: #{tpu_custom_call.1} parent=67 // pred_fallthru
          _
        // Predicated region
        $region81: #{tpu_custom_call.1} parent=67 // pred_check
          %p506 = pneg %p119
        $region82: #{tpu_custom_call.1} parent=67 // pred_check_branch
          %508 = sbr.rel (%p506) target = $region84
        $region83: #{tpu_custom_call.1} parent=67 // pred_region
          %509 = dma.done [#allocation9], 256
        $region84: #{tpu_custom_call.1} parent=67 // pred_fallthru
          _
        // Predicated region
        $region85: #{tpu_custom_call.1} parent=67 // pred_check
          %p510 = pneg %p140
        $region86: #{tpu_custom_call.1} parent=67 // pred_check_branch
          %512 = sbr.rel (%p510) target = $region88
        $region87: #{tpu_custom_call.1} parent=67 // pred_region
          %513 = dma.done [#allocation9], 256
        $region88: #{tpu_custom_call.1} parent=67 // pred_fallthru
          _
        // Predicated region
        $region89: #{tpu_custom_call.1} parent=67 // pred_check
          %p514 = pneg %p161
        $region90: #{tpu_custom_call.1} parent=67 // pred_check_branch
          %516 = sbr.rel (%p514) target = $region92
        $region91: #{tpu_custom_call.1} parent=67 // pred_region
          %517 = dma.done [#allocation12], 16
        $region92: #{tpu_custom_call.1} parent=67 // pred_fallthru
          _
        // Predicated region
        $region93: #{tpu_custom_call.1} parent=67 // pred_check
          %p518 = pneg %p182
        $region94: #{tpu_custom_call.1} parent=67 // pred_check_branch
          %520 = sbr.rel (%p518) target = $region96
        $region95: #{tpu_custom_call.1} parent=67 // pred_region
          %521 = dma.done [#allocation12], 16
        $region96: #{tpu_custom_call.1} parent=67 // pred_fallthru
          _
        // Predicated region
        $region97: #{tpu_custom_call.1} parent=67 // pred_check
          %p522 = pneg %p203
        $region98: #{tpu_custom_call.1} parent=67 // pred_check_branch
          %524 = sbr.rel (%p522) target = $region100
        $region99: #{tpu_custom_call.1} parent=67 // pred_region
          %525 = dma.done [#allocation15], 16
        $region100: #{tpu_custom_call.1} parent=67 // pred_fallthru
          _
        // Predicated region
        $region101: #{tpu_custom_call.1} parent=67 // pred_check
          %p526 = pneg %p224
        $region102: #{tpu_custom_call.1} parent=67 // pred_check_branch
          %528 = sbr.rel (%p526) target = $region104
        $region103: #{tpu_custom_call.1} parent=67 // pred_region
          %529 = dma.done [#allocation15], 256
        $region104: #{tpu_custom_call.1} parent=67 // pred_fallthru
          _
        // Predicated region
        $region105: #{tpu_custom_call.1} parent=67 // pred_check
          %p530 = pneg %p245
        $region106: #{tpu_custom_call.1} parent=67 // pred_check_branch
          %532 = sbr.rel (%p530) target = $region108
        $region107: #{tpu_custom_call.1} parent=67 // pred_region
          %533 = dma.done [#allocation18], 16
        $region108: #{tpu_custom_call.1} parent=67 // pred_fallthru
          _
        // Predicated region
        $region109: #{tpu_custom_call.1} parent=67 // pred_check
          %p534 = pneg %p266
        $region110: #{tpu_custom_call.1} parent=67 // pred_check_branch
          %536 = sbr.rel (%p534) target = $region112
        $region111: #{tpu_custom_call.1} parent=67 // pred_region
          %537 = dma.done [#allocation18], 1024
        $region112: #{tpu_custom_call.1} parent=67 // pred_fallthru
          _
        // Predicated region
        $region113: #{tpu_custom_call.1} parent=67 // pred_check
          %p538 = pneg %p287
        $region114: #{tpu_custom_call.1} parent=67 // pred_check_branch
          %540 = sbr.rel (%p538) target = $region116
        $region115: #{tpu_custom_call.1} parent=67 // pred_region
          %541 = dma.done [#allocation21], 16
        $region116: #{tpu_custom_call.1} parent=67 // pred_fallthru
          _
        %s542 = sand.u32 %s43, 1
        %s543 = scalar_lea.sflag [#allocation3], %s542
        %s544 = sand.u32 %s43, 1
        %s545 = smul.addr %s544, 16
        %s546 = scalar_lea.vmem [#allocation2], %s545
        %p547 = pneg %p56
        %p548 = pneg %p53
        %p549 = pneg %p77
        %p550 = pneg %p74
        %p551 = pneg %p98
        %p552 = pneg %p95
        %p553 = pneg %p119
        %p554 = pneg %p116
        %p555 = pneg %p140
        %p556 = pneg %p137
        %p557 = pneg %p161
        %p558 = pneg %p158
        %p559 = pneg %p182
        %p560 = pneg %p179
        %p561 = pneg %p203
        %p562 = pneg %p200
        %p563 = pneg %p224
        %p564 = pneg %p221
        %p565 = pneg %p245
        %p566 = pneg %p242
        %p567 = pneg %p266
        %p568 = pneg %p263
        %p569 = pneg %p287
        %p570 = pneg %p284
        %p571 = pneg %p313
        %p572 = pneg %p310
        %s573 = sand.u32 %s300, 1
        %s574 = scalar_lea.sflag [#allocation4], %s573
        %s575 = sand.u32 %s300, 1
        %s576 = smul.addr %s575, 16
        %s577 = scalar_lea.vmem [#allocation22], %s576
        %v579 = vld [vmem:[%s493] sm:$0xff]
        %v580 = vld [vmem:[%s493 + $0x8] sm:$0xff]
        %v581 = vld [vmem:[#allocation5] sm:$0x1]
        %v582 = vld [vmem:[#allocation7] sm:$0x1]
        %vm583 = vcmask 261120
        %v584 = vsel %vm583, %v579, 0.0
        %585 = vadd.xlane.f32.xlu0 %v584
        %v586 = vpop.xlane.xlu0 %585
        %v587 = vsel %vm583, %v580, 0.0
        %588 = vadd.xlane.f32.xlu0 %v587
        %v589 = vpop.xlane.xlu0 %588
        %v590 = vrcp.pop 32.0
        %v591 = vmul.f32 %v586, %v590
        %v592 = vmul.f32 %v589, %v590
        %v593 = vsub.f32 %v579, %v591
        %v594 = vsub.f32 %v580, %v592
        %v595 = vmul.f32 %v593, %v593
        %v596 = vmul.f32 %v594, %v594
        %v597 = vsel %vm583, %v595, 0.0
        %598 = vadd.xlane.f32.xlu0 %v597
        %v599 = vpop.xlane.xlu0 %598
        %v600 = vsel %vm583, %v596, 0.0
        %601 = vadd.xlane.f32.xlu0 %v600
        %v602 = vpop.xlane.xlu0 %601
        %v603 = vmul.f32 %v599, %v590
        %v604 = vmul.f32 %v602, %v590
        %v605 = vadd.f32 %v603, 1e-05
        %v606 = vadd.f32 %v604, 1e-05
        %v607 = vrsqrt.pop %v605
        %v608 = vrsqrt.pop %v606
        %v609 = vmul.f32 %v593, %v607
        %v610 = vmul.f32 %v594, %v608
        %v612 = vlaneseq
        %v613 = vshrl.u32 %v612, 7
        %v614 = vsub.s32 0, %v613
        %v615 = vrot.slane %v581, %v614
        %v617 = vmul.f32 %v609, %v615
        %v618 = vmul.f32 %v610, %v615
        %v620 = vlaneseq
        %v621 = vshrl.u32 %v620, 7
        %v622 = vsub.s32 0, %v621
        %v623 = vrot.slane %v582, %v622
        %v625 = vadd.f32 %v617, %v623
        %v626 = vadd.f32 %v618, %v623
        %v627 = vpack.c.bf16 %v626, %v625
        %v628 = vld [vmem:[#allocation8] sm:$0xf]
        %v629 = vld [vmem:[#allocation8 + $0x4] sm:$0xf]
        %v630 = vld [vmem:[#allocation8 + $0x8] sm:$0xf]
        %v631 = vld [vmem:[#allocation8 + $0xc] sm:$0xf]
        %v636 = vunpack.c.l.b16 %v628
        %v637 = vunpack.c.l.b16 %v629
        %v638 = vunpack.c.l.b16 %v630
        %v639 = vunpack.c.l.b16 %v631
        %v640 = vpack.c.b16 %v637, %v636
        %v641 = vpack.c.b16 %v639, %v638
        %v645 = vsel %vm583, %v627, 0
        %647 = vmatprep.subr.bf16.mxu0 0
        %648 = vmatpush1.bf16.msra.mxu0 %v640
        %649 = vmatprep.subr.bf16.mxu0 0
        %650 = vmatpush1.bf16.msra.mxu0 %v641
        %651 = vmatprep.subr.bf16.mxu0 0
        %652 = vmatpush1.bf16.msra.mxu0 0
        %653 = vmatprep.subr.bf16.mxu0 0
        %654 = vmatpush1.bf16.msra.mxu0 0
        %655 = vmatprep.subr.bf16.mxu0 0
        %656 = vmatpush1.bf16.msra.mxu0 0
        %657 = vmatprep.subr.bf16.mxu0 0
        %658 = vmatpush1.bf16.msra.mxu0 0
        %659 = vmatprep.subr.bf16.mxu0 0
        %660 = vmatpush1.bf16.msra.mxu0 0
        %661 = vmatprep.subr.bf16.mxu0 0
        %662 = vmatpush1.bf16.msra.mxu0 0
        %663 = vmatprep.subr.bf16.mxu0 0
        %664 = vmatpush1.bf16.msra.mxu0 0
        %665 = vmatprep.subr.bf16.mxu0 0
        %666 = vmatpush1.bf16.msra.mxu0 0
        %667 = vmatprep.subr.bf16.mxu0 0
        %668 = vmatpush1.bf16.msra.mxu0 0
        %669 = vmatprep.subr.bf16.mxu0 0
        %670 = vmatpush1.bf16.msra.mxu0 0
        %671 = vmatprep.subr.bf16.mxu0 0
        %672 = vmatpush1.bf16.msra.mxu0 0
        %673 = vmatprep.subr.bf16.mxu0 0
        %674 = vmatpush1.bf16.msra.mxu0 0
        %675 = vmatprep.subr.bf16.mxu0 0
        %676 = vmatpush1.bf16.msra.mxu0 0
        %677 = vmatprep.subr.bf16.mxu0 0
        %678 = vmatpush1.bf16.msra.mxu0 0
        %679 = vmatprep.mubr.bf16.mxu0 0
        %680 = vmatmul.mubr.bf16.gmra.mrb[0].mxu0 %v645
        %v681 = vpop.f32.mrb[0].mxu0
        %v682 = vadd.f32 0.0, %v681
        %v683 = vpop.f32.mrb[0].mxu0
        %v684 = vpop.f32.mrb[0].mxu0
        %v685 = vadd.f32 0.0, %v684
        %v686 = vpop.f32.mrb[0].mxu0
        %687 = vdwg.mxu0
        %v688 = vpack.c.bf16 %v685, %v682
        %690 = vrot.lane.b32.xlu0 %v688, 96
        %v691 = vpop.permute.xlu0 %690
        %vm692 = vcmask 64512
        %v694 = vsel %vm692, %v688, 0
        %v697 = vsel %vm692, %v691, 0
        %699 = vmatprep.subr.bf16.mxu0 0
        %700 = vmatpush1.bf16.xpose.msra.mxu0 %v697
        %701 = vmatprep.subr.bf16.mxu0 0
        %702 = vmatpush1.bf16.xpose.msra.mxu0 0
        %703 = vmatprep.subr.bf16.mxu0 0
        %704 = vmatpush1.bf16.xpose.msra.mxu0 0
        %705 = vmatprep.subr.bf16.mxu0 0
        %706 = vmatpush1.bf16.xpose.msra.mxu0 0
        %707 = vmatprep.subr.bf16.mxu0 0
        %708 = vmatpush1.bf16.xpose.msra.mxu0 0
        %709 = vmatprep.subr.bf16.mxu0 0
        %710 = vmatpush1.bf16.xpose.msra.mxu0 0
        %711 = vmatprep.subr.bf16.mxu0 0
        %712 = vmatpush1.bf16.xpose.msra.mxu0 0
        %713 = vmatprep.subr.bf16.mxu0 0
        %714 = vmatpush1.bf16.xpose.msra.mxu0 0
        %715 = vmatprep.subr.bf16.mxu0 0
        %716 = vmatpush1.bf16.xpose.msra.mxu0 0
        %717 = vmatprep.subr.bf16.mxu0 0
        %718 = vmatpush1.bf16.xpose.msra.mxu0 0
        %719 = vmatprep.subr.bf16.mxu0 0
        %720 = vmatpush1.bf16.xpose.msra.mxu0 0
        %721 = vmatprep.subr.bf16.mxu0 0
        %722 = vmatpush1.bf16.xpose.msra.mxu0 0
        %723 = vmatprep.subr.bf16.mxu0 0
        %724 = vmatpush1.bf16.xpose.msra.mxu0 0
        %725 = vmatprep.subr.bf16.mxu0 0
        %726 = vmatpush1.bf16.xpose.msra.mxu0 0
        %727 = vmatprep.subr.bf16.mxu0 0
        %728 = vmatpush1.bf16.xpose.msra.mxu0 0
        %729 = vmatprep.subr.bf16.mxu0 0
        %730 = vmatpush1.bf16.xpose.msra.mxu0 0
        %731 = vmatprep.mubr.bf16.mxu0 0
        %732 = vmatmul.mubr.bf16.gmra.mrb[0].mxu0 %v694
        %v733 = vpop.f32.mrb[0].mxu0
        %v734 = vadd.f32 0.0, %v733
        %v735 = vpop.f32.mrb[0].mxu0
        %v736 = vpop.f32.mrb[0].mxu0
        %v737 = vadd.f32 0.0, %v736
        %v738 = vpop.f32.mrb[0].mxu0
        %739 = vdwg.mxu0
        %vm740 = vcmask 130048
        %v741 = vsel %vm740, %v734, -inf
        %742 = vmax.xlane.f32.xlu0 %v741
        %v743 = vpop.xlane.xlu0 %742
        %v744 = vsel %vm740, %v737, -inf
        %745 = vmax.xlane.f32.xlu0 %v744
        %v746 = vpop.xlane.xlu0 %745
        %v747 = vsub.f32 %v734, %v743
        %v748 = vsub.f32 %v737, %v746
        %v749 = vmul.f32 %v747, 1.442695
        %v750 = vpow.pop %v749
        %v751 = vmul.f32 %v748, 1.442695
        %v752 = vpow.pop %v751
        %v753 = vsel %vm740, %v750, 0.0
        %754 = vadd.xlane.f32.xlu0 %v753
        %v755 = vpop.xlane.xlu0 %754
        %v756 = vsel %vm740, %v752, 0.0
        %757 = vadd.xlane.f32.xlu0 %v756
        %v758 = vpop.xlane.xlu0 %757
        %v759 = vrcp.pop %v755
        %v760 = vrcp.pop %v758
        %v761 = vmul.f32 %v750, %v759
        %v762 = vmul.f32 %v752, %v760
        %v763 = vpack.c.bf16 %v762, %v761
        %764 = vrot.lane.b32.xlu0 %v688, 64
        %v765 = vpop.permute.xlu0 %764
        %v768 = vsel %vm740, %v763, 0
        %770 = vmatprep.subr.bf16.mxu0 0
        %771 = vmatpush1.bf16.msra.mxu0 %v765
        %772 = vmatprep.subr.bf16.mxu0 0
        %773 = vmatpush1.bf16.msra.mxu0 0
        %774 = vmatprep.subr.bf16.mxu0 0
        %775 = vmatpush1.bf16.msra.mxu0 0
        %776 = vmatprep.subr.bf16.mxu0 0
        %777 = vmatpush1.bf16.msra.mxu0 0
        %778 = vmatprep.subr.bf16.mxu0 0
        %779 = vmatpush1.bf16.msra.mxu0 0
        %780 = vmatprep.subr.bf16.mxu0 0
        %781 = vmatpush1.bf16.msra.mxu0 0
        %782 = vmatprep.subr.bf16.mxu0 0
        %783 = vmatpush1.bf16.msra.mxu0 0
        %784 = vmatprep.subr.bf16.mxu0 0
        %785 = vmatpush1.bf16.msra.mxu0 0
        %786 = vmatprep.subr.bf16.mxu0 0
        %787 = vmatpush1.bf16.msra.mxu0 0
        %788 = vmatprep.subr.bf16.mxu0 0
        %789 = vmatpush1.bf16.msra.mxu0 0
        %790 = vmatprep.subr.bf16.mxu0 0
        %791 = vmatpush1.bf16.msra.mxu0 0
        %792 = vmatprep.subr.bf16.mxu0 0
        %793 = vmatpush1.bf16.msra.mxu0 0
        %794 = vmatprep.subr.bf16.mxu0 0
        %795 = vmatpush1.bf16.msra.mxu0 0
        %796 = vmatprep.subr.bf16.mxu0 0
        %797 = vmatpush1.bf16.msra.mxu0 0
        %798 = vmatprep.subr.bf16.mxu0 0
        %799 = vmatpush1.bf16.msra.mxu0 0
        %800 = vmatprep.subr.bf16.mxu0 0
        %801 = vmatpush1.bf16.msra.mxu0 0
        %802 = vmatprep.mubr.bf16.mxu0 0
        %803 = vmatmul.mubr.bf16.gmra.mrb[0].mxu0 %v768
        %v804 = vpop.f32.mrb[0].mxu0
        %v805 = vadd.f32 0.0, %v804
        %v806 = vpop.f32.mrb[0].mxu0
        %v807 = vpop.f32.mrb[0].mxu0
        %v808 = vadd.f32 0.0, %v807
        %v809 = vpop.f32.mrb[0].mxu0
        %810 = vdwg.mxu0
        %v811 = vpack.c.bf16 %v808, %v805
        %v812 = vld [vmem:[#allocation10] sm:$0xf]
        %813 = vrot.lane.b32.xlu0 %v688, 120
        %v814 = vpop.permute.xlu0 %813
        %815 = vrot.lane.b32.xlu0 %v688, 88
        %v816 = vpop.permute.xlu0 %815
        %v818 = vsel %vm692, %v814, 0
        %v821 = vsel %vm692, %v816, 0
        %823 = vmatprep.subr.bf16.mxu0 0
        %824 = vmatpush1.bf16.xpose.msra.mxu0 %v821
        %825 = vmatprep.subr.bf16.mxu0 0
        %826 = vmatpush1.bf16.xpose.msra.mxu0 0
        %827 = vmatprep.subr.bf16.mxu0 0
        %828 = vmatpush1.bf16.xpose.msra.mxu0 0
        %829 = vmatprep.subr.bf16.mxu0 0
        %830 = vmatpush1.bf16.xpose.msra.mxu0 0
        %831 = vmatprep.subr.bf16.mxu0 0
        %832 = vmatpush1.bf16.xpose.msra.mxu0 0
        %833 = vmatprep.subr.bf16.mxu0 0
        %834 = vmatpush1.bf16.xpose.msra.mxu0 0
        %835 = vmatprep.subr.bf16.mxu0 0
        %836 = vmatpush1.bf16.xpose.msra.mxu0 0
        %837 = vmatprep.subr.bf16.mxu0 0
        %838 = vmatpush1.bf16.xpose.msra.mxu0 0
        %839 = vmatprep.subr.bf16.mxu0 0
        %840 = vmatpush1.bf16.xpose.msra.mxu0 0
        %841 = vmatprep.subr.bf16.mxu0 0
        %842 = vmatpush1.bf16.xpose.msra.mxu0 0
        %843 = vmatprep.subr.bf16.mxu0 0
        %844 = vmatpush1.bf16.xpose.msra.mxu0 0
        %845 = vmatprep.subr.bf16.mxu0 0
        %846 = vmatpush1.bf16.xpose.msra.mxu0 0
        %847 = vmatprep.subr.bf16.mxu0 0
        %848 = vmatpush1.bf16.xpose.msra.mxu0 0
        %849 = vmatprep.subr.bf16.mxu0 0
        %850 = vmatpush1.bf16.xpose.msra.mxu0 0
        %851 = vmatprep.subr.bf16.mxu0 0
        %852 = vmatpush1.bf16.xpose.msra.mxu0 0
        %853 = vmatprep.subr.bf16.mxu0 0
        %854 = vmatpush1.bf16.xpose.msra.mxu0 0
        %855 = vmatprep.mubr.bf16.mxu0 0
        %856 = vmatmul.mubr.bf16.gmra.mrb[0].mxu0 %v818
        %v857 = vpop.f32.mrb[0].mxu0
        %v858 = vadd.f32 0.0, %v857
        %v859 = vpop.f32.mrb[0].mxu0
        %v860 = vpop.f32.mrb[0].mxu0
        %v861 = vadd.f32 0.0, %v860
        %v862 = vpop.f32.mrb[0].mxu0
        %863 = vdwg.mxu0
        %v864 = vsel %vm740, %v858, -inf
        %865 = vmax.xlane.f32.xlu0 %v864
        %v866 = vpop.xlane.xlu0 %865
        %v867 = vsel %vm740, %v861, -inf
        %868 = vmax.xlane.f32.xlu0 %v867
        %v869 = vpop.xlane.xlu0 %868
        %v870 = vsub.f32 %v858, %v866
        %v871 = vsub.f32 %v861, %v869
        %v872 = vmul.f32 %v870, 1.442695
        %v873 = vpow.pop %v872
        %v874 = vmul.f32 %v871, 1.442695
        %v875 = vpow.pop %v874
        %v876 = vsel %vm740, %v873, 0.0
        %877 = vadd.xlane.f32.xlu0 %v876
        %v878 = vpop.xlane.xlu0 %877
        %v879 = vsel %vm740, %v875, 0.0
        %880 = vadd.xlane.f32.xlu0 %v879
        %v881 = vpop.xlane.xlu0 %880
        %v882 = vrcp.pop %v878
        %v883 = vrcp.pop %v881
        %v884 = vmul.f32 %v873, %v882
        %v885 = vmul.f32 %v875, %v883
        %v886 = vpack.c.bf16 %v885, %v884
        %887 = vrot.lane.b32.xlu0 %v688, 56
        %v888 = vpop.permute.xlu0 %887
        %v891 = vsel %vm740, %v886, 0
        %893 = vmatprep.subr.bf16.mxu0 0
        %894 = vmatpush1.bf16.msra.mxu0 %v888
        %895 = vmatprep.subr.bf16.mxu0 0
        %896 = vmatpush1.bf16.msra.mxu0 0
        %897 = vmatprep.subr.bf16.mxu0 0
        %898 = vmatpush1.bf16.msra.mxu0 0
        %899 = vmatprep.subr.bf16.mxu0 0
        %900 = vmatpush1.bf16.msra.mxu0 0
        %901 = vmatprep.subr.bf16.mxu0 0
        %902 = vmatpush1.bf16.msra.mxu0 0
        %903 = vmatprep.subr.bf16.mxu0 0
        %904 = vmatpush1.bf16.msra.mxu0 0
        %905 = vmatprep.subr.bf16.mxu0 0
        %906 = vmatpush1.bf16.msra.mxu0 0
        %907 = vmatprep.subr.bf16.mxu0 0
        %908 = vmatpush1.bf16.msra.mxu0 0
        %909 = vmatprep.subr.bf16.mxu0 0
        %910 = vmatpush1.bf16.msra.mxu0 0
        %911 = vmatprep.subr.bf16.mxu0 0
        %912 = vmatpush1.bf16.msra.mxu0 0
        %913 = vmatprep.subr.bf16.mxu0 0
        %914 = vmatpush1.bf16.msra.mxu0 0
        %915 = vmatprep.subr.bf16.mxu0 0
        %916 = vmatpush1.bf16.msra.mxu0 0
        %917 = vmatprep.subr.bf16.mxu0 0
        %918 = vmatpush1.bf16.msra.mxu0 0
        %919 = vmatprep.subr.bf16.mxu0 0
        %920 = vmatpush1.bf16.msra.mxu0 0
        %921 = vmatprep.subr.bf16.mxu0 0
        %922 = vmatpush1.bf16.msra.mxu0 0
        %923 = vmatprep.subr.bf16.mxu0 0
        %924 = vmatpush1.bf16.msra.mxu0 0
        %925 = vmatprep.mubr.bf16.mxu0 0
        %926 = vmatmul.mubr.bf16.gmra.mrb[0].mxu0 %v891
        %v927 = vpop.f32.mrb[0].mxu0
        %v928 = vadd.f32 0.0, %v927
        %v929 = vpop.f32.mrb[0].mxu0
        %v930 = vpop.f32.mrb[0].mxu0
        %v931 = vadd.f32 0.0, %v930
        %v932 = vpop.f32.mrb[0].mxu0
        %933 = vdwg.mxu0
        %v934 = vpack.c.bf16 %v931, %v928
        %s935 = scalar_lea.vmem [#allocation10], 4
        %v936 = vld [vmem:[%s935] sm:$0xf]
        %v938 = vsel %vm692, %v934, 0
        %vm940 = vcmask 1043456
        %v942 = vsel %vm940, %v936, 0
        %944 = vmatprep.subr.bf16.mxu0 0
        %945 = vmatpush1.bf16.msra.mxu0 %v942
        %946 = vmatprep.subr.bf16.mxu0 0
        %947 = vmatpush1.bf16.msra.mxu0 0
        %948 = vmatprep.subr.bf16.mxu0 0
        %949 = vmatpush1.bf16.msra.mxu0 0
        %950 = vmatprep.subr.bf16.mxu0 0
        %951 = vmatpush1.bf16.msra.mxu0 0
        %952 = vmatprep.subr.bf16.mxu0 0
        %953 = vmatpush1.bf16.msra.mxu0 0
        %954 = vmatprep.subr.bf16.mxu0 0
        %955 = vmatpush1.bf16.msra.mxu0 0
        %956 = vmatprep.subr.bf16.mxu0 0
        %957 = vmatpush1.bf16.msra.mxu0 0
        %958 = vmatprep.subr.bf16.mxu0 0
        %959 = vmatpush1.bf16.msra.mxu0 0
        %960 = vmatprep.subr.bf16.mxu0 0
        %961 = vmatpush1.bf16.msra.mxu0 0
        %962 = vmatprep.subr.bf16.mxu0 0
        %963 = vmatpush1.bf16.msra.mxu0 0
        %964 = vmatprep.subr.bf16.mxu0 0
        %965 = vmatpush1.bf16.msra.mxu0 0
        %966 = vmatprep.subr.bf16.mxu0 0
        %967 = vmatpush1.bf16.msra.mxu0 0
        %968 = vmatprep.subr.bf16.mxu0 0
        %969 = vmatpush1.bf16.msra.mxu0 0
        %970 = vmatprep.subr.bf16.mxu0 0
        %971 = vmatpush1.bf16.msra.mxu0 0
        %972 = vmatprep.subr.bf16.mxu0 0
        %973 = vmatpush1.bf16.msra.mxu0 0
        %974 = vmatprep.subr.bf16.mxu0 0
        %975 = vmatpush1.bf16.msra.mxu0 0
        %976 = vmatprep.mubr.bf16.mxu0 0
        %977 = vmatmul.mubr.bf16.gmra.mrb[0].mxu0 %v938
        %v978 = vpop.f32.mrb[0].mxu0
        %v979 = vadd.f32 0.0, %v978
        %v980 = vpop.f32.mrb[0].mxu0
        %v981 = vpop.f32.mrb[0].mxu0
        %v982 = vadd.f32 0.0, %v981
        %v983 = vpop.f32.mrb[0].mxu0
        %984 = vdwg.mxu0
        %v986 = vsel %vm692, %v811, 0
        %v989 = vsel %vm940, %v812, 0
        %991 = vmatprep.subr.bf16.mxu0 0
        %992 = vmatpush1.bf16.msra.mxu0 %v989
        %993 = vmatprep.subr.bf16.mxu0 0
        %994 = vmatpush1.bf16.msra.mxu0 0
        %995 = vmatprep.subr.bf16.mxu0 0
        %996 = vmatpush1.bf16.msra.mxu0 0
        %997 = vmatprep.subr.bf16.mxu0 0
        %998 = vmatpush1.bf16.msra.mxu0 0
        %999 = vmatprep.subr.bf16.mxu0 0
        %1000 = vmatpush1.bf16.msra.mxu0 0
        %1001 = vmatprep.subr.bf16.mxu0 0
        %1002 = vmatpush1.bf16.msra.mxu0 0
        %1003 = vmatprep.subr.bf16.mxu0 0
        %1004 = vmatpush1.bf16.msra.mxu0 0
        %1005 = vmatprep.subr.bf16.mxu0 0
        %1006 = vmatpush1.bf16.msra.mxu0 0
        %1007 = vmatprep.subr.bf16.mxu0 0
        %1008 = vmatpush1.bf16.msra.mxu0 0
        %1009 = vmatprep.subr.bf16.mxu0 0
        %1010 = vmatpush1.bf16.msra.mxu0 0
        %1011 = vmatprep.subr.bf16.mxu0 0
        %1012 = vmatpush1.bf16.msra.mxu0 0
        %1013 = vmatprep.subr.bf16.mxu0 0
        %1014 = vmatpush1.bf16.msra.mxu0 0
        %1015 = vmatprep.subr.bf16.mxu0 0
        %1016 = vmatpush1.bf16.msra.mxu0 0
        %1017 = vmatprep.subr.bf16.mxu0 0
        %1018 = vmatpush1.bf16.msra.mxu0 0
        %1019 = vmatprep.subr.bf16.mxu0 0
        %1020 = vmatpush1.bf16.msra.mxu0 0
        %1021 = vmatprep.subr.bf16.mxu0 0
        %1022 = vmatpush1.bf16.msra.mxu0 0
        %1023 = vmatprep.mubr.bf16.mxu0 0
        %1024 = vmatmul.mubr.bf16.gmra.mrb[0].mxu0 %v986
        %v1025 = vpop.f32.mrb[0].mxu0
        %v1026 = vadd.f32 %v979, %v1025
        %v1027 = vpop.f32.mrb[0].mxu0
        %v1028 = vpop.f32.mrb[0].mxu0
        %v1029 = vadd.f32 %v982, %v1028
        %v1030 = vpop.f32.mrb[0].mxu0
        %1031 = vdwg.mxu0
        %1032 = vrot.lane.b32.xlu0 %v688, 112
        %v1033 = vpop.permute.xlu0 %1032
        %1034 = vrot.lane.b32.xlu0 %v688, 80
        %v1035 = vpop.permute.xlu0 %1034
        %v1037 = vsel %vm692, %v1033, 0
        %v1040 = vsel %vm692, %v1035, 0
        %1042 = vmatprep.subr.bf16.mxu0 0
        %1043 = vmatpush1.bf16.xpose.msra.mxu0 %v1040
        %1044 = vmatprep.subr.bf16.mxu0 0
        %1045 = vmatpush1.bf16.xpose.msra.mxu0 0
        %1046 = vmatprep.subr.bf16.mxu0 0
        %1047 = vmatpush1.bf16.xpose.msra.mxu0 0
        %1048 = vmatprep.subr.bf16.mxu0 0
        %1049 = vmatpush1.bf16.xpose.msra.mxu0 0
        %1050 = vmatprep.subr.bf16.mxu0 0
        %1051 = vmatpush1.bf16.xpose.msra.mxu0 0
        %1052 = vmatprep.subr.bf16.mxu0 0
        %1053 = vmatpush1.bf16.xpose.msra.mxu0 0
        %1054 = vmatprep.subr.bf16.mxu0 0
        %1055 = vmatpush1.bf16.xpose.msra.mxu0 0
        %1056 = vmatprep.subr.bf16.mxu0 0
        %1057 = vmatpush1.bf16.xpose.msra.mxu0 0
        %1058 = vmatprep.subr.bf16.mxu0 0
        %1059 = vmatpush1.bf16.xpose.msra.mxu0 0
        %1060 = vmatprep.subr.bf16.mxu0 0
        %1061 = vmatpush1.bf16.xpose.msra.mxu0 0
        %1062 = vmatprep.subr.bf16.mxu0 0
        %1063 = vmatpush1.bf16.xpose.msra.mxu0 0
        %1064 = vmatprep.subr.bf16.mxu0 0
        %1065 = vmatpush1.bf16.xpose.msra.mxu0 0
        %1066 = vmatprep.subr.bf16.mxu0 0
        %1067 = vmatpush1.bf16.xpose.msra.mxu0 0
        %1068 = vmatprep.subr.bf16.mxu0 0
        %1069 = vmatpush1.bf16.xpose.msra.mxu0 0
        %1070 = vmatprep.subr.bf16.mxu0 0
        %1071 = vmatpush1.bf16.xpose.msra.mxu0 0
        %1072 = vmatprep.subr.bf16.mxu0 0
        %1073 = vmatpush1.bf16.xpose.msra.mxu0 0
        %1074 = vmatprep.mubr.bf16.mxu0 0
        %1075 = vmatmul.mubr.bf16.gmra.mrb[0].mxu0 %v1037
        %v1076 = vpop.f32.mrb[0].mxu0
        %v1077 = vadd.f32 0.0, %v1076
        %v1078 = vpop.f32.mrb[0].mxu0
        %v1079 = vpop.f32.mrb[0].mxu0
        %v1080 = vadd.f32 0.0, %v1079
        %v1081 = vpop.f32.mrb[0].mxu0
        %1082 = vdwg.mxu0
        %v1083 = vsel %vm740, %v1077, -inf
        %1084 = vmax.xlane.f32.xlu0 %v1083
        %v1085 = vpop.xlane.xlu0 %1084
        %v1086 = vsel %vm740, %v1080, -inf
        %1087 = vmax.xlane.f32.xlu0 %v1086
        %v1088 = vpop.xlane.xlu0 %1087
        %v1089 = vsub.f32 %v1077, %v1085
        %v1090 = vsub.f32 %v1080, %v1088
        %v1091 = vmul.f32 %v1089, 1.442695
        %v1092 = vpow.pop %v1091
        %v1093 = vmul.f32 %v1090, 1.442695
        %v1094 = vpow.pop %v1093
        %v1095 = vsel %vm740, %v1092, 0.0
        %1096 = vadd.xlane.f32.xlu0 %v1095
        %v1097 = vpop.xlane.xlu0 %1096
        %v1098 = vsel %vm740, %v1094, 0.0
        %1099 = vadd.xlane.f32.xlu0 %v1098
        %v1100 = vpop.xlane.xlu0 %1099
        %v1101 = vrcp.pop %v1097
        %v1102 = vrcp.pop %v1100
        %v1103 = vmul.f32 %v1092, %v1101
        %v1104 = vmul.f32 %v1094, %v1102
        %v1105 = vpack.c.bf16 %v1104, %v1103
        %1106 = vrot.lane.b32.xlu0 %v688, 48
        %v1107 = vpop.permute.xlu0 %1106
        %v1110 = vsel %vm740, %v1105, 0
        %1112 = vmatprep.subr.bf16.mxu0 0
        %1113 = vmatpush1.bf16.msra.mxu0 %v1107
        %1114 = vmatprep.subr.bf16.mxu0 0
        %1115 = vmatpush1.bf16.msra.mxu0 0
        %1116 = vmatprep.subr.bf16.mxu0 0
        %1117 = vmatpush1.bf16.msra.mxu0 0
        %1118 = vmatprep.subr.bf16.mxu0 0
        %1119 = vmatpush1.bf16.msra.mxu0 0
        %1120 = vmatprep.subr.bf16.mxu0 0
        %1121 = vmatpush1.bf16.msra.mxu0 0
        %1122 = vmatprep.subr.bf16.mxu0 0
        %1123 = vmatpush1.bf16.msra.mxu0 0
        %1124 = vmatprep.subr.bf16.mxu0 0
        %1125 = vmatpush1.bf16.msra.mxu0 0
        %1126 = vmatprep.subr.bf16.mxu0 0
        %1127 = vmatpush1.bf16.msra.mxu0 0
        %1128 = vmatprep.subr.bf16.mxu0 0
        %1129 = vmatpush1.bf16.msra.mxu0 0
        %1130 = vmatprep.subr.bf16.mxu0 0
        %1131 = vmatpush1.bf16.msra.mxu0 0
        %1132 = vmatprep.subr.bf16.mxu0 0
        %1133 = vmatpush1.bf16.msra.mxu0 0
        %1134 = vmatprep.subr.bf16.mxu0 0
        %1135 = vmatpush1.bf16.msra.mxu0 0
        %1136 = vmatprep.subr.bf16.mxu0 0
        %1137 = vmatpush1.bf16.msra.mxu0 0
        %1138 = vmatprep.subr.bf16.mxu0 0
        %1139 = vmatpush1.bf16.msra.mxu0 0
        %1140 = vmatprep.subr.bf16.mxu0 0
        %1141 = vmatpush1.bf16.msra.mxu0 0
        %1142 = vmatprep.subr.bf16.mxu0 0
        %1143 = vmatpush1.bf16.msra.mxu0 0
        %1144 = vmatprep.mubr.bf16.mxu0 0
        %1145 = vmatmul.mubr.bf16.gmra.mrb[0].mxu0 %v1110
        %v1146 = vpop.f32.mrb[0].mxu0
        %v1147 = vadd.f32 0.0, %v1146
        %v1148 = vpop.f32.mrb[0].mxu0
        %v1149 = vpop.f32.mrb[0].mxu0
        %v1150 = vadd.f32 0.0, %v1149
        %v1151 = vpop.f32.mrb[0].mxu0
        %1152 = vdwg.mxu0
        %v1153 = vpack.c.bf16 %v1150, %v1147
        %s1154 = scalar_lea.vmem [#allocation10], 8
        %v1155 = vld [vmem:[%s1154] sm:$0xf]
        %v1157 = vsel %vm692, %v1153, 0
        %v1160 = vsel %vm940, %v1155, 0
        %1162 = vmatprep.subr.bf16.mxu0 0
        %1163 = vmatpush1.bf16.msra.mxu0 %v1160
        %1164 = vmatprep.subr.bf16.mxu0 0
        %1165 = vmatpush1.bf16.msra.mxu0 0
        %1166 = vmatprep.subr.bf16.mxu0 0
        %1167 = vmatpush1.bf16.msra.mxu0 0
        %1168 = vmatprep.subr.bf16.mxu0 0
        %1169 = vmatpush1.bf16.msra.mxu0 0
        %1170 = vmatprep.subr.bf16.mxu0 0
        %1171 = vmatpush1.bf16.msra.mxu0 0
        %1172 = vmatprep.subr.bf16.mxu0 0
        %1173 = vmatpush1.bf16.msra.mxu0 0
        %1174 = vmatprep.subr.bf16.mxu0 0
        %1175 = vmatpush1.bf16.msra.mxu0 0
        %1176 = vmatprep.subr.bf16.mxu0 0
        %1177 = vmatpush1.bf16.msra.mxu0 0
        %1178 = vmatprep.subr.bf16.mxu0 0
        %1179 = vmatpush1.bf16.msra.mxu0 0
        %1180 = vmatprep.subr.bf16.mxu0 0
        %1181 = vmatpush1.bf16.msra.mxu0 0
        %1182 = vmatprep.subr.bf16.mxu0 0
        %1183 = vmatpush1.bf16.msra.mxu0 0
        %1184 = vmatprep.subr.bf16.mxu0 0
        %1185 = vmatpush1.bf16.msra.mxu0 0
        %1186 = vmatprep.subr.bf16.mxu0 0
        %1187 = vmatpush1.bf16.msra.mxu0 0
        %1188 = vmatprep.subr.bf16.mxu0 0
        %1189 = vmatpush1.bf16.msra.mxu0 0
        %1190 = vmatprep.subr.bf16.mxu0 0
        %1191 = vmatpush1.bf16.msra.mxu0 0
        %1192 = vmatprep.subr.bf16.mxu0 0
        %1193 = vmatpush1.bf16.msra.mxu0 0
        %1194 = vmatprep.mubr.bf16.mxu0 0
        %1195 = vmatmul.mubr.bf16.gmra.mrb[0].mxu0 %v1157
        %v1196 = vpop.f32.mrb[0].mxu0
        %v1197 = vadd.f32 0.0, %v1196
        %v1198 = vpop.f32.mrb[0].mxu0
        %v1199 = vpop.f32.mrb[0].mxu0
        %v1200 = vadd.f32 0.0, %v1199
        %v1201 = vpop.f32.mrb[0].mxu0
        %1202 = vdwg.mxu0
        %v1203 = vadd.f32 %v1026, %v1197
        %v1204 = vadd.f32 %v1029, %v1200
        %1205 = vrot.lane.b32.xlu0 %v688, 104
        %v1206 = vpop.permute.xlu0 %1205
        %1207 = vrot.lane.b32.xlu0 %v688, 72
        %v1208 = vpop.permute.xlu0 %1207
        %v1210 = vsel %vm692, %v1206, 0
        %v1213 = vsel %vm692, %v1208, 0
        %1215 = vmatprep.subr.bf16.mxu0 0
        %1216 = vmatpush1.bf16.xpose.msra.mxu0 %v1213
        %1217 = vmatprep.subr.bf16.mxu0 0
        %1218 = vmatpush1.bf16.xpose.msra.mxu0 0
        %1219 = vmatprep.subr.bf16.mxu0 0
        %1220 = vmatpush1.bf16.xpose.msra.mxu0 0
        %1221 = vmatprep.subr.bf16.mxu0 0
        %1222 = vmatpush1.bf16.xpose.msra.mxu0 0
        %1223 = vmatprep.subr.bf16.mxu0 0
        %1224 = vmatpush1.bf16.xpose.msra.mxu0 0
        %1225 = vmatprep.subr.bf16.mxu0 0
        %1226 = vmatpush1.bf16.xpose.msra.mxu0 0
        %1227 = vmatprep.subr.bf16.mxu0 0
        %1228 = vmatpush1.bf16.xpose.msra.mxu0 0
        %1229 = vmatprep.subr.bf16.mxu0 0
        %1230 = vmatpush1.bf16.xpose.msra.mxu0 0
        %1231 = vmatprep.subr.bf16.mxu0 0
        %1232 = vmatpush1.bf16.xpose.msra.mxu0 0
        %1233 = vmatprep.subr.bf16.mxu0 0
        %1234 = vmatpush1.bf16.xpose.msra.mxu0 0
        %1235 = vmatprep.subr.bf16.mxu0 0
        %1236 = vmatpush1.bf16.xpose.msra.mxu0 0
        %1237 = vmatprep.subr.bf16.mxu0 0
        %1238 = vmatpush1.bf16.xpose.msra.mxu0 0
        %1239 = vmatprep.subr.bf16.mxu0 0
        %1240 = vmatpush1.bf16.xpose.msra.mxu0 0
        %1241 = vmatprep.subr.bf16.mxu0 0
        %1242 = vmatpush1.bf16.xpose.msra.mxu0 0
        %1243 = vmatprep.subr.bf16.mxu0 0
        %1244 = vmatpush1.bf16.xpose.msra.mxu0 0
        %1245 = vmatprep.subr.bf16.mxu0 0
        %1246 = vmatpush1.bf16.xpose.msra.mxu0 0
        %1247 = vmatprep.mubr.bf16.mxu0 0
        %1248 = vmatmul.mubr.bf16.gmra.mrb[0].mxu0 %v1210
        %v1249 = vpop.f32.mrb[0].mxu0
        %v1250 = vadd.f32 0.0, %v1249
        %v1251 = vpop.f32.mrb[0].mxu0
        %v1252 = vpop.f32.mrb[0].mxu0
        %v1253 = vadd.f32 0.0, %v1252
        %v1254 = vpop.f32.mrb[0].mxu0
        %1255 = vdwg.mxu0
        %v1256 = vsel %vm740, %v1250, -inf
        %1257 = vmax.xlane.f32.xlu0 %v1256
        %v1258 = vpop.xlane.xlu0 %1257
        %v1259 = vsel %vm740, %v1253, -inf
        %1260 = vmax.xlane.f32.xlu0 %v1259
        %v1261 = vpop.xlane.xlu0 %1260
        %v1262 = vsub.f32 %v1250, %v1258
        %v1263 = vsub.f32 %v1253, %v1261
        %v1264 = vmul.f32 %v1262, 1.442695
        %v1265 = vpow.pop %v1264
        %v1266 = vmul.f32 %v1263, 1.442695
        %v1267 = vpow.pop %v1266
        %v1268 = vsel %vm740, %v1265, 0.0
        %1269 = vadd.xlane.f32.xlu0 %v1268
        %v1270 = vpop.xlane.xlu0 %1269
        %v1271 = vsel %vm740, %v1267, 0.0
        %1272 = vadd.xlane.f32.xlu0 %v1271
        %v1273 = vpop.xlane.xlu0 %1272
        %v1274 = vrcp.pop %v1270
        %v1275 = vrcp.pop %v1273
        %v1276 = vmul.f32 %v1265, %v1274
        %v1277 = vmul.f32 %v1267, %v1275
        %v1278 = vpack.c.bf16 %v1277, %v1276
        %1279 = vrot.lane.b32.xlu0 %v688, 40
        %v1280 = vpop.permute.xlu0 %1279
        %v1283 = vsel %vm740, %v1278, 0
        %1285 = vmatprep.subr.bf16.mxu0 0
        %1286 = vmatpush1.bf16.msra.mxu0 %v1280
        %1287 = vmatprep.subr.bf16.mxu0 0
        %1288 = vmatpush1.bf16.msra.mxu0 0
        %1289 = vmatprep.subr.bf16.mxu0 0
        %1290 = vmatpush1.bf16.msra.mxu0 0
        %1291 = vmatprep.subr.bf16.mxu0 0
        %1292 = vmatpush1.bf16.msra.mxu0 0
        %1293 = vmatprep.subr.bf16.mxu0 0
        %1294 = vmatpush1.bf16.msra.mxu0 0
        %1295 = vmatprep.subr.bf16.mxu0 0
        %1296 = vmatpush1.bf16.msra.mxu0 0
        %1297 = vmatprep.subr.bf16.mxu0 0
        %1298 = vmatpush1.bf16.msra.mxu0 0
        %1299 = vmatprep.subr.bf16.mxu0 0
        %1300 = vmatpush1.bf16.msra.mxu0 0
        %1301 = vmatprep.subr.bf16.mxu0 0
        %1302 = vmatpush1.bf16.msra.mxu0 0
        %1303 = vmatprep.subr.bf16.mxu0 0
        %1304 = vmatpush1.bf16.msra.mxu0 0
        %1305 = vmatprep.subr.bf16.mxu0 0
        %1306 = vmatpush1.bf16.msra.mxu0 0
        %1307 = vmatprep.subr.bf16.mxu0 0
        %1308 = vmatpush1.bf16.msra.mxu0 0
        %1309 = vmatprep.subr.bf16.mxu0 0
        %1310 = vmatpush1.bf16.msra.mxu0 0
        %1311 = vmatprep.subr.bf16.mxu0 0
        %1312 = vmatpush1.bf16.msra.mxu0 0
        %1313 = vmatprep.subr.bf16.mxu0 0
        %1314 = vmatpush1.bf16.msra.mxu0 0
        %1315 = vmatprep.subr.bf16.mxu0 0
        %1316 = vmatpush1.bf16.msra.mxu0 0
        %1317 = vmatprep.mubr.bf16.mxu0 0
        %1318 = vmatmul.mubr.bf16.gmra.mrb[0].mxu0 %v1283
        %v1319 = vpop.f32.mrb[0].mxu0
        %v1320 = vadd.f32 0.0, %v1319
        %v1321 = vpop.f32.mrb[0].mxu0
        %v1322 = vpop.f32.mrb[0].mxu0
        %v1323 = vadd.f32 0.0, %v1322
        %v1324 = vpop.f32.mrb[0].mxu0
        %1325 = vdwg.mxu0
        %v1326 = vpack.c.bf16 %v1323, %v1320
        %s1327 = scalar_lea.vmem [#allocation10], 12
        %v1328 = vld [vmem:[%s1327] sm:$0xf]
        %v1330 = vsel %vm692, %v1326, 0
        %v1333 = vsel %vm940, %v1328, 0
        %1335 = vmatprep.subr.bf16.mxu0 0
        %1336 = vmatpush1.bf16.msra.mxu0 %v1333
        %1337 = vmatprep.subr.bf16.mxu0 0
        %1338 = vmatpush1.bf16.msra.mxu0 0
        %1339 = vmatprep.subr.bf16.mxu0 0
        %1340 = vmatpush1.bf16.msra.mxu0 0
        %1341 = vmatprep.subr.bf16.mxu0 0
        %1342 = vmatpush1.bf16.msra.mxu0 0
        %1343 = vmatprep.subr.bf16.mxu0 0
        %1344 = vmatpush1.bf16.msra.mxu0 0
        %1345 = vmatprep.subr.bf16.mxu0 0
        %1346 = vmatpush1.bf16.msra.mxu0 0
        %1347 = vmatprep.subr.bf16.mxu0 0
        %1348 = vmatpush1.bf16.msra.mxu0 0
        %1349 = vmatprep.subr.bf16.mxu0 0
        %1350 = vmatpush1.bf16.msra.mxu0 0
        %1351 = vmatprep.subr.bf16.mxu0 0
        %1352 = vmatpush1.bf16.msra.mxu0 0
        %1353 = vmatprep.subr.bf16.mxu0 0
        %1354 = vmatpush1.bf16.msra.mxu0 0
        %1355 = vmatprep.subr.bf16.mxu0 0
        %1356 = vmatpush1.bf16.msra.mxu0 0
        %1357 = vmatprep.subr.bf16.mxu0 0
        %1358 = vmatpush1.bf16.msra.mxu0 0
        %1359 = vmatprep.subr.bf16.mxu0 0
        %1360 = vmatpush1.bf16.msra.mxu0 0
        %1361 = vmatprep.subr.bf16.mxu0 0
        %1362 = vmatpush1.bf16.msra.mxu0 0
        %1363 = vmatprep.subr.bf16.mxu0 0
        %1364 = vmatpush1.bf16.msra.mxu0 0
        %1365 = vmatprep.subr.bf16.mxu0 0
        %1366 = vmatpush1.bf16.msra.mxu0 0
        %1367 = vmatprep.mubr.bf16.mxu0 0
        %1368 = vmatmul.mubr.bf16.gmra.mrb[0].mxu0 %v1330
        %v1369 = vpop.f32.mrb[0].mxu0
        %v1370 = vadd.f32 0.0, %v1369
        %v1371 = vpop.f32.mrb[0].mxu0
        %v1372 = vpop.f32.mrb[0].mxu0
        %v1373 = vadd.f32 0.0, %v1372
        %v1374 = vpop.f32.mrb[0].mxu0
        %1375 = vdwg.mxu0
        %v1376 = vadd.f32 %v1203, %v1370
        %v1377 = vadd.f32 %v1204, %v1373
        %v1378 = vadd.f32 %v579, %v1376
        %v1379 = vadd.f32 %v580, %v1377
        %v1380 = vld [vmem:[#allocation11] sm:$0x1]
        %v1382 = vlaneseq
        %v1383 = vshrl.u32 %v1382, 7
        %v1384 = vsub.s32 0, %v1383
        %v1385 = vrot.slane %v1380, %v1384
        %v1387 = vadd.f32 %v1378, %v1385
        %v1388 = vadd.f32 %v1379, %v1385
        %v1389 = vld [vmem:[#allocation13] sm:$0x1]
        %v1390 = vld [vmem:[#allocation14] sm:$0x1]
        %v1391 = vsel %vm583, %v1387, 0.0
        %1392 = vadd.xlane.f32.xlu0 %v1391
        %v1393 = vpop.xlane.xlu0 %1392
        %v1394 = vsel %vm583, %v1388, 0.0
        %1395 = vadd.xlane.f32.xlu0 %v1394
        %v1396 = vpop.xlane.xlu0 %1395
        %v1397 = vmul.f32 %v1393, %v590
        %v1398 = vmul.f32 %v1396, %v590
        %v1399 = vsub.f32 %v1387, %v1397
        %v1400 = vsub.f32 %v1388, %v1398
        %v1401 = vmul.f32 %v1399, %v1399
        %v1402 = vmul.f32 %v1400, %v1400
        %v1403 = vsel %vm583, %v1401, 0.0
        %1404 = vadd.xlane.f32.xlu0 %v1403
        %v1405 = vpop.xlane.xlu0 %1404
        %v1406 = vsel %vm583, %v1402, 0.0
        %1407 = vadd.xlane.f32.xlu0 %v1406
        %v1408 = vpop.xlane.xlu0 %1407
        %v1409 = vmul.f32 %v1405, %v590
        %v1410 = vmul.f32 %v1408, %v590
        %v1411 = vadd.f32 %v1409, 1e-05
        %v1412 = vadd.f32 %v1410, 1e-05
        %v1413 = vrsqrt.pop %v1411
        %v1414 = vrsqrt.pop %v1412
        %v1415 = vmul.f32 %v1399, %v1413
        %v1416 = vmul.f32 %v1400, %v1414
        %v1418 = vlaneseq
        %v1419 = vshrl.u32 %v1418, 7
        %v1420 = vsub.s32 0, %v1419
        %v1421 = vrot.slane %v1389, %v1420
        %v1423 = vmul.f32 %v1415, %v1421
        %v1424 = vmul.f32 %v1416, %v1421
        %v1426 = vlaneseq
        %v1427 = vshrl.u32 %v1426, 7
        %v1428 = vsub.s32 0, %v1427
        %v1429 = vrot.slane %v1390, %v1428
        %v1431 = vadd.f32 %v1423, %v1429
        %v1432 = vadd.f32 %v1424, %v1429
        %v1433 = vpack.c.bf16 %v1432, %v1431
        %v1434 = vld [vmem:[#allocation16] sm:$0xf]
        %v1435 = vld [vmem:[#allocation16 + $0x4] sm:$0xf]
        %v1436 = vld [vmem:[#allocation16 + $0x8] sm:$0xf]
        %v1437 = vld [vmem:[#allocation16 + $0xc] sm:$0xf]
        %v1438 = vld [vmem:[#allocation17] sm:$0x1]
        %v1440 = vlaneseq
        %v1441 = vshrl.u32 %v1440, 7
        %v1442 = vsub.s32 0, %v1441
        %v1443 = vrot.slane %v1438, %v1442
        %v1449 = vunpack.c.l.b16 %v1434
        %v1450 = vunpack.c.l.b16 %v1435
        %v1451 = vunpack.c.l.b16 %v1436
        %v1452 = vunpack.c.l.b16 %v1437
        %v1453 = vpack.c.b16 %v1450, %v1449
        %v1454 = vpack.c.b16 %v1452, %v1451
        %v1458 = vsel %vm583, %v1433, 0
        %1460 = vmatprep.subr.bf16.mxu0 0
        %1461 = vmatpush1.bf16.msra.mxu0 %v1453
        %1462 = vmatprep.subr.bf16.mxu0 0
        %1463 = vmatpush1.bf16.msra.mxu0 %v1454
        %1464 = vmatprep.subr.bf16.mxu0 0
        %1465 = vmatpush1.bf16.msra.mxu0 0
        %1466 = vmatprep.subr.bf16.mxu0 0
        %1467 = vmatpush1.bf16.msra.mxu0 0
        %1468 = vmatprep.subr.bf16.mxu0 0
        %1469 = vmatpush1.bf16.msra.mxu0 0
        %1470 = vmatprep.subr.bf16.mxu0 0
        %1471 = vmatpush1.bf16.msra.mxu0 0
        %1472 = vmatprep.subr.bf16.mxu0 0
        %1473 = vmatpush1.bf16.msra.mxu0 0
        %1474 = vmatprep.subr.bf16.mxu0 0
        %1475 = vmatpush1.bf16.msra.mxu0 0
        %1476 = vmatprep.subr.bf16.mxu0 0
        %1477 = vmatpush1.bf16.msra.mxu0 0
        %1478 = vmatprep.subr.bf16.mxu0 0
        %1479 = vmatpush1.bf16.msra.mxu0 0
        %1480 = vmatprep.subr.bf16.mxu0 0
        %1481 = vmatpush1.bf16.msra.mxu0 0
        %1482 = vmatprep.subr.bf16.mxu0 0
        %1483 = vmatpush1.bf16.msra.mxu0 0
        %1484 = vmatprep.subr.bf16.mxu0 0
        %1485 = vmatpush1.bf16.msra.mxu0 0
        %1486 = vmatprep.subr.bf16.mxu0 0
        %1487 = vmatpush1.bf16.msra.mxu0 0
        %1488 = vmatprep.subr.bf16.mxu0 0
        %1489 = vmatpush1.bf16.msra.mxu0 0
        %1490 = vmatprep.subr.bf16.mxu0 0
        %1491 = vmatpush1.bf16.msra.mxu0 0
        %1492 = vmatprep.mubr.bf16.mxu0 0
        %1493 = vmatmul.mubr.bf16.gmra.mrb[0].mxu0 %v1458
        %v1494 = vpop.f32.mrb[0].mxu0
        %v1495 = vadd.f32 %v1443, %v1494
        %v1496 = vpop.f32.mrb[0].mxu0
        %v1497 = vpop.f32.mrb[0].mxu0
        %v1498 = vadd.f32 %v1443, %v1497
        %v1499 = vpop.f32.mrb[0].mxu0
        %1500 = vdwg.mxu0
        %v1501 = vmul.f32 %v1495, 0.5
        %v1502 = vmul.f32 %v1498, 0.5
        %v1503 = vmul.f32 %v1495, 0.70710677
        %v1504 = vmul.f32 %v1498, 0.70710677
        %v1505 = verf.f32.pop %v1503
        %v1506 = verf.f32.pop %v1504
        %v1507 = vadd.f32 %v1505, 1.0
        %v1508 = vadd.f32 %v1506, 1.0
        %v1509 = vmul.f32 %v1501, %v1507
        %v1510 = vmul.f32 %v1502, %v1508
        %v1511 = vpack.c.bf16 %v1510, %v1509
        %v1512 = vld [vmem:[#allocation19] sm:$0xf]
        %v1513 = vld [vmem:[#allocation19 + $0x4] sm:$0xf]
        %v1514 = vld [vmem:[#allocation19 + $0x8] sm:$0xf]
        %v1515 = vld [vmem:[#allocation19 + $0xc] sm:$0xf]
        %v1516 = vld [vmem:[#allocation19 + $0x10] sm:$0xf]
        %v1517 = vld [vmem:[#allocation19 + $0x14] sm:$0xf]
        %v1518 = vld [vmem:[#allocation19 + $0x18] sm:$0xf]
        %v1519 = vld [vmem:[#allocation19 + $0x1c] sm:$0xf]
        %v1520 = vld [vmem:[#allocation19 + $0x20] sm:$0xf]
        %v1521 = vld [vmem:[#allocation19 + $0x24] sm:$0xf]
        %v1522 = vld [vmem:[#allocation19 + $0x28] sm:$0xf]
        %v1523 = vld [vmem:[#allocation19 + $0x2c] sm:$0xf]
        %v1524 = vld [vmem:[#allocation19 + $0x30] sm:$0xf]
        %v1525 = vld [vmem:[#allocation19 + $0x34] sm:$0xf]
        %v1526 = vld [vmem:[#allocation19 + $0x38] sm:$0xf]
        %v1527 = vld [vmem:[#allocation19 + $0x3c] sm:$0xf]
        %v1528 = vld [vmem:[#allocation20] sm:$0x1]
        %v1530 = vlaneseq
        %v1531 = vshrl.u32 %v1530, 7
        %v1532 = vsub.s32 0, %v1531
        %v1533 = vrot.slane %v1528, %v1532
        %v1551 = vunpack.c.l.b16 %v1512
        %v1552 = vunpack.c.l.b16 %v1513
        %v1553 = vunpack.c.l.b16 %v1514
        %v1554 = vunpack.c.l.b16 %v1515
        %v1555 = vunpack.c.l.b16 %v1516
        %v1556 = vunpack.c.l.b16 %v1517
        %v1557 = vunpack.c.l.b16 %v1518
        %v1558 = vunpack.c.l.b16 %v1519
        %v1559 = vunpack.c.l.b16 %v1520
        %v1560 = vunpack.c.l.b16 %v1521
        %v1561 = vunpack.c.l.b16 %v1522
        %v1562 = vunpack.c.l.b16 %v1523
        %v1563 = vunpack.c.l.b16 %v1524
        %v1564 = vunpack.c.l.b16 %v1525
        %v1565 = vunpack.c.l.b16 %v1526
        %v1566 = vunpack.c.l.b16 %v1527
        %v1567 = vpack.c.b16 %v1552, %v1551
        %v1568 = vpack.c.b16 %v1554, %v1553
        %v1569 = vpack.c.b16 %v1556, %v1555
        %v1570 = vpack.c.b16 %v1558, %v1557
        %v1571 = vpack.c.b16 %v1560, %v1559
        %v1572 = vpack.c.b16 %v1562, %v1561
        %v1573 = vpack.c.b16 %v1564, %v1563
        %v1574 = vpack.c.b16 %v1566, %v1565
        %1583 = vmatprep.subr.bf16.mxu0 0
        %1584 = vmatpush1.bf16.msra.mxu0 %v1567
        %1585 = vmatprep.subr.bf16.mxu0 0
        %1586 = vmatpush1.bf16.msra.mxu0 %v1568
        %1587 = vmatprep.subr.bf16.mxu0 0
        %1588 = vmatpush1.bf16.msra.mxu0 %v1569
        %1589 = vmatprep.subr.bf16.mxu0 0
        %1590 = vmatpush1.bf16.msra.mxu0 %v1570
        %1591 = vmatprep.subr.bf16.mxu0 0
        %1592 = vmatpush1.bf16.msra.mxu0 %v1571
        %1593 = vmatprep.subr.bf16.mxu0 0
        %1594 = vmatpush1.bf16.msra.mxu0 %v1572
        %1595 = vmatprep.subr.bf16.mxu0 0
        %1596 = vmatpush1.bf16.msra.mxu0 %v1573
        %1597 = vmatprep.subr.bf16.mxu0 0
        %1598 = vmatpush1.bf16.msra.mxu0 %v1574
        %1599 = vmatprep.subr.bf16.mxu0 0
        %1600 = vmatpush1.bf16.msra.mxu0 0
        %1601 = vmatprep.subr.bf16.mxu0 0
        %1602 = vmatpush1.bf16.msra.mxu0 0
        %1603 = vmatprep.subr.bf16.mxu0 0
        %1604 = vmatpush1.bf16.msra.mxu0 0
        %1605 = vmatprep.subr.bf16.mxu0 0
        %1606 = vmatpush1.bf16.msra.mxu0 0
        %1607 = vmatprep.subr.bf16.mxu0 0
        %1608 = vmatpush1.bf16.msra.mxu0 0
        %1609 = vmatprep.subr.bf16.mxu0 0
        %1610 = vmatpush1.bf16.msra.mxu0 0
        %1611 = vmatprep.subr.bf16.mxu0 0
        %1612 = vmatpush1.bf16.msra.mxu0 0
        %1613 = vmatprep.subr.bf16.mxu0 0
        %1614 = vmatpush1.bf16.msra.mxu0 0
        %1615 = vmatprep.mubr.bf16.mxu0 0
        %1616 = vmatmul.mubr.bf16.gmra.mrb[0].mxu0 %v1511
        %v1617 = vpop.f32.mrb[0].mxu0
        %v1618 = vadd.f32 %v1533, %v1617
        %v1619 = vpop.f32.mrb[0].mxu0
        %v1620 = vpop.f32.mrb[0].mxu0
        %v1621 = vadd.f32 %v1533, %v1620
        %v1622 = vpop.f32.mrb[0].mxu0
        %1623 = vdwg.mxu0
        %v1624 = vadd.f32 %v1387, %v1618
        %v1625 = vadd.f32 %v1388, %v1621
        %1626 = vst.msk [vmem:[%s577] sm:$0xff] %vm583, %v1624
        %1627 = vst.msk [vmem:[%s577 + $0x8] sm:$0xff] %vm583, %v1625
        %s1628 = sand.u32 %s300, 1
        %s1629 = scalar_lea.sflag [#allocation4], %s1628
        %s1630 = sand.u32 %s300, 1
        %s1631 = smul.addr %s1630, 16
        %s1632 = scalar_lea.vmem [#allocation22], %s1631
        // Predicated region
        $region117: #{tpu_custom_call.1} parent=67 // pred_check
          %p1633 = pneg %p310
        $region118: #{tpu_custom_call.1} parent=67 // pred_check_branch
          %1635 = sbr.rel (%p1633) target = $region120
        $region119: #{tpu_custom_call.1} parent=67 // pred_region
          %s1637 = ssub.s32 256, 256
          %1638 = vsyncadd %s1629, %s1637
          %s1639 = smul.addr %s35, 2
          %s1640 = smul.addr %s1639, 128
          %s1641 = scalar_lea.hbm %s12, %s1640
          %s1642 = sshll.u32 %s1632, 4
          %s1643 = int_to_ptr.vmem [resolvable:$true] %s1642
          %1648 = dma.vmem_to_hbm [thread:$0]  %s1643, 256, %s1641, %s1629, 128, 128, 8
        $region120: #{tpu_custom_call.1} parent=67 // pred_fallthru
          _
      $region68: #{tpu_custom_call.1} parent=5 // pred_fallthru
        _
      %p1649 = scmp.le.s32.totalorder 2, %s30
      // Predicated region
      $region121: #{tpu_custom_call.1} parent=5 // pred_check
        %p1650 = pneg %p1649
      $region122: #{tpu_custom_call.1} parent=5 // pred_check_branch
        %1652 = sbr.rel (%p1650) target = $region124
      $region123: #{tpu_custom_call.1} parent=5 // pred_region
        %s1653 = ssub.s32 %s30, 2
        // Predicated region
        $region125: #{tpu_custom_call.1} parent=123 // pred_check
          %p1654 = pneg %p316
        $region126: #{tpu_custom_call.1} parent=123 // pred_check_branch
          %1656 = sbr.rel (%p1654) target = $region128
        $region127: #{tpu_custom_call.1} parent=123 // pred_region
          %s1657 = sand.u32 %s301, 1
          %s1658 = scalar_lea.sflag [#allocation4], %s1657
          %s1659 = sand.u32 %s301, 1
          %s1660 = smul.addr %s1659, 16
          %s1661 = scalar_lea.vmem [#allocation22], %s1660
          %1662 = dma.done %s1658, 256
        $region128: #{tpu_custom_call.1} parent=123 // pred_fallthru
          _
      $region124: #{tpu_custom_call.1} parent=5 // pred_fallthru
        _
    $region6: #{tpu_custom_call.1} parent=1 // loop_footer
      %s34 = sadd.s32 1, %s30
    $region7: #{tpu_custom_call.1} parent=1 // loop_footer_branch
      %29 = sbr.rel target = $region3
    $region8: #{tpu_custom_call.1} parent=1 // loop_exit
      _
    %1663 = vsyncpa [#allocation3], 1
    %s1664 = scalar_lea.sflag [#allocation3], 1
    %1665 = vsyncpa %s1664, 1
    %1666 = vsyncpa [#allocation6], 1
    %1667 = vsyncpa [#allocation9], 1
    %1668 = vsyncpa [#allocation12], 1
    %1669 = vsyncpa [#allocation15], 1
    %1670 = vsyncpa [#allocation18], 1
    %1671 = vsyncpa [#allocation21], 1
    %1672 = vsyncpa [#allocation4], 1
    %s1673 = scalar_lea.sflag [#allocation4], 1
    %1674 = vsyncpa %s1673, 1

</llo_original>
